<compile_context>
chip_gen: v5e
topology: v5e:2x2
jax: 0.10.0
libtpu: 0.0.40
codegen_flags: <defaults>
</compile_context>

<pallas_src>
import functools

import jax
import jax.numpy as jnp
from jax.experimental import pallas as pl
from jax.experimental.pallas import tpu as pltpu


LANES = 128                 # channel padding target (lane width)
K_STEM1 = 32                # stem1 im2col contraction: 3*3*3=27 -> 32
PHASE_BLK = 32              # output lanes per up2 phase in the fused head
MXU_DTYPE = jnp.bfloat16    # MXU operand / intermediate dtype (f32 accumulate)


def _round_up(x, m):
    return (x + m - 1) // m * m


# ----------------------------------------------------------------------------
# Pallas kernels
# ----------------------------------------------------------------------------
def _stem1_kernel(xc_ref, w_ref, b_ref, o_ref):
    """Conv2d(3->64, k=3, s=2, p=1) + ReLU as a single im2col GEMM (K=32)."""
    acc = jnp.dot(xc_ref[0], w_ref[...], preferred_element_type=jnp.float32)
    acc = jnp.maximum(acc + b_ref[...], 0.0)
    o_ref[0] = acc.astype(o_ref.dtype)


def _conv3x3_s2_relu_kernel(ph_ref, w_ref, b_ref, o_ref, *, Ho, Wo, Wph, C):
    """3x3 / stride-2 / pad-1 conv + bias + ReLU on one image (stem2).

    ph_ref: (1, 4, (Ho+2)*Wph, C) bf16 -- phase-decomposed padded input
            (phase p=2a+b holds rows 2i+a / cols 2j+b of the padded image),
            flattened with Wph a multiple of 8 so every tap is a contiguous
            sublane-offset slice.
    w_ref : (3, 3, C, C) bf16;  b_ref: (1, C) f32;  o_ref: (1, Ho, Wo, C) bf16
    """
    M = Ho * Wph
    acc = jnp.zeros((M, C), jnp.float32)
    for ky in range(3):
        for kx in range(3):
            p = (ky % 2) * 2 + (kx % 2)
            off = (ky // 2) * Wph + (kx // 2)
            tap = ph_ref[0, p, off:off + M, :]
            acc = acc + jnp.dot(tap, w_ref[ky, kx],
                                preferred_element_type=jnp.float32)
    acc = jnp.maximum(acc + b_ref[...], 0.0)
    o_ref[0] = acc.reshape(Ho, Wph, C)[:, :Wo, :].astype(o_ref.dtype)


def _head_kernel(f_ref, w1_ref, b1_ref, wc_ref, b2_ref, o_ref, slab_ref,
                 *, H4, W4, Wq, C):
    """Fused head: up2 -> Conv1x1+ReLU -> Conv3x3(pad=1) -> (phases of) up2.

    f_ref : (1, H4*W4, C) bf16  stride-4 features (120 valid channels)
    w1_ref: (C, C) bf16         1x1-conv weight (120x60 valid)
    b1_ref: (1, C) f32
    wc_ref: (9, C, C) bf16      combined 3x3 weights per input offset (s,t);
                                output lanes [32p:32p+nc] belong to phase p
    b2_ref: (1, C) f32          phase-packed bias
    o_ref : (1, H4, W4, C) f32  lane-packed phase logits
    slab  : (H4+3, Wq, C) bf16 VMEM scratch (padded stride-4 activation slab)
    """
    # Zero only the pad border (cheap); interior is fully overwritten below,
    # and cropped garbage columns never feed valid outputs, so this is safe
    # on every grid step / every megacore core.
    slab_ref[0:1, :, :] = jnp.zeros((1, Wq, C), slab_ref.dtype)
    slab_ref[H4 + 1:H4 + 3, :, :] = jnp.zeros((2, Wq, C), slab_ref.dtype)
    slab_ref[1:H4 + 1, 0:2, :] = jnp.zeros((H4, 2, C), slab_ref.dtype)
    slab_ref[1:H4 + 1, W4 + 2:Wq, :] = (
        jnp.zeros((H4, Wq - W4 - 2, C), slab_ref.dtype))

    # 1x1 conv + ReLU on the stride-4 grid (commuted past nearest up2).
    h1 = jnp.dot(f_ref[0], w1_ref[...], preferred_element_type=jnp.float32)
    h1 = jnp.maximum(h1 + b1_ref[...], 0.0)

    # h1 lives at rows [1,H4+1), cols [2,W4+2) of the slab (even column
    # offset keeps the bf16 packed-sublane store aligned); the zero border
    # provides the 3x3 conv's pad=1.
    slab_ref[1:H4 + 1, 2:W4 + 2, :] = (
        h1.reshape(H4, W4, C).astype(slab_ref.dtype))

    # "up2 -> conv3x3" regrouped by the 9 distinct stride-4 input offsets;
    # all 4 up2 phases are accumulated at once into 32-lane output blocks,
    # so there is a single (M, 128) f32 accumulator and 9 MXU dots.
    flat = slab_ref[...].reshape((H4 + 3) * Wq, C)
    M = H4 * Wq
    acc = jnp.zeros((M, C), jnp.float32)
    for s in range(3):
        for t in range(3):
            off = s * Wq + (t + 1)
            acc = acc + jnp.dot(flat[off:off + M, :], wc_ref[s * 3 + t],
                                preferred_element_type=jnp.float32)
    acc = acc + b2_ref[...]
    o_ref[0] = acc.reshape(H4, Wq, C)[:, :W4, :].astype(o_ref.dtype)


# ----------------------------------------------------------------------------
# Wrappers (layout plumbing only; hot paths are the Pallas kernels above)
# ----------------------------------------------------------------------------
def stem1_conv(x_nhwc, w, b):
    """Conv2d(3->64, k=3, s=2, p=1) + ReLU via a K=32 im2col GEMM."""
    N, H, W, Cin = x_nhwc.shape
    assert Cin == 3 and H % 2 == 0 and W % 2 == 0
    Ho, Wo = H // 2, W // 2
    M1 = Ho * Wo

    xp = jnp.pad(x_nhwc, ((0, 0), (1, 1), (1, 1), (0, 0)))
    taps = [xp[:, ky:ky + 2 * Ho - 1:2, kx:kx + 2 * Wo - 1:2, :]
            for ky in range(3) for kx in range(3)]
    col = jnp.concatenate(taps, axis=-1)                       # (N,Ho,Wo,27)
    col = jnp.pad(col, ((0, 0), (0, 0), (0, 0), (0, K_STEM1 - 9 * Cin)))
    col = col.reshape(N, M1, K_STEM1).astype(MXU_DTYPE)

    y = pl.pallas_call(
        _stem1_kernel,
        out_shape=jax.ShapeDtypeStruct((N, M1, LANES), MXU_DTYPE),
        grid=(N,),
        in_specs=[
            pl.BlockSpec((1, M1, K_STEM1), lambda n: (n, 0, 0)),
            pl.BlockSpec((K_STEM1, LANES), lambda n: (0, 0)),
            pl.BlockSpec((1, LANES), lambda n: (0, 0)),
        ],
        out_specs=pl.BlockSpec((1, M1, LANES), lambda n: (n, 0, 0)),
        compiler_params=pltpu.CompilerParams(
            dimension_semantics=("parallel",)),
    )(col, w, b)
    return y.reshape(N, Ho, Wo, LANES)


def conv3x3_s2_relu(x_nhwc, w, b):
    """Conv2d(k=3,s=2,p=1)+ReLU; x: (N,H,W,128) bf16, w: (3,3,128,128) bf16."""
    N, H, W, C = x_nhwc.shape
    assert H % 2 == 0 and W % 2 == 0 and C == LANES
    Ho, Wo = H // 2, W // 2
    Wph = _round_up(Wo + 1, 8)
    Hph = Ho + 2

    # Phase-decomposed, zero-padded, bf16 slab built directly from the bf16
    # input (no separate pad / cast passes).
    ph = jnp.zeros((N, 4, Hph, Wph, C), MXU_DTYPE)
    ph = ph.at[:, 0, 1:Ho + 1, 1:Wo + 1, :].set(x_nhwc[:, 1::2, 1::2, :])
    ph = ph.at[:, 1, 1:Ho + 1, 0:Wo, :].set(x_nhwc[:, 1::2, 0::2, :])
    ph = ph.at[:, 2, 0:Ho, 1:Wo + 1, :].set(x_nhwc[:, 0::2, 1::2, :])
    ph = ph.at[:, 3, 0:Ho, 0:Wo, :].set(x_nhwc[:, 0::2, 0::2, :])
    ph = ph.reshape(N, 4, Hph * Wph, C)

    kernel = functools.partial(_conv3x3_s2_relu_kernel,
                               Ho=Ho, Wo=Wo, Wph=Wph, C=C)
    return pl.pallas_call(
        kernel,
        out_shape=jax.ShapeDtypeStruct((N, Ho, Wo, C), MXU_DTYPE),
        grid=(N,),
        in_specs=[
            pl.BlockSpec((1, 4, Hph * Wph, C), lambda n: (n, 0, 0, 0)),
            pl.BlockSpec((3, 3, C, C), lambda n: (0, 0, 0, 0)),
            pl.BlockSpec((1, C), lambda n: (0, 0)),
        ],
        out_specs=pl.BlockSpec((1, Ho, Wo, C), lambda n: (n, 0, 0, 0)),
        compiler_params=pltpu.CompilerParams(
            dimension_semantics=("parallel",)),
    )(ph, w, b)


def fused_head(f_nhwc, w1, b1, wc9, b2p, num_classes):
    """up2 -> Conv1x1(120->60)+ReLU -> Conv3x3(60->nc, pad=1) -> up2."""
    N, H4, W4, C = f_nhwc.shape
    assert C == LANES and num_classes <= PHASE_BLK and W4 % 2 == 0
    # Wq multiple of 16 so the bf16 (H4+3, Wq, C) slab flattens layout-free.
    Wq = _round_up(W4 + 3, 16)
    f2 = f_nhwc.reshape(N, H4 * W4, C)

    kernel = functools.partial(_head_kernel, H4=H4, W4=W4, Wq=Wq, C=C)
    ph = pl.pallas_call(
        kernel,
        out_shape=jax.ShapeDtypeStruct((N, H4, W4, C), jnp.float32),
        grid=(N,),
        in_specs=[
            pl.BlockSpec((1, H4 * W4, C), lambda n: (n, 0, 0)),
            pl.BlockSpec((C, C), lambda n: (0, 0)),
            pl.BlockSpec((1, C), lambda n: (0, 0)),
            pl.BlockSpec((9, C, C), lambda n: (0, 0, 0)),
            pl.BlockSpec((1, C), lambda n: (0, 0)),
        ],
        out_specs=pl.BlockSpec((1, H4, W4, C), lambda n: (n, 0, 0, 0)),
        scratch_shapes=[pltpu.VMEM((H4 + 3, Wq, C), MXU_DTYPE)],
        compiler_params=pltpu.CompilerParams(
            dimension_semantics=("parallel",)),
    )(f2, w1, b1, wc9, b2p)

    # Un-phase + final up2: tiny XLA shuffle on the channel-sliced logits
    # (the padded full-res map never touches HBM).
    nc = num_classes
    ph4 = ph.reshape(N, H4, W4, 4, PHASE_BLK)[..., :nc]        # (n,i,j,p,c)
    ph4 = ph4.reshape(N, H4, W4, 2, 2, nc)                     # (n,i,j,a,b,c)
    t = jnp.broadcast_to(ph4[:, :, :, :, None, :, None, :],
                         (N, H4, W4, 2, 2, 2, 2, nc))          # (n,i,j,a,da,b,db,c)
    t = jnp.transpose(t, (0, 1, 3, 4, 2, 5, 6, 7))             # (n,i,a,da,j,b,db,c)
    return t.reshape(N, 4 * H4, 4 * W4, nc)


# ----------------------------------------------------------------------------
# Parameters
# ----------------------------------------------------------------------------
def init_params(key, num_classes=2):
    ks = jax.random.split(key, 8)

    def w(k, shape, scale=0.05):
        return (scale * jax.random.normal(k, shape)).astype(jnp.float32)

    return {
        # stand-in stride-4 stem replacing the HRNet backbone
        "stem1_w": w(ks[0], (3, 3, 3, 64)),
        "stem1_b": w(ks[1], (64,)),
        "stem2_w": w(ks[2], (3, 3, 64, 120)),
        "stem2_b": w(ks[3], (120,)),
        # self.last_layer: Conv1x1(120->60)+ReLU, Conv3x3(60->num_classes)
        "l1_w": w(ks[4], (120, 60)),
        "l1_b": w(ks[5], (60,)),
        "l2_w": w(ks[6], (3, 3, 60, num_classes)),
        "l2_b": w(ks[7], (num_classes,)),
    }


def prepare_params(params, num_classes=2):
    """Pad channels to 128 lanes, pre-cast MXU operands to bf16, build the
    stem1 im2col weight and the offset-regrouped, phase-packed head weights."""
    C = LANES
    nc = num_classes
    p = {}

    # stem1: (3,3,3,64) -> im2col (27,64) -> (32,128) bf16
    w1s = params["stem1_w"].reshape(27, 64)
    p["stem1_w"] = (jnp.zeros((K_STEM1, C), jnp.float32)
                    .at[:27, :64].set(w1s).astype(MXU_DTYPE))
    p["stem1_b"] = jnp.zeros((1, C), jnp.float32).at[0, :64].set(params["stem1_b"])

    # stem2: (3,3,64,120) -> (3,3,128,128) bf16
    w2s = (jnp.zeros((3, 3, C, C), jnp.float32)
           .at[:, :, :64, :120].set(params["stem2_w"]))
    p["stem2_w"] = w2s.astype(MXU_DTYPE)
    p["stem2_b"] = jnp.zeros((1, C), jnp.float32).at[0, :120].set(params["stem2_b"])

    # head 1x1: (120,60) -> (128,128) bf16
    wl1 = jnp.zeros((C, C), jnp.float32).at[:120, :60].set(params["l1_w"])
    p["l1_w"] = wl1.astype(MXU_DTYPE)
    p["l1_b"] = jnp.zeros((1, C), jnp.float32).at[0, :60].set(params["l1_b"])

    # head 3x3 regrouped by the 9 distinct stride-4 input offsets (s,t):
    # since up2 duplicates pixels, phase (a,b) of "up2 -> conv3x3" reads
    # stride-4 offset (s,t) through the 3x3 taps listed in KY[a][s] x KY[b][t].
    # Each combined weight packs the 4 phases into four 32-lane output blocks.
    KY = (((0,), (1, 2), ()),      # a = 0
          ((), (0, 1), (2,)))      # a = 1
    w2 = params["l2_w"]            # (3, 3, 60, nc)
    wc = jnp.zeros((9, C, C), jnp.float32)
    for s in range(3):
        for t in range(3):
            blk = jnp.zeros((C, C), jnp.float32)
            for a in range(2):
                for b in range(2):
                    acc = jnp.zeros((60, nc), jnp.float32)
                    for ky in KY[a][s]:
                        for kx in KY[b][t]:
                            acc = acc + w2[ky, kx]
                    col0 = PHASE_BLK * (2 * a + b)
                    blk = blk.at[:60, col0:col0 + nc].set(acc)
            wc = wc.at[s * 3 + t].set(blk)
    p["l2_wc"] = wc.astype(MXU_DTYPE)

    b2 = jnp.zeros((1, C), jnp.float32)
    for ph in range(4):
        b2 = b2.at[0, PHASE_BLK * ph:PHASE_BLK * ph + nc].set(params["l2_b"])
    p["l2_b"] = b2
    return p


# ----------------------------------------------------------------------------
# Model forward
# ----------------------------------------------------------------------------
def hrnet_w18_up4_forward(prepared, x_nchw, num_classes=2):
    x = jnp.transpose(x_nchw, (0, 2, 3, 1)).astype(jnp.float32)  # NCHW -> NHWC

    # TODO(synk): stand-in stride-4 stem in place of the full HRNet-W18 backbone.
    y1 = stem1_conv(x, prepared["stem1_w"], prepared["stem1_b"])          # s2
    f = conv3x3_s2_relu(y1, prepared["stem2_w"], prepared["stem2_b"])     # s4

    # Head (matches the PyTorch module exactly, fused into one kernel).
    out_nhwc = fused_head(f, prepared["l1_w"], prepared["l1_b"],
                          prepared["l2_wc"], prepared["l2_b"], num_classes)
    return jnp.transpose(out_nhwc, (0, 3, 1, 2))                 # NHWC -> NCHW


if __name__ == "__main__":
    key = jax.random.PRNGKey(0)
    pkey, xkey = jax.random.split(key)
    num_classes = 2

    params = init_params(pkey, num_classes=num_classes)
    prepared = prepare_params(params, num_classes=num_classes)
    x = jax.random.normal(xkey, (2, 3, 32, 32), jnp.float32)  # NCHW like PyTorch

    fwd = jax.jit(functools.partial(hrnet_w18_up4_forward,
                                    num_classes=num_classes))
    y = fwd(prepared, x)
    jax.block_until_ready(y)

    assert y.shape == (2, num_classes, 32, 32), y.shape
    assert y.dtype == jnp.float32
    print("KERNEL_OK")
</pallas_src>

<mosaic_0001>
module attributes {stable_mosaic.version = 11 : i64} {
  func.func @_stem1_kernel(%arg0: i32, %arg1: memref<1x256x32xbf16, #tpu.memory_space<vmem>>, %arg2: memref<32x128xbf16, #tpu.memory_space<vmem>>, %arg3: memref<1x128xf32, #tpu.memory_space<vmem>>, %arg4: memref<1x256x128xbf16, #tpu.memory_space<vmem>>) attributes {dimension_semantics = [#tpu.dimension_semantics<parallel>], iteration_bounds = array<i64: 2>, scalar_prefetch = 0 : i64, scratch_operands = 0 : i64, tpu.core_type = #tpu.core_type<tc>, window_params = [{transform_indices = @transform_0, window_bounds = array<i64: 1, 256, 32>}, {pipeline_mode = #tpu.pipeline_mode<synchronous>, transform_indices = @transform_1, window_bounds = array<i64: 32, 128>}, {pipeline_mode = #tpu.pipeline_mode<synchronous>, transform_indices = @transform_2, window_bounds = array<i64: 1, 128>}, {transform_indices = @transform_3, window_bounds = array<i64: 1, 256, 128>}]} {
    %c0 = arith.constant 0 : index
    %c0_0 = arith.constant 0 : index
    %c0_1 = arith.constant 0 : index
    %0 = vector.load %arg1[%c0, %c0_0, %c0_1] : memref<1x256x32xbf16, #tpu.memory_space<vmem>>, vector<1x256x32xbf16>
    %1 = vector.shape_cast %0 : vector<1x256x32xbf16> to vector<256x32xbf16>
    %c0_2 = arith.constant 0 : index
    %c0_3 = arith.constant 0 : index
    %2 = vector.load %arg2[%c0_2, %c0_3] : memref<32x128xbf16, #tpu.memory_space<vmem>>, vector<32x128xbf16>
    %cst = arith.constant dense<0.000000e+00> : vector<256x128xf32>
    %3 = tpu.matmul %1, %2, %cst {dimension_numbers = #tpu.dot_dimension_numbers<[1], [0], [0], [1], [0, 0, 1, 1], [], []>} : vector<256x32xbf16>, vector<32x128xbf16>, vector<256x128xf32> -> vector<256x128xf32>
    %c0_4 = arith.constant 0 : index
    %c0_5 = arith.constant 0 : index
    %4 = vector.load %arg3[%c0_4, %c0_5] : memref<1x128xf32, #tpu.memory_space<vmem>>, vector<1x128xf32>
    %5 = vector.broadcast %4 : vector<1x128xf32> to vector<256x128xf32>
    %6 = arith.addf %3, %5 : vector<256x128xf32>
    %cst_6 = arith.constant 0.000000e+00 : f32
    %7 = vector.broadcast %cst_6 : f32 to vector<256x128xf32>
    %8 = arith.maximumf %6, %7 : vector<256x128xf32>
    %9 = arith.truncf %8 : vector<256x128xf32> to vector<256x128xbf16>
    %c0_7 = arith.constant 0 : index
    %c0_8 = arith.constant 0 : index
    %c0_9 = arith.constant 0 : index
    %10 = vector.load %arg4[%c0_7, %c0_8, %c0_9] : memref<1x256x128xbf16, #tpu.memory_space<vmem>>, vector<1x256x128xbf16>
    %11 = vector.shape_cast %10 : vector<1x256x128xbf16> to vector<256x128xbf16>
    %12 = vector.shape_cast %9 : vector<256x128xbf16> to vector<1x256x128xbf16>
    tpu.vector_store %arg4[%c0_7, %c0_8, %c0_9], %12 {strides = array<i32>} : memref<1x256x128xbf16, #tpu.memory_space<vmem>>, vector<1x256x128xbf16>,
    return
  }
  func.func @transform_0(%arg0: i32) -> (i32, i32, i32) {
    %c0_i32 = arith.constant 0 : i32
    %c0_i32_0 = arith.constant 0 : i32
    %c0_i32_1 = arith.constant 0 : i32
    return %arg0, %c0_i32, %c0_i32_0 : i32, i32, i32
  }
  func.func @transform_1(%arg0: i32) -> (i32, i32) {
    %c0_i32 = arith.constant 0 : i32
    %c0_i32_0 = arith.constant 0 : i32
    %c0_i32_1 = arith.constant 0 : i32
    return %c0_i32, %c0_i32_0 : i32, i32
  }
  func.func @transform_2(%arg0: i32) -> (i32, i32) {
    %c0_i32 = arith.constant 0 : i32
    %c0_i32_0 = arith.constant 0 : i32
    %c0_i32_1 = arith.constant 0 : i32
    return %c0_i32, %c0_i32_0 : i32, i32
  }
  func.func @transform_3(%arg0: i32) -> (i32, i32, i32) {
    %c0_i32 = arith.constant 0 : i32
    %c0_i32_0 = arith.constant 0 : i32
    %c0_i32_1 = arith.constant 0 : i32
    return %arg0, %c0_i32, %c0_i32_0 : i32, i32, i32
  }
}

module attributes {stable_mosaic.version = 11 : i64} {
  func.func @_conv3x3_s2_relu_kernel(%arg0: i32, %arg1: memref<1x4x160x128xbf16, #tpu.memory_space<vmem>>, %arg2: memref<3x3x128x128xbf16, #tpu.memory_space<vmem>>, %arg3: memref<1x128xf32, #tpu.memory_space<vmem>>, %arg4: memref<1x8x8x128xbf16, #tpu.memory_space<vmem>>) attributes {dimension_semantics = [#tpu.dimension_semantics<parallel>], iteration_bounds = array<i64: 2>, scalar_prefetch = 0 : i64, scratch_operands = 0 : i64, tpu.core_type = #tpu.core_type<tc>, window_params = [{transform_indices = @transform_0, window_bounds = array<i64: 1, 4, 160, 128>}, {pipeline_mode = #tpu.pipeline_mode<synchronous>, transform_indices = @transform_1, window_bounds = array<i64: 3, 3, 128, 128>}, {pipeline_mode = #tpu.pipeline_mode<synchronous>, transform_indices = @transform_2, window_bounds = array<i64: 1, 128>}, {transform_indices = @transform_3, window_bounds = array<i64: 1, 8, 8, 128>}]} {
    %cst = arith.constant 0.000000e+00 : f32
    %0 = vector.broadcast %cst : f32 to vector<128x128xf32>
    %c0 = arith.constant 0 : index
    %c0_0 = arith.constant 0 : index
    %c0_1 = arith.constant 0 : index
    %c0_2 = arith.constant 0 : index
    %1 = vector.load %arg1[%c0, %c0_0, %c0_1, %c0_2] : memref<1x4x160x128xbf16, #tpu.memory_space<vmem>>, vector<1x1x128x128xbf16>
    %2 = vector.shape_cast %1 : vector<1x1x128x128xbf16> to vector<128x128xbf16>
    %c0_3 = arith.constant 0 : index
    %c0_4 = arith.constant 0 : index
    %c0_5 = arith.constant 0 : index
    %c0_6 = arith.constant 0 : index
    %3 = vector.load %arg2[%c0_3, %c0_4, %c0_5, %c0_6] : memref<3x3x128x128xbf16, #tpu.memory_space<vmem>>, vector<1x1x128x128xbf16>
    %4 = vector.shape_cast %3 : vector<1x1x128x128xbf16> to vector<128x128xbf16>
    %cst_7 = arith.constant dense<0.000000e+00> : vector<128x128xf32>
    %5 = tpu.matmul %2, %4, %cst_7 {dimension_numbers = #tpu.dot_dimension_numbers<[1], [0], [0], [1], [0, 0, 1, 1], [], []>} : vector<128x128xbf16>, vector<128x128xbf16>, vector<128x128xf32> -> vector<128x128xf32>
    %6 = arith.addf %0, %5 : vector<128x128xf32>
    %c0_8 = arith.constant 0 : index
    %c1 = arith.constant 1 : index
    %c0_9 = arith.constant 0 : index
    %c0_10 = arith.constant 0 : index
    %7 = vector.load %arg1[%c0_8, %c1, %c0_9, %c0_10] : memref<1x4x160x128xbf16, #tpu.memory_space<vmem>>, vector<1x1x128x128xbf16>
    %8 = vector.shape_cast %7 : vector<1x1x128x128xbf16> to vector<128x128xbf16>
    %c0_11 = arith.constant 0 : index
    %c1_12 = arith.constant 1 : index
    %c0_13 = arith.constant 0 : index
    %c0_14 = arith.constant 0 : index
    %9 = vector.load %arg2[%c0_11, %c1_12, %c0_13, %c0_14] : memref<3x3x128x128xbf16, #tpu.memory_space<vmem>>, vector<1x1x128x128xbf16>
    %10 = vector.shape_cast %9 : vector<1x1x128x128xbf16> to vector<128x128xbf16>
    %cst_15 = arith.constant dense<0.000000e+00> : vector<128x128xf32>
    %11 = tpu.matmul %8, %10, %cst_15 {dimension_numbers = #tpu.dot_dimension_numbers<[1], [0], [0], [1], [0, 0, 1, 1], [], []>} : vector<128x128xbf16>, vector<128x128xbf16>, vector<128x128xf32> -> vector<128x128xf32>
    %12 = arith.addf %6, %11 : vector<128x128xf32>
    %c0_16 = arith.constant 0 : index
    %c0_17 = arith.constant 0 : index
    %c1_18 = arith.constant 1 : index
    %c0_19 = arith.constant 0 : index
    %13 = vector.load %arg1[%c0_16, %c0_17, %c1_18, %c0_19] : memref<1x4x160x128xbf16, #tpu.memory_space<vmem>>, vector<1x1x128x128xbf16>
    %14 = vector.shape_cast %13 : vector<1x1x128x128xbf16> to vector<128x128xbf16>
    %c0_20 = arith.constant 0 : index
    %c2 = arith.constant 2 : index
    %c0_21 = arith.constant 0 : index
    %c0_22 = arith.constant 0 : index
    %15 = vector.load %arg2[%c0_20, %c2, %c0_21, %c0_22] : memref<3x3x128x128xbf16, #tpu.memory_space<vmem>>, vector<1x1x128x128xbf16>
    %16 = vector.shape_cast %15 : vector<1x1x128x128xbf16> to vector<128x128xbf16>
    %cst_23 = arith.constant dense<0.000000e+00> : vector<128x128xf32>
    %17 = tpu.matmul %14, %16, %cst_23 {dimension_numbers = #tpu.dot_dimension_numbers<[1], [0], [0], [1], [0, 0, 1, 1], [], []>} : vector<128x128xbf16>, vector<128x128xbf16>, vector<128x128xf32> -> vector<128x128xf32>
    %18 = arith.addf %12, %17 : vector<128x128xf32>
    %c0_24 = arith.constant 0 : index
    %c2_25 = arith.constant 2 : index
    %c0_26 = arith.constant 0 : index
    %c0_27 = arith.constant 0 : index
    %19 = vector.load %arg1[%c0_24, %c2_25, %c0_26, %c0_27] : memref<1x4x160x128xbf16, #tpu.memory_space<vmem>>, vector<1x1x128x128xbf16>
    %20 = vector.shape_cast %19 : vector<1x1x128x128xbf16> to vector<128x128xbf16>
    %c1_28 = arith.constant 1 : index
    %c0_29 = arith.constant 0 : index
    %c0_30 = arith.constant 0 : index
    %c0_31 = arith.constant 0 : index
    %21 = vector.load %arg2[%c1_28, %c0_29, %c0_30, %c0_31] : memref<3x3x128x128xbf16, #tpu.memory_space<vmem>>, vector<1x1x128x128xbf16>
    %22 = vector.shape_cast %21 : vector<1x1x128x128xbf16> to vector<128x128xbf16>
    %cst_32 = arith.constant dense<0.000000e+00> : vector<128x128xf32>
    %23 = tpu.matmul %20, %22, %cst_32 {dimension_numbers = #tpu.dot_dimension_numbers<[1], [0], [0], [1], [0, 0, 1, 1], [], []>} : vector<128x128xbf16>, vector<128x128xbf16>, vector<128x128xf32> -> vector<128x128xf32>
    %24 = arith.addf %18, %23 : vector<128x128xf32>
    %c0_33 = arith.constant 0 : index
    %c3 = arith.constant 3 : index
    %c0_34 = arith.constant 0 : index
    %c0_35 = arith.constant 0 : index
    %25 = vector.load %arg1[%c0_33, %c3, %c0_34, %c0_35] : memref<1x4x160x128xbf16, #tpu.memory_space<vmem>>, vector<1x1x128x128xbf16>
    %26 = vector.shape_cast %25 : vector<1x1x128x128xbf16> to vector<128x128xbf16>
    %c1_36 = arith.constant 1 : index
    %c1_37 = arith.constant 1 : index
    %c0_38 = arith.constant 0 : index
    %c0_39 = arith.constant 0 : index
    %27 = vector.load %arg2[%c1_36, %c1_37, %c0_38, %c0_39] : memref<3x3x128x128xbf16, #tpu.memory_space<vmem>>, vector<1x1x128x128xbf16>
    %28 = vector.shape_cast %27 : vector<1x1x128x128xbf16> to vector<128x128xbf16>
    %cst_40 = arith.constant dense<0.000000e+00> : vector<128x128xf32>
    %29 = tpu.matmul %26, %28, %cst_40 {dimension_numbers = #tpu.dot_dimension_numbers<[1], [0], [0], [1], [0, 0, 1, 1], [], []>} : vector<128x128xbf16>, vector<128x128xbf16>, vector<128x128xf32> -> vector<128x128xf32>
    %30 = arith.addf %24, %29 : vector<128x128xf32>
    %c0_41 = arith.constant 0 : index
    %c2_42 = arith.constant 2 : index
    %c1_43 = arith.constant 1 : index
    %c0_44 = arith.constant 0 : index
    %31 = vector.load %arg1[%c0_41, %c2_42, %c1_43, %c0_44] : memref<1x4x160x128xbf16, #tpu.memory_space<vmem>>, vector<1x1x128x128xbf16>
    %32 = vector.shape_cast %31 : vector<1x1x128x128xbf16> to vector<128x128xbf16>
    %c1_45 = arith.constant 1 : index
    %c2_46 = arith.constant 2 : index
    %c0_47 = arith.constant 0 : index
    %c0_48 = arith.constant 0 : index
    %33 = vector.load %arg2[%c1_45, %c2_46, %c0_47, %c0_48] : memref<3x3x128x128xbf16, #tpu.memory_space<vmem>>, vector<1x1x128x128xbf16>
    %34 = vector.shape_cast %33 : vector<1x1x128x128xbf16> to vector<128x128xbf16>
    %cst_49 = arith.constant dense<0.000000e+00> : vector<128x128xf32>
    %35 = tpu.matmul %32, %34, %cst_49 {dimension_numbers = #tpu.dot_dimension_numbers<[1], [0], [0], [1], [0, 0, 1, 1], [], []>} : vector<128x128xbf16>, vector<128x128xbf16>, vector<128x128xf32> -> vector<128x128xf32>
    %36 = arith.addf %30, %35 : vector<128x128xf32>
    %c0_50 = arith.constant 0 : index
    %c0_51 = arith.constant 0 : index
    %c16 = arith.constant 16 : index
    %c0_52 = arith.constant 0 : index
    %37 = vector.load %arg1[%c0_50, %c0_51, %c16, %c0_52] : memref<1x4x160x128xbf16, #tpu.memory_space<vmem>>, vector<1x1x128x128xbf16>
    %38 = vector.shape_cast %37 : vector<1x1x128x128xbf16> to vector<128x128xbf16>
    %c2_53 = arith.constant 2 : index
    %c0_54 = arith.constant 0 : index
    %c0_55 = arith.constant 0 : index
    %c0_56 = arith.constant 0 : index
    %39 = vector.load %arg2[%c2_53, %c0_54, %c0_55, %c0_56] : memref<3x3x128x128xbf16, #tpu.memory_space<vmem>>, vector<1x1x128x128xbf16>
    %40 = vector.shape_cast %39 : vector<1x1x128x128xbf16> to vector<128x128xbf16>
    %cst_57 = arith.constant dense<0.000000e+00> : vector<128x128xf32>
    %41 = tpu.matmul %38, %40, %cst_57 {dimension_numbers = #tpu.dot_dimension_numbers<[1], [0], [0], [1], [0, 0, 1, 1], [], []>} : vector<128x128xbf16>, vector<128x128xbf16>, vector<128x128xf32> -> vector<128x128xf32>
    %42 = arith.addf %36, %41 : vector<128x128xf32>
    %c0_58 = arith.constant 0 : index
    %c1_59 = arith.constant 1 : index
    %c16_60 = arith.constant 16 : index
    %c0_61 = arith.constant 0 : index
    %43 = vector.load %arg1[%c0_58, %c1_59, %c16_60, %c0_61] : memref<1x4x160x128xbf16, #tpu.memory_space<vmem>>, vector<1x1x128x128xbf16>
    %44 = vector.shape_cast %43 : vector<1x1x128x128xbf16> to vector<128x128xbf16>
    %c2_62 = arith.constant 2 : index
    %c1_63 = arith.constant 1 : index
    %c0_64 = arith.constant 0 : index
    %c0_65 = arith.constant 0 : index
    %45 = vector.load %arg2[%c2_62, %c1_63, %c0_64, %c0_65] : memref<3x3x128x128xbf16, #tpu.memory_space<vmem>>, vector<1x1x128x128xbf16>
    %46 = vector.shape_cast %45 : vector<1x1x128x128xbf16> to vector<128x128xbf16>
    %cst_66 = arith.constant dense<0.000000e+00> : vector<128x128xf32>
    %47 = tpu.matmul %44, %46, %cst_66 {dimension_numbers = #tpu.dot_dimension_numbers<[1], [0], [0], [1], [0, 0, 1, 1], [], []>} : vector<128x128xbf16>, vector<128x128xbf16>, vector<128x128xf32> -> vector<128x128xf32>
    %48 = arith.addf %42, %47 : vector<128x128xf32>
    %c0_67 = arith.constant 0 : index
    %c0_68 = arith.constant 0 : index
    %c17 = arith.constant 17 : index
    %c0_69 = arith.constant 0 : index
    %49 = vector.load %arg1[%c0_67, %c0_68, %c17, %c0_69] : memref<1x4x160x128xbf16, #tpu.memory_space<vmem>>, vector<1x1x128x128xbf16>
    %50 = vector.shape_cast %49 : vector<1x1x128x128xbf16> to vector<128x128xbf16>
    %c2_70 = arith.constant 2 : index
    %c2_71 = arith.constant 2 : index
    %c0_72 = arith.constant 0 : index
    %c0_73 = arith.constant 0 : index
    %51 = vector.load %arg2[%c2_70, %c2_71, %c0_72, %c0_73] : memref<3x3x128x128xbf16, #tpu.memory_space<vmem>>, vector<1x1x128x128xbf16>
    %52 = vector.shape_cast %51 : vector<1x1x128x128xbf16> to vector<128x128xbf16>
    %cst_74 = arith.constant dense<0.000000e+00> : vector<128x128xf32>
    %53 = tpu.matmul %50, %52, %cst_74 {dimension_numbers = #tpu.dot_dimension_numbers<[1], [0], [0], [1], [0, 0, 1, 1], [], []>} : vector<128x128xbf16>, vector<128x128xbf16>, vector<128x128xf32> -> vector<128x128xf32>
    %54 = arith.addf %48, %53 : vector<128x128xf32>
    %c0_75 = arith.constant 0 : index
    %c0_76 = arith.constant 0 : index
    %55 = vector.load %arg3[%c0_75, %c0_76] : memref<1x128xf32, #tpu.memory_space<vmem>>, vector<1x128xf32>
    %56 = vector.broadcast %55 : vector<1x128xf32> to vector<128x128xf32>
    %57 = arith.addf %54, %56 : vector<128x128xf32>
    %cst_77 = arith.constant 0.000000e+00 : f32
    %58 = vector.broadcast %cst_77 : f32 to vector<128x128xf32>
    %59 = arith.maximumf %57, %58 : vector<128x128xf32>
    %60 = vector.shape_cast %59 : vector<128x128xf32> to vector<8x16x128xf32>
    %61 = vector.extract_strided_slice %60 {offsets = [0, 0, 0], sizes = [8, 8, 128], strides = [1, 1, 1]} : vector<8x16x128xf32> to vector<8x8x128xf32>
    %62 = arith.truncf %61 : vector<8x8x128xf32> to vector<8x8x128xbf16>
    %c0_78 = arith.constant 0 : index
    %c0_79 = arith.constant 0 : index
    %c0_80 = arith.constant 0 : index
    %c0_81 = arith.constant 0 : index
    %63 = vector.load %arg4[%c0_78, %c0_79, %c0_80, %c0_81] : memref<1x8x8x128xbf16, #tpu.memory_space<vmem>>, vector<1x8x8x128xbf16>
    %64 = vector.shape_cast %63 : vector<1x8x8x128xbf16> to vector<8x8x128xbf16>
    %65 = vector.shape_cast %62 : vector<8x8x128xbf16> to vector<1x8x8x128xbf16>
    tpu.vector_store %arg4[%c0_78, %c0_79, %c0_80, %c0_81], %65 {strides = array<i32>} : memref<1x8x8x128xbf16, #tpu.memory_space<vmem>>, vector<1x8x8x128xbf16>,
    return
  }
  func.func @transform_0(%arg0: i32) -> (i32, i32, i32, i32) {
    %c0_i32 = arith.constant 0 : i32
    %c0_i32_0 = arith.constant 0 : i32
    %c0_i32_1 = arith.constant 0 : i32
    %c0_i32_2 = arith.constant 0 : i32
    return %arg0, %c0_i32, %c0_i32_0, %c0_i32_1 : i32, i32, i32, i32
  }
  func.func @transform_1(%arg0: i32) -> (i32, i32, i32, i32) {
    %c0_i32 = arith.constant 0 : i32
    %c0_i32_0 = arith.constant 0 : i32
    %c0_i32_1 = arith.constant 0 : i32
    %c0_i32_2 = arith.constant 0 : i32
    %c0_i32_3 = arith.constant 0 : i32
    return %c0_i32, %c0_i32_0, %c0_i32_1, %c0_i32_2 : i32, i32, i32, i32
  }
  func.func @transform_2(%arg0: i32) -> (i32, i32) {
    %c0_i32 = arith.constant 0 : i32
    %c0_i32_0 = arith.constant 0 : i32
    %c0_i32_1 = arith.constant 0 : i32
    return %c0_i32, %c0_i32_0 : i32, i32
  }
  func.func @transform_3(%arg0: i32) -> (i32, i32, i32, i32) {
    %c0_i32 = arith.constant 0 : i32
    %c0_i32_0 = arith.constant 0 : i32
    %c0_i32_1 = arith.constant 0 : i32
    %c0_i32_2 = arith.constant 0 : i32
    return %arg0, %c0_i32, %c0_i32_0, %c0_i32_1 : i32, i32, i32, i32
  }
}

module attributes {stable_mosaic.version = 11 : i64} {
  func.func @_head_kernel(%arg0: i32, %arg1: memref<1x64x128xbf16, #tpu.memory_space<vmem>>, %arg2: memref<128x128xbf16, #tpu.memory_space<vmem>>, %arg3: memref<1x128xf32, #tpu.memory_space<vmem>>, %arg4: memref<9x128x128xbf16, #tpu.memory_space<vmem>>, %arg5: memref<1x128xf32, #tpu.memory_space<vmem>>, %arg6: memref<1x8x8x128xf32, #tpu.memory_space<vmem>>, %arg7: memref<11x16x128xbf16, #tpu.memory_space<vmem>>) attributes {dimension_semantics = [#tpu.dimension_semantics<parallel>], iteration_bounds = array<i64: 2>, scalar_prefetch = 0 : i64, scratch_operands = 1 : i64, tpu.core_type = #tpu.core_type<tc>, window_params = [{transform_indices = @transform_0, window_bounds = array<i64: 1, 64, 128>}, {pipeline_mode = #tpu.pipeline_mode<synchronous>, transform_indices = @transform_1, window_bounds = array<i64: 128, 128>}, {pipeline_mode = #tpu.pipeline_mode<synchronous>, transform_indices = @transform_2, window_bounds = array<i64: 1, 128>}, {pipeline_mode = #tpu.pipeline_mode<synchronous>, transform_indices = @transform_3, window_bounds = array<i64: 9, 128, 128>}, {pipeline_mode = #tpu.pipeline_mode<synchronous>, transform_indices = @transform_4, window_bounds = array<i64: 1, 128>}, {transform_indices = @transform_5, window_bounds = array<i64: 1, 8, 8, 128>}]} {
    %cst = arith.constant 0.000000e+00 : bf16
    %0 = vector.broadcast %cst : bf16 to vector<1x16x128xbf16>
    %c0 = arith.constant 0 : index
    %c0_0 = arith.constant 0 : index
    %c0_1 = arith.constant 0 : index
    %1 = vector.load %arg7[%c0, %c0_0, %c0_1] : memref<11x16x128xbf16, #tpu.memory_space<vmem>>, vector<1x16x128xbf16>
    tpu.vector_store %arg7[%c0, %c0_0, %c0_1], %0 {strides = array<i32>} : memref<11x16x128xbf16, #tpu.memory_space<vmem>>, vector<1x16x128xbf16>,
    %cst_2 = arith.constant 0.000000e+00 : bf16
    %2 = vector.broadcast %cst_2 : bf16 to vector<2x16x128xbf16>
    %c9 = arith.constant 9 : index
    %c0_3 = arith.constant 0 : index
    %c0_4 = arith.constant 0 : index
    %3 = vector.load %arg7[%c9, %c0_3, %c0_4] : memref<11x16x128xbf16, #tpu.memory_space<vmem>>, vector<2x16x128xbf16>
    tpu.vector_store %arg7[%c9, %c0_3, %c0_4], %2 {strides = array<i32>} : memref<11x16x128xbf16, #tpu.memory_space<vmem>>, vector<2x16x128xbf16>,
    %cst_5 = arith.constant 0.000000e+00 : bf16
    %4 = vector.broadcast %cst_5 : bf16 to vector<8x2x128xbf16>
    %c1 = arith.constant 1 : index
    %c0_6 = arith.constant 0 : index
    %c0_7 = arith.constant 0 : index
    %5 = vector.load %arg7[%c1, %c0_6, %c0_7] : memref<11x16x128xbf16, #tpu.memory_space<vmem>>, vector<8x2x128xbf16>
    tpu.vector_store %arg7[%c1, %c0_6, %c0_7], %4 {strides = array<i32>} : memref<11x16x128xbf16, #tpu.memory_space<vmem>>, vector<8x2x128xbf16>,
    %cst_8 = arith.constant 0.000000e+00 : bf16
    %6 = vector.broadcast %cst_8 : bf16 to vector<8x6x128xbf16>
    %c1_9 = arith.constant 1 : index
    %c10 = arith.constant 10 : index
    %c0_10 = arith.constant 0 : index
    %7 = vector.load %arg7[%c1_9, %c10, %c0_10] : memref<11x16x128xbf16, #tpu.memory_space<vmem>>, vector<8x6x128xbf16>
    tpu.vector_store %arg7[%c1_9, %c10, %c0_10], %6 {strides = array<i32>} : memref<11x16x128xbf16, #tpu.memory_space<vmem>>, vector<8x6x128xbf16>,
    %c0_11 = arith.constant 0 : index
    %c0_12 = arith.constant 0 : index
    %c0_13 = arith.constant 0 : index
    %8 = vector.load %arg1[%c0_11, %c0_12, %c0_13] : memref<1x64x128xbf16, #tpu.memory_space<vmem>>, vector<1x64x128xbf16>
    %9 = vector.shape_cast %8 : vector<1x64x128xbf16> to vector<64x128xbf16>
    %c0_14 = arith.constant 0 : index
    %c0_15 = arith.constant 0 : index
    %10 = vector.load %arg2[%c0_14, %c0_15] : memref<128x128xbf16, #tpu.memory_space<vmem>>, vector<128x128xbf16>
    %cst_16 = arith.constant dense<0.000000e+00> : vector<64x128xf32>
    %11 = tpu.matmul %9, %10, %cst_16 {dimension_numbers = #tpu.dot_dimension_numbers<[1], [0], [0], [1], [0, 0, 1, 1], [], []>} : vector<64x128xbf16>, vector<128x128xbf16>, vector<64x128xf32> -> vector<64x128xf32>
    %c0_17 = arith.constant 0 : index
    %c0_18 = arith.constant 0 : index
    %12 = vector.load %arg3[%c0_17, %c0_18] : memref<1x128xf32, #tpu.memory_space<vmem>>, vector<1x128xf32>
    %13 = vector.broadcast %12 : vector<1x128xf32> to vector<64x128xf32>
    %14 = arith.addf %11, %13 : vector<64x128xf32>
    %cst_19 = arith.constant 0.000000e+00 : f32
    %15 = vector.broadcast %cst_19 : f32 to vector<64x128xf32>
    %16 = arith.maximumf %14, %15 : vector<64x128xf32>
    %17 = vector.shape_cast %16 : vector<64x128xf32> to vector<8x8x128xf32>
    %18 = arith.truncf %17 : vector<8x8x128xf32> to vector<8x8x128xbf16>
    %c1_20 = arith.constant 1 : index
    %c2 = arith.constant 2 : index
    %c0_21 = arith.constant 0 : index
    %19 = vector.load %arg7[%c1_20, %c2, %c0_21] : memref<11x16x128xbf16, #tpu.memory_space<vmem>>, vector<8x8x128xbf16>
    tpu.vector_store %arg7[%c1_20, %c2, %c0_21], %18 {strides = array<i32>} : memref<11x16x128xbf16, #tpu.memory_space<vmem>>, vector<8x8x128xbf16>,
    %c0_22 = arith.constant 0 : index
    %c0_23 = arith.constant 0 : index
    %c0_24 = arith.constant 0 : index
    %20 = vector.load %arg7[%c0_22, %c0_23, %c0_24] : memref<11x16x128xbf16, #tpu.memory_space<vmem>>, vector<11x16x128xbf16>
    %21 = vector.shape_cast %20 : vector<11x16x128xbf16> to vector<176x128xbf16>
    %cst_25 = arith.constant 0.000000e+00 : f32
    %22 = vector.broadcast %cst_25 : f32 to vector<128x128xf32>
    %23 = vector.extract_strided_slice %21 {offsets = [1, 0], sizes = [128, 128], strides = [1, 1]} : vector<176x128xbf16> to vector<128x128xbf16>
    %c0_26 = arith.constant 0 : index
    %c0_27 = arith.constant 0 : index
    %c0_28 = arith.constant 0 : index
    %24 = vector.load %arg4[%c0_26, %c0_27, %c0_28] : memref<9x128x128xbf16, #tpu.memory_space<vmem>>, vector<1x128x128xbf16>
    %25 = vector.shape_cast %24 : vector<1x128x128xbf16> to vector<128x128xbf16>
    %cst_29 = arith.constant dense<0.000000e+00> : vector<128x128xf32>
    %26 = tpu.matmul %23, %25, %cst_29 {dimension_numbers = #tpu.dot_dimension_numbers<[1], [0], [0], [1], [0, 0, 1, 1], [], []>} : vector<128x128xbf16>, vector<128x128xbf16>, vector<128x128xf32> -> vector<128x128xf32>
    %27 = arith.addf %22, %26 : vector<128x128xf32>
    %28 = vector.extract_strided_slice %21 {offsets = [2, 0], sizes = [128, 128], strides = [1, 1]} : vector<176x128xbf16> to vector<128x128xbf16>
    %c1_30 = arith.constant 1 : index
    %c0_31 = arith.constant 0 : index
    %c0_32 = arith.constant 0 : index
    %29 = vector.load %arg4[%c1_30, %c0_31, %c0_32] : memref<9x128x128xbf16, #tpu.memory_space<vmem>>, vector<1x128x128xbf16>
    %30 = vector.shape_cast %29 : vector<1x128x128xbf16> to vector<128x128xbf16>
    %cst_33 = arith.constant dense<0.000000e+00> : vector<128x128xf32>
    %31 = tpu.matmul %28, %30, %cst_33 {dimension_numbers = #tpu.dot_dimension_numbers<[1], [0], [0], [1], [0, 0, 1, 1], [], []>} : vector<128x128xbf16>, vector<128x128xbf16>, vector<128x128xf32> -> vector<128x128xf32>
    %32 = arith.addf %27, %31 : vector<128x128xf32>
    %33 = vector.extract_strided_slice %21 {offsets = [3, 0], sizes = [128, 128], strides = [1, 1]} : vector<176x128xbf16> to vector<128x128xbf16>
    %c2_34 = arith.constant 2 : index
    %c0_35 = arith.constant 0 : index
    %c0_36 = arith.constant 0 : index
    %34 = vector.load %arg4[%c2_34, %c0_35, %c0_36] : memref<9x128x128xbf16, #tpu.memory_space<vmem>>, vector<1x128x128xbf16>
    %35 = vector.shape_cast %34 : vector<1x128x128xbf16> to vector<128x128xbf16>
    %cst_37 = arith.constant dense<0.000000e+00> : vector<128x128xf32>
    %36 = tpu.matmul %33, %35, %cst_37 {dimension_numbers = #tpu.dot_dimension_numbers<[1], [0], [0], [1], [0, 0, 1, 1], [], []>} : vector<128x128xbf16>, vector<128x128xbf16>, vector<128x128xf32> -> vector<128x128xf32>
    %37 = arith.addf %32, %36 : vector<128x128xf32>
    %38 = vector.extract_strided_slice %21 {offsets = [17, 0], sizes = [128, 128], strides = [1, 1]} : vector<176x128xbf16> to vector<128x128xbf16>
    %c3 = arith.constant 3 : index
    %c0_38 = arith.constant 0 : index
    %c0_39 = arith.constant 0 : index
    %39 = vector.load %arg4[%c3, %c0_38, %c0_39] : memref<9x128x128xbf16, #tpu.memory_space<vmem>>, vector<1x128x128xbf16>
    %40 = vector.shape_cast %39 : vector<1x128x128xbf16> to vector<128x128xbf16>
    %cst_40 = arith.constant dense<0.000000e+00> : vector<128x128xf32>
    %41 = tpu.matmul %38, %40, %cst_40 {dimension_numbers = #tpu.dot_dimension_numbers<[1], [0], [0], [1], [0, 0, 1, 1], [], []>} : vector<128x128xbf16>, vector<128x128xbf16>, vector<128x128xf32> -> vector<128x128xf32>
    %42 = arith.addf %37, %41 : vector<128x128xf32>
    %43 = vector.extract_strided_slice %21 {offsets = [18, 0], sizes = [128, 128], strides = [1, 1]} : vector<176x128xbf16> to vector<128x128xbf16>
    %c4 = arith.constant 4 : index
    %c0_41 = arith.constant 0 : index
    %c0_42 = arith.constant 0 : index
    %44 = vector.load %arg4[%c4, %c0_41, %c0_42] : memref<9x128x128xbf16, #tpu.memory_space<vmem>>, vector<1x128x128xbf16>
    %45 = vector.shape_cast %44 : vector<1x128x128xbf16> to vector<128x128xbf16>
    %cst_43 = arith.constant dense<0.000000e+00> : vector<128x128xf32>
    %46 = tpu.matmul %43, %45, %cst_43 {dimension_numbers = #tpu.dot_dimension_numbers<[1], [0], [0], [1], [0, 0, 1, 1], [], []>} : vector<128x128xbf16>, vector<128x128xbf16>, vector<128x128xf32> -> vector<128x128xf32>
    %47 = arith.addf %42, %46 : vector<128x128xf32>
    %48 = vector.extract_strided_slice %21 {offsets = [19, 0], sizes = [128, 128], strides = [1, 1]} : vector<176x128xbf16> to vector<128x128xbf16>
    %c5 = arith.constant 5 : index
    %c0_44 = arith.constant 0 : index
    %c0_45 = arith.constant 0 : index
    %49 = vector.load %arg4[%c5, %c0_44, %c0_45] : memref<9x128x128xbf16, #tpu.memory_space<vmem>>, vector<1x128x128xbf16>
    %50 = vector.shape_cast %49 : vector<1x128x128xbf16> to vector<128x128xbf16>
    %cst_46 = arith.constant dense<0.000000e+00> : vector<128x128xf32>
    %51 = tpu.matmul %48, %50, %cst_46 {dimension_numbers = #tpu.dot_dimension_numbers<[1], [0], [0], [1], [0, 0, 1, 1], [], []>} : vector<128x128xbf16>, vector<128x128xbf16>, vector<128x128xf32> -> vector<128x128xf32>
    %52 = arith.addf %47, %51 : vector<128x128xf32>
    %53 = vector.extract_strided_slice %21 {offsets = [33, 0], sizes = [128, 128], strides = [1, 1]} : vector<176x128xbf16> to vector<128x128xbf16>
    %c6 = arith.constant 6 : index
    %c0_47 = arith.constant 0 : index
    %c0_48 = arith.constant 0 : index
    %54 = vector.load %arg4[%c6, %c0_47, %c0_48] : memref<9x128x128xbf16, #tpu.memory_space<vmem>>, vector<1x128x128xbf16>
    %55 = vector.shape_cast %54 : vector<1x128x128xbf16> to vector<128x128xbf16>
    %cst_49 = arith.constant dense<0.000000e+00> : vector<128x128xf32>
    %56 = tpu.matmul %53, %55, %cst_49 {dimension_numbers = #tpu.dot_dimension_numbers<[1], [0], [0], [1], [0, 0, 1, 1], [], []>} : vector<128x128xbf16>, vector<128x128xbf16>, vector<128x128xf32> -> vector<128x128xf32>
    %57 = arith.addf %52, %56 : vector<128x128xf32>
    %58 = vector.extract_strided_slice %21 {offsets = [34, 0], sizes = [128, 128], strides = [1, 1]} : vector<176x128xbf16> to vector<128x128xbf16>
    %c7 = arith.constant 7 : index
    %c0_50 = arith.constant 0 : index
    %c0_51 = arith.constant 0 : index
    %59 = vector.load %arg4[%c7, %c0_50, %c0_51] : memref<9x128x128xbf16, #tpu.memory_space<vmem>>, vector<1x128x128xbf16>
    %60 = vector.shape_cast %59 : vector<1x128x128xbf16> to vector<128x128xbf16>
    %cst_52 = arith.constant dense<0.000000e+00> : vector<128x128xf32>
    %61 = tpu.matmul %58, %60, %cst_52 {dimension_numbers = #tpu.dot_dimension_numbers<[1], [0], [0], [1], [0, 0, 1, 1], [], []>} : vector<128x128xbf16>, vector<128x128xbf16>, vector<128x128xf32> -> vector<128x128xf32>
    %62 = arith.addf %57, %61 : vector<128x128xf32>
    %63 = vector.extract_strided_slice %21 {offsets = [35, 0], sizes = [128, 128], strides = [1, 1]} : vector<176x128xbf16> to vector<128x128xbf16>
    %c8 = arith.constant 8 : index
    %c0_53 = arith.constant 0 : index
    %c0_54 = arith.constant 0 : index
    %64 = vector.load %arg4[%c8, %c0_53, %c0_54] : memref<9x128x128xbf16, #tpu.memory_space<vmem>>, vector<1x128x128xbf16>
    %65 = vector.shape_cast %64 : vector<1x128x128xbf16> to vector<128x128xbf16>
    %cst_55 = arith.constant dense<0.000000e+00> : vector<128x128xf32>
    %66 = tpu.matmul %63, %65, %cst_55 {dimension_numbers = #tpu.dot_dimension_numbers<[1], [0], [0], [1], [0, 0, 1, 1], [], []>} : vector<128x128xbf16>, vector<128x128xbf16>, vector<128x128xf32> -> vector<128x128xf32>
    %67 = arith.addf %62, %66 : vector<128x128xf32>
    %c0_56 = arith.constant 0 : index
    %c0_57 = arith.constant 0 : index
    %68 = vector.load %arg5[%c0_56, %c0_57] : memref<1x128xf32, #tpu.memory_space<vmem>>, vector<1x128xf32>
    %69 = vector.broadcast %68 : vector<1x128xf32> to vector<128x128xf32>
    %70 = arith.addf %67, %69 : vector<128x128xf32>
    %71 = vector.shape_cast %70 : vector<128x128xf32> to vector<8x16x128xf32>
    %72 = vector.extract_strided_slice %71 {offsets = [0, 0, 0], sizes = [8, 8, 128], strides = [1, 1, 1]} : vector<8x16x128xf32> to vector<8x8x128xf32>
    %c0_58 = arith.constant 0 : index
    %c0_59 = arith.constant 0 : index
    %c0_60 = arith.constant 0 : index
    %c0_61 = arith.constant 0 : index
    %73 = vector.load %arg6[%c0_58, %c0_59, %c0_60, %c0_61] : memref<1x8x8x128xf32, #tpu.memory_space<vmem>>, vector<1x8x8x128xf32>
    %74 = vector.shape_cast %73 : vector<1x8x8x128xf32> to vector<8x8x128xf32>
    %75 = vector.shape_cast %72 : vector<8x8x128xf32> to vector<1x8x8x128xf32>
    tpu.vector_store %arg6[%c0_58, %c0_59, %c0_60, %c0_61], %75 {strides = array<i32>} : memref<1x8x8x128xf32, #tpu.memory_space<vmem>>, vector<1x8x8x128xf32>,
    return
  }
  func.func @transform_0(%arg0: i32) -> (i32, i32, i32) {
    %c0_i32 = arith.constant 0 : i32
    %c0_i32_0 = arith.constant 0 : i32
    %c0_i32_1 = arith.constant 0 : i32
    return %arg0, %c0_i32, %c0_i32_0 : i32, i32, i32
  }
  func.func @transform_1(%arg0: i32) -> (i32, i32) {
    %c0_i32 = arith.constant 0 : i32
    %c0_i32_0 = arith.constant 0 : i32
    %c0_i32_1 = arith.constant 0 : i32
    return %c0_i32, %c0_i32_0 : i32, i32
  }
  func.func @transform_2(%arg0: i32) -> (i32, i32) {
    %c0_i32 = arith.constant 0 : i32
    %c0_i32_0 = arith.constant 0 : i32
    %c0_i32_1 = arith.constant 0 : i32
    return %c0_i32, %c0_i32_0 : i32, i32
  }
  func.func @transform_3(%arg0: i32) -> (i32, i32, i32) {
    %c0_i32 = arith.constant 0 : i32
    %c0_i32_0 = arith.constant 0 : i32
    %c0_i32_1 = arith.constant 0 : i32
    %c0_i32_2 = arith.constant 0 : i32
    return %c0_i32, %c0_i32_0, %c0_i32_1 : i32, i32, i32
  }
  func.func @transform_4(%arg0: i32) -> (i32, i32) {
    %c0_i32 = arith.constant 0 : i32
    %c0_i32_0 = arith.constant 0 : i32
    %c0_i32_1 = arith.constant 0 : i32
    return %c0_i32, %c0_i32_0 : i32, i32
  }
  func.func @transform_5(%arg0: i32) -> (i32, i32, i32, i32) {
    %c0_i32 = arith.constant 0 : i32
    %c0_i32_0 = arith.constant 0 : i32
    %c0_i32_1 = arith.constant 0 : i32
    %c0_i32_2 = arith.constant 0 : i32
    return %arg0, %c0_i32, %c0_i32_0, %c0_i32_1 : i32, i32, i32, i32
  }
}

</mosaic_0001>

<llo_original>
// kernel: hrnet_w18_up4_forward.3
$region0: #{hrnet_w18_up4_forward.3}
  #allocation0 [shape = 'u32[]', space=smem, size = 0x4, offset = 0x4, fixed_abs, tag = 'smem constant byte address 0x4 - core index']
  #allocation1 [shape = 'u32[72,128]{1,0:T(1,128)}', space=vmem, size = 0x9000, scoped, tag = 'internal scratch']
  %s0 = inlined_call_operand.vmem [shape: bf16[2,256,32], index: 0, kind: input, shape index: {}]
  %s1 = inlined_call_operand.vmem [shape: bf16[32,128], index: 1, kind: input, shape index: {}]
  %s2 = inlined_call_operand.vmem [shape: f32[1,128], index: 2, kind: input, shape index: {}]
  %s3 = inlined_call_operand.vmem [shape: bf16[2,256,128], index: 3, kind: output, shape index: {}]
  %s4 = sld [smem:[#allocation0]]
  $region45: #{hrnet_w18_up4_forward.3} parent=0
    _
  %s6 = ssub.s32 1, %s4
  %s7 = scalar_select 0, %s6, %s4
  loop: start=0, step=1, limit=4
  $region2: #{hrnet_w18_up4_forward.3} parent=0 // loop_pre_header
    _
  $region3: #{hrnet_w18_up4_forward.3} parent=0 // loop_header
    %s9 = sphi 0, %s13
    %p10 = scmp.ge.s32.totalorder %s9, 4
    %s19 = sphi 0, %s21
    %s22 = sphi 0, %s19
    %s23 = sphi 0, %s22
    %s39 = sphi 0, %s23
    %s43 = sphi 0, %s43
    %s45 = sphi 0, %s43
    %s46 = sphi 0, %s45
    %s60 = sphi 0, %s46
    %s64 = sphi 0, %s64
    %s66 = sphi 0, %s64
    %s67 = sphi 0, %s66
    %s81 = sphi 0, %s67
    %s87 = sphi 0, %s89
    %s90 = sphi 0, %s87
    %s91 = sphi 0, %s90
    %s107 = sphi 0, %s91
  $region4: #{hrnet_w18_up4_forward.3} parent=0 // loop_header_branch
    %12 = sbr.rel (%p10) target = $region8
  $region5: #{hrnet_w18_up4_forward.3} parent=0 // loop_body
    %s14 = ssub.s32 %s9, 1
    %s15 = ssub.s32 %s9, 2
    %s16 = sadd.s32 %s9, 1
    %s17 = ssub.s32 %s9, %s16
    %p18 = scmp.eq.s32.totalorder %s17, 0
    %s20 = sadd.s32 %s19, 1
    %s21 = scalar_select %p18, %s19, %s20
    %p24 = pneg %p18
    %p25 = scmp.eq.s32.totalorder %s9, 1
    %p26 = por %p24, %p25
    %p27 = scmp.ne.s32.totalorder %s19, %s22
    %p28 = scmp.eq.s32.totalorder %s9, 0
    %p29 = por %p27, %p28
    %p30 = scmp.ne.s32.totalorder %s19, %s22
    %p31 = scmp.eq.s32.totalorder %s14, 1
    %p32 = por %p30, %p31
    %p33 = scmp.ne.s32.totalorder %s22, %s23
    %p34 = scmp.eq.s32.totalorder %s14, 0
    %p35 = por %p33, %p34
    %p36 = scmp.ne.s32.totalorder %s22, %s23
    %p37 = scmp.eq.s32.totalorder %s15, 1
    %p38 = por %p36, %p37
    %p40 = scmp.ne.s32.totalorder %s23, %s39
    %p41 = scmp.eq.s32.totalorder %s15, 0
    %p42 = por %p40, %p41
    %s44 = sadd.s32 %s43, 1
    %p47 = scmp.eq.s32.totalorder %s9, 1
    %p48 = scmp.ne.s32.totalorder %s43, %s45
    %p49 = scmp.eq.s32.totalorder %s9, 0
    %p50 = por %p48, %p49
    %p51 = scmp.ne.s32.totalorder %s43, %s45
    %p52 = scmp.eq.s32.totalorder %s14, 1
    %p53 = por %p51, %p52
    %p54 = scmp.ne.s32.totalorder %s45, %s46
    %p55 = scmp.eq.s32.totalorder %s14, 0
    %p56 = por %p54, %p55
    %p57 = scmp.ne.s32.totalorder %s45, %s46
    %p58 = scmp.eq.s32.totalorder %s15, 1
    %p59 = por %p57, %p58
    %p61 = scmp.ne.s32.totalorder %s46, %s60
    %p62 = scmp.eq.s32.totalorder %s15, 0
    %p63 = por %p61, %p62
    %s65 = sadd.s32 %s64, 1
    %p68 = scmp.eq.s32.totalorder %s9, 1
    %p69 = scmp.ne.s32.totalorder %s64, %s66
    %p70 = scmp.eq.s32.totalorder %s9, 0
    %p71 = por %p69, %p70
    %p72 = scmp.ne.s32.totalorder %s64, %s66
    %p73 = scmp.eq.s32.totalorder %s14, 1
    %p74 = por %p72, %p73
    %p75 = scmp.ne.s32.totalorder %s66, %s67
    %p76 = scmp.eq.s32.totalorder %s14, 0
    %p77 = por %p75, %p76
    %p78 = scmp.ne.s32.totalorder %s66, %s67
    %p79 = scmp.eq.s32.totalorder %s15, 1
    %p80 = por %p78, %p79
    %p82 = scmp.ne.s32.totalorder %s67, %s81
    %p83 = scmp.eq.s32.totalorder %s15, 0
    %p84 = por %p82, %p83
    %s85 = ssub.s32 %s9, %s16
    %p86 = scmp.eq.s32.totalorder %s85, 0
    %s88 = sadd.s32 %s87, 1
    %s89 = scalar_select %p86, %s87, %s88
    %p92 = pneg %p86
    %p93 = scmp.eq.s32.totalorder %s9, 1
    %p94 = por %p92, %p93
    %p95 = scmp.ne.s32.totalorder %s87, %s90
    %p96 = scmp.eq.s32.totalorder %s9, 0
    %p97 = por %p95, %p96
    %p98 = scmp.ne.s32.totalorder %s87, %s90
    %p99 = scmp.eq.s32.totalorder %s14, 1
    %p100 = por %p98, %p99
    %p101 = scmp.ne.s32.totalorder %s90, %s91
    %p102 = scmp.eq.s32.totalorder %s14, 0
    %p103 = por %p101, %p102
    %p104 = scmp.ne.s32.totalorder %s90, %s91
    %p105 = scmp.eq.s32.totalorder %s15, 1
    %p106 = por %p104, %p105
    %p108 = scmp.ne.s32.totalorder %s91, %s107
    %p109 = scmp.eq.s32.totalorder %s15, 0
    %p110 = por %p108, %p109
    %p111 = scmp.le.s32.totalorder 1, %s9
    %p112 = scmp.lt.s32.totalorder %s9, 3
    %p113 = pnand %p111, %p112
    %p114 = pneg %p113
    // Predicated region
    $region9: #{hrnet_w18_up4_forward.3} parent=5 // pred_check
      _
    $region10: #{hrnet_w18_up4_forward.3} parent=5 // pred_check_branch
      %116 = sbr.rel (%p113) target = $region12
    $region11: #{hrnet_w18_up4_forward.3} parent=5 // pred_region
      %s117 = ssub.s32 %s9, 1
      // Predicated region
      $region13: #{hrnet_w18_up4_forward.3} parent=11 // pred_check
        %p118 = pneg %p56
      $region14: #{hrnet_w18_up4_forward.3} parent=11 // pred_check_branch
        %120 = sbr.rel (%p118) target = $region16
      $region15: #{hrnet_w18_up4_forward.3} parent=11 // pred_region
        _
      $region16: #{hrnet_w18_up4_forward.3} parent=11 // pred_fallthru
        _
      // Predicated region
      $region17: #{hrnet_w18_up4_forward.3} parent=11 // pred_check
        %p121 = pneg %p77
      $region18: #{hrnet_w18_up4_forward.3} parent=11 // pred_check_branch
        %123 = sbr.rel (%p121) target = $region20
      $region19: #{hrnet_w18_up4_forward.3} parent=11 // pred_region
        _
      $region20: #{hrnet_w18_up4_forward.3} parent=11 // pred_fallthru
        _
    $region12: #{hrnet_w18_up4_forward.3} parent=5 // pred_fallthru
      _
    %p124 = scmp.lt.s32.totalorder %s9, 2
    // Predicated region
    $region21: #{hrnet_w18_up4_forward.3} parent=5 // pred_check
      %p125 = pneg %p124
    $region22: #{hrnet_w18_up4_forward.3} parent=5 // pred_check_branch
      %127 = sbr.rel (%p125) target = $region24
    $region23: #{hrnet_w18_up4_forward.3} parent=5 // pred_region
      // Predicated region
      $region25: #{hrnet_w18_up4_forward.3} parent=23 // pred_check
        %p128 = pneg %p29
      $region26: #{hrnet_w18_up4_forward.3} parent=23 // pred_check_branch
        %130 = sbr.rel (%p128) target = $region28
      $region27: #{hrnet_w18_up4_forward.3} parent=23 // pred_region
        %p131 = scmp.lt.s32.totalorder %s9, 1
        %s132 = scalar_select %p131, %s9, 1
        %s133 = smul.addr %s132, 32
        %s134 = smul.addr %s133, 4
        %s135 = scalar_lea.vmem %s0, %s134
      $region28: #{hrnet_w18_up4_forward.3} parent=23 // pred_fallthru
        _
    $region24: #{hrnet_w18_up4_forward.3} parent=5 // pred_fallthru
      _
    %p136 = scmp.le.s32.totalorder 1, %s9
    %p137 = scmp.lt.s32.totalorder %s9, 3
    %p138 = pnand %p136, %p137
    %p139 = pneg %p138
    // Predicated region
    $region29: #{hrnet_w18_up4_forward.3} parent=5 // pred_check
      _
    $region30: #{hrnet_w18_up4_forward.3} parent=5 // pred_check_branch
      %141 = sbr.rel (%p138) target = $region32
    $region31: #{hrnet_w18_up4_forward.3} parent=5 // pred_region
      %s142 = ssub.s32 %s9, 1
      %p143 = scmp.lt.s32.totalorder %s14, 1
      %s144 = scalar_select %p143, %s14, 1
      %s145 = smul.addr %s144, 32
      %s146 = smul.addr %s145, 4
      %s147 = scalar_lea.vmem %s0, %s146
      %p148 = pneg %p35
      %p149 = pneg %p32
      %p150 = pneg %p56
      %p151 = pneg %p53
      %p152 = pneg %p77
      %p153 = pneg %p74
      %p154 = pneg %p103
      %p155 = pneg %p100
      %p156 = scmp.lt.s32.totalorder %s14, 1
      %s157 = scalar_select %p156, %s14, 1
      %s158 = smul.addr %s157, 32
      %s159 = smul.addr %s158, 4
      %s160 = scalar_lea.vmem %s3, %s159
      %p161 = scmp.lt.s32.totalorder %s14, 1
      %s162 = scalar_select %p161, %s14, 1
      %s163 = smul.addr %s162, 32
      %s164 = smul.addr %s163, 4
      %s165 = scalar_lea.vmem %s0, %s164
      %p166 = scmp.lt.s32.totalorder %s14, 1
      %s167 = scalar_select %p166, %s14, 1
      %s168 = smul.addr %s167, 32
      %s169 = smul.addr %s168, 4
      %s170 = scalar_lea.vmem %s3, %s169
      %v172 = vld [vmem:[%s165] sm:$0xf]
      %v173 = vld [vmem:[%s165 + $0x4] sm:$0xf]
      %v174 = vld [vmem:[%s165 + $0x8] sm:$0xf]
      %v175 = vld [vmem:[%s165 + $0xc] sm:$0xf]
      %v176 = vld [vmem:[%s165 + $0x10] sm:$0xf]
      %v177 = vld [vmem:[%s165 + $0x14] sm:$0xf]
      %v178 = vld [vmem:[%s165 + $0x18] sm:$0xf]
      %v179 = vld [vmem:[%s165 + $0x1c] sm:$0xf]
      %v180 = vld [vmem:[%s165 + $0x20] sm:$0xf]
      %v181 = vld [vmem:[%s165 + $0x24] sm:$0xf]
      %v182 = vld [vmem:[%s165 + $0x28] sm:$0xf]
      %v183 = vld [vmem:[%s165 + $0x2c] sm:$0xf]
      %v184 = vld [vmem:[%s165 + $0x30] sm:$0xf]
      %v185 = vld [vmem:[%s165 + $0x34] sm:$0xf]
      %v186 = vld [vmem:[%s165 + $0x38] sm:$0xf]
      %v187 = vld [vmem:[%s165 + $0x3c] sm:$0xf]
      %v188 = vld [vmem:[%s165 + $0x40] sm:$0xf]
      %v189 = vld [vmem:[%s165 + $0x44] sm:$0xf]
      %v190 = vld [vmem:[%s165 + $0x48] sm:$0xf]
      %v191 = vld [vmem:[%s165 + $0x4c] sm:$0xf]
      %v192 = vld [vmem:[%s165 + $0x50] sm:$0xf]
      %v193 = vld [vmem:[%s165 + $0x54] sm:$0xf]
      %v194 = vld [vmem:[%s165 + $0x58] sm:$0xf]
      %v195 = vld [vmem:[%s165 + $0x5c] sm:$0xf]
      %v196 = vld [vmem:[%s165 + $0x60] sm:$0xf]
      %v197 = vld [vmem:[%s165 + $0x64] sm:$0xf]
      %v198 = vld [vmem:[%s165 + $0x68] sm:$0xf]
      %v199 = vld [vmem:[%s165 + $0x6c] sm:$0xf]
      %v200 = vld [vmem:[%s165 + $0x70] sm:$0xf]
      %v201 = vld [vmem:[%s165 + $0x74] sm:$0xf]
      %v202 = vld [vmem:[%s165 + $0x78] sm:$0xf]
      %v203 = vld [vmem:[%s165 + $0x7c] sm:$0xf]
      %v204 = vld [vmem:[%s1] sm:$0xf]
      %v205 = vld [vmem:[%s1 + $0x4] sm:$0xf]
      %v206 = vld [vmem:[%s1 + $0x8] sm:$0xf]
      %v207 = vld [vmem:[%s1 + $0xc] sm:$0xf]
      %v208 = vld [vmem:[%s2] sm:$0x1]
      %v210 = vperm.slane %v208, 0
      %v244 = vunpack.c.l.b16 %v172
      %v245 = vunpack.c.l.b16 %v173
      %v246 = vunpack.c.l.b16 %v174
      %v247 = vunpack.c.l.b16 %v175
      %v248 = vunpack.c.l.b16 %v176
      %v249 = vunpack.c.l.b16 %v177
      %v250 = vunpack.c.l.b16 %v178
      %v251 = vunpack.c.l.b16 %v179
      %v252 = vunpack.c.l.b16 %v180
      %v253 = vunpack.c.l.b16 %v181
      %v254 = vunpack.c.l.b16 %v182
      %v255 = vunpack.c.l.b16 %v183
      %v256 = vunpack.c.l.b16 %v184
      %v257 = vunpack.c.l.b16 %v185
      %v258 = vunpack.c.l.b16 %v186
      %v259 = vunpack.c.l.b16 %v187
      %v260 = vunpack.c.l.b16 %v188
      %v261 = vunpack.c.l.b16 %v189
      %v262 = vunpack.c.l.b16 %v190
      %v263 = vunpack.c.l.b16 %v191
      %v264 = vunpack.c.l.b16 %v192
      %v265 = vunpack.c.l.b16 %v193
      %v266 = vunpack.c.l.b16 %v194
      %v267 = vunpack.c.l.b16 %v195
      %v268 = vunpack.c.l.b16 %v196
      %v269 = vunpack.c.l.b16 %v197
      %v270 = vunpack.c.l.b16 %v198
      %v271 = vunpack.c.l.b16 %v199
      %v272 = vunpack.c.l.b16 %v200
      %v273 = vunpack.c.l.b16 %v201
      %v274 = vunpack.c.l.b16 %v202
      %v275 = vunpack.c.l.b16 %v203
      %v276 = vpack.c.b16 %v245, %v244
      %v277 = vpack.c.b16 %v247, %v246
      %v278 = vpack.c.b16 %v249, %v248
      %v279 = vpack.c.b16 %v251, %v250
      %v280 = vpack.c.b16 %v253, %v252
      %v281 = vpack.c.b16 %v255, %v254
      %v282 = vpack.c.b16 %v257, %v256
      %v283 = vpack.c.b16 %v259, %v258
      %v284 = vpack.c.b16 %v261, %v260
      %v285 = vpack.c.b16 %v263, %v262
      %v286 = vpack.c.b16 %v265, %v264
      %v287 = vpack.c.b16 %v267, %v266
      %v288 = vpack.c.b16 %v269, %v268
      %v289 = vpack.c.b16 %v271, %v270
      %v290 = vpack.c.b16 %v273, %v272
      %v291 = vpack.c.b16 %v275, %v274
      %v296 = vunpack.c.l.b16 %v204
      %v297 = vunpack.c.l.b16 %v205
      %v298 = vunpack.c.l.b16 %v206
      %v299 = vunpack.c.l.b16 %v207
      %v300 = vpack.c.b16 %v297, %v296
      %v301 = vpack.c.b16 %v299, %v298
      %vm304 = vcmask 261120
      %v306 = vsel %vm304, %v276, 0
      %v309 = vsel %vm304, %v277, 0
      %v312 = vsel %vm304, %v278, 0
      %v315 = vsel %vm304, %v279, 0
      %v318 = vsel %vm304, %v280, 0
      %v321 = vsel %vm304, %v281, 0
      %v324 = vsel %vm304, %v282, 0
      %v327 = vsel %vm304, %v283, 0
      %v330 = vsel %vm304, %v284, 0
      %v333 = vsel %vm304, %v285, 0
      %v336 = vsel %vm304, %v286, 0
      %v339 = vsel %vm304, %v287, 0
      %v342 = vsel %vm304, %v288, 0
      %v345 = vsel %vm304, %v289, 0
      %v348 = vsel %vm304, %v290, 0
      %v351 = vsel %vm304, %v291, 0
      %353 = vmatpush.bf16.msra.mxu0 0
      %354 = vmatpush.bf16.msra.mxu0 0
      %355 = vmatpush.bf16.msra.mxu0 0
      %356 = vmatpush.bf16.msra.mxu0 0
      %357 = vmatpush.bf16.msra.mxu0 0
      %358 = vmatpush.bf16.msra.mxu0 0
      %359 = vmatpush.bf16.msra.mxu0 %v301
      %360 = vmatpush.bf16.msra.mxu0 %v300
      %361 = vmatmul.bf16.gmra.mxu0 %v306
      %v362 = vpop.f32.mrf.mxu0
      %v363 = vadd.f32 %v210, %v362
      %v364 = vpop.f32.mrf.mxu0
      %v365 = vadd.f32 %v210, %v364
      %366 = vmatmul.bf16.gmra.mxu0 %v309
      %v367 = vpop.f32.mrf.mxu0
      %v368 = vadd.f32 %v210, %v367
      %v369 = vpop.f32.mrf.mxu0
      %v370 = vadd.f32 %v210, %v369
      %371 = vmatmul.bf16.gmra.mxu0 %v312
      %v372 = vpop.f32.mrf.mxu0
      %v373 = vadd.f32 %v210, %v372
      %v374 = vpop.f32.mrf.mxu0
      %v375 = vadd.f32 %v210, %v374
      %376 = vmatmul.bf16.gmra.mxu0 %v315
      %v377 = vpop.f32.mrf.mxu0
      %v378 = vadd.f32 %v210, %v377
      %v379 = vpop.f32.mrf.mxu0
      %v380 = vadd.f32 %v210, %v379
      %381 = vmatmul.bf16.gmra.mxu0 %v318
      %v382 = vpop.f32.mrf.mxu0
      %v383 = vadd.f32 %v210, %v382
      %v384 = vpop.f32.mrf.mxu0
      %v385 = vadd.f32 %v210, %v384
      %386 = vmatmul.bf16.gmra.mxu0 %v321
      %v387 = vpop.f32.mrf.mxu0
      %v388 = vadd.f32 %v210, %v387
      %v389 = vpop.f32.mrf.mxu0
      %v390 = vadd.f32 %v210, %v389
      %391 = vmatmul.bf16.gmra.mxu0 %v324
      %v392 = vpop.f32.mrf.mxu0
      %v393 = vadd.f32 %v210, %v392
      %v394 = vpop.f32.mrf.mxu0
      %v395 = vadd.f32 %v210, %v394
      %396 = vmatmul.bf16.gmra.mxu0 %v327
      %v397 = vpop.f32.mrf.mxu0
      %v398 = vadd.f32 %v210, %v397
      %v399 = vpop.f32.mrf.mxu0
      %v400 = vadd.f32 %v210, %v399
      %401 = vmatmul.bf16.gmra.mxu0 %v330
      %v402 = vpop.f32.mrf.mxu0
      %v403 = vadd.f32 %v210, %v402
      %v404 = vpop.f32.mrf.mxu0
      %v405 = vadd.f32 %v210, %v404
      %406 = vmatmul.bf16.gmra.mxu0 %v333
      %v407 = vpop.f32.mrf.mxu0
      %v408 = vadd.f32 %v210, %v407
      %v409 = vpop.f32.mrf.mxu0
      %v410 = vadd.f32 %v210, %v409
      %411 = vmatmul.bf16.gmra.mxu0 %v336
      %v412 = vpop.f32.mrf.mxu0
      %v413 = vadd.f32 %v210, %v412
      %v414 = vpop.f32.mrf.mxu0
      %v415 = vadd.f32 %v210, %v414
      %416 = vmatmul.bf16.gmra.mxu0 %v339
      %v417 = vpop.f32.mrf.mxu0
      %v418 = vadd.f32 %v210, %v417
      %v419 = vpop.f32.mrf.mxu0
      %v420 = vadd.f32 %v210, %v419
      %421 = vmatmul.bf16.gmra.mxu0 %v342
      %v422 = vpop.f32.mrf.mxu0
      %v423 = vadd.f32 %v210, %v422
      %v424 = vpop.f32.mrf.mxu0
      %v425 = vadd.f32 %v210, %v424
      %426 = vmatmul.bf16.gmra.mxu0 %v345
      %v427 = vpop.f32.mrf.mxu0
      %v428 = vadd.f32 %v210, %v427
      %v429 = vpop.f32.mrf.mxu0
      %v430 = vadd.f32 %v210, %v429
      %431 = vmatmul.bf16.gmra.mxu0 %v348
      %v432 = vpop.f32.mrf.mxu0
      %v433 = vadd.f32 %v210, %v432
      %v434 = vpop.f32.mrf.mxu0
      %v435 = vadd.f32 %v210, %v434
      %436 = vmatmul.bf16.gmra.mxu0 %v351
      %v437 = vpop.f32.mrf.mxu0
      %v438 = vadd.f32 %v210, %v437
      %v439 = vpop.f32.mrf.mxu0
      %v440 = vadd.f32 %v210, %v439
      %441 = vdwg.mxu0
      %v442 = vmax.f32 %v363, 0.0
      %v443 = vmax.f32 %v365, 0.0
      %v444 = vmax.f32 %v368, 0.0
      %v445 = vmax.f32 %v370, 0.0
      %v446 = vmax.f32 %v373, 0.0
      %v447 = vmax.f32 %v375, 0.0
      %v448 = vmax.f32 %v378, 0.0
      %v449 = vmax.f32 %v380, 0.0
      %v450 = vmax.f32 %v383, 0.0
      %v451 = vmax.f32 %v385, 0.0
      %v452 = vmax.f32 %v388, 0.0
      %v453 = vmax.f32 %v390, 0.0
      %v454 = vmax.f32 %v393, 0.0
      %v455 = vmax.f32 %v395, 0.0
      %v456 = vmax.f32 %v398, 0.0
      %v457 = vmax.f32 %v400, 0.0
      %v458 = vmax.f32 %v403, 0.0
      %v459 = vmax.f32 %v405, 0.0
      %v460 = vmax.f32 %v408, 0.0
      %v461 = vmax.f32 %v410, 0.0
      %v462 = vmax.f32 %v413, 0.0
      %v463 = vmax.f32 %v415, 0.0
      %v464 = vmax.f32 %v418, 0.0
      %v465 = vmax.f32 %v420, 0.0
      %v466 = vmax.f32 %v423, 0.0
      %v467 = vmax.f32 %v425, 0.0
      %v468 = vmax.f32 %v428, 0.0
      %v469 = vmax.f32 %v430, 0.0
      %v470 = vmax.f32 %v433, 0.0
      %v471 = vmax.f32 %v435, 0.0
      %v472 = vmax.f32 %v438, 0.0
      %v473 = vmax.f32 %v440, 0.0
      %v474 = vpack.c.bf16 %v442, %v442
      %v475 = vpack.c.bf16 %v443, %v443
      %v476 = vpack.c.bf16 %v444, %v444
      %v477 = vpack.c.bf16 %v445, %v445
      %v478 = vpack.c.bf16 %v446, %v446
      %v479 = vpack.c.bf16 %v447, %v447
      %v480 = vpack.c.bf16 %v448, %v448
      %v481 = vpack.c.bf16 %v449, %v449
      %v482 = vpack.c.bf16 %v450, %v450
      %v483 = vpack.c.bf16 %v451, %v451
      %v484 = vpack.c.bf16 %v452, %v452
      %v485 = vpack.c.bf16 %v453, %v453
      %v486 = vpack.c.bf16 %v454, %v454
      %v487 = vpack.c.bf16 %v455, %v455
      %v488 = vpack.c.bf16 %v456, %v456
      %v489 = vpack.c.bf16 %v457, %v457
      %v490 = vpack.c.bf16 %v458, %v458
      %v491 = vpack.c.bf16 %v459, %v459
      %v492 = vpack.c.bf16 %v460, %v460
      %v493 = vpack.c.bf16 %v461, %v461
      %v494 = vpack.c.bf16 %v462, %v462
      %v495 = vpack.c.bf16 %v463, %v463
      %v496 = vpack.c.bf16 %v464, %v464
      %v497 = vpack.c.bf16 %v465, %v465
      %v498 = vpack.c.bf16 %v466, %v466
      %v499 = vpack.c.bf16 %v467, %v467
      %v500 = vpack.c.bf16 %v468, %v468
      %v501 = vpack.c.bf16 %v469, %v469
      %v502 = vpack.c.bf16 %v470, %v470
      %v503 = vpack.c.bf16 %v471, %v471
      %v504 = vpack.c.bf16 %v472, %v472
      %v505 = vpack.c.bf16 %v473, %v473
      %506 = vst [vmem:[%s170] sm:$0xf] %v474
      %507 = vst [vmem:[%s170 + $0x4] sm:$0xf] %v475
      %508 = vst [vmem:[%s170 + $0x8] sm:$0xf] %v476
      %509 = vst [vmem:[%s170 + $0xc] sm:$0xf] %v477
      %510 = vst [vmem:[%s170 + $0x10] sm:$0xf] %v478
      %511 = vst [vmem:[%s170 + $0x14] sm:$0xf] %v479
      %512 = vst [vmem:[%s170 + $0x18] sm:$0xf] %v480
      %513 = vst [vmem:[%s170 + $0x1c] sm:$0xf] %v481
      %514 = vst [vmem:[%s170 + $0x20] sm:$0xf] %v482
      %515 = vst [vmem:[%s170 + $0x24] sm:$0xf] %v483
      %516 = vst [vmem:[%s170 + $0x28] sm:$0xf] %v484
      %517 = vst [vmem:[%s170 + $0x2c] sm:$0xf] %v485
      %518 = vst [vmem:[%s170 + $0x30] sm:$0xf] %v486
      %519 = vst [vmem:[%s170 + $0x34] sm:$0xf] %v487
      %520 = vst [vmem:[%s170 + $0x38] sm:$0xf] %v488
      %521 = vst [vmem:[%s170 + $0x3c] sm:$0xf] %v489
      %522 = vst [vmem:[%s170 + $0x40] sm:$0xf] %v490
      %523 = vst [vmem:[%s170 + $0x44] sm:$0xf] %v491
      %524 = vst [vmem:[%s170 + $0x48] sm:$0xf] %v492
      %525 = vst [vmem:[%s170 + $0x4c] sm:$0xf] %v493
      %526 = vst [vmem:[%s170 + $0x50] sm:$0xf] %v494
      %527 = vst [vmem:[%s170 + $0x54] sm:$0xf] %v495
      %528 = vst [vmem:[%s170 + $0x58] sm:$0xf] %v496
      %529 = vst [vmem:[%s170 + $0x5c] sm:$0xf] %v497
      %530 = vst [vmem:[%s170 + $0x60] sm:$0xf] %v498
      %531 = vst [vmem:[%s170 + $0x64] sm:$0xf] %v499
      %532 = vst [vmem:[%s170 + $0x68] sm:$0xf] %v500
      %533 = vst [vmem:[%s170 + $0x6c] sm:$0xf] %v501
      %534 = vst [vmem:[%s170 + $0x70] sm:$0xf] %v502
      %535 = vst [vmem:[%s170 + $0x74] sm:$0xf] %v503
      %536 = vst [vmem:[%s170 + $0x78] sm:$0xf] %v504
      %537 = vst [vmem:[%s170 + $0x7c] sm:$0xf] %v505
      %p538 = scmp.lt.s32.totalorder %s14, 1
      %s539 = scalar_select %p538, %s14, 1
      %s540 = smul.addr %s539, 32
      %s541 = smul.addr %s540, 4
      %s542 = scalar_lea.vmem %s3, %s541
      // Predicated region
      $region33: #{hrnet_w18_up4_forward.3} parent=31 // pred_check
        %p543 = pneg %p100
      $region34: #{hrnet_w18_up4_forward.3} parent=31 // pred_check_branch
        %545 = sbr.rel (%p543) target = $region36
      $region35: #{hrnet_w18_up4_forward.3} parent=31 // pred_region
        _
      $region36: #{hrnet_w18_up4_forward.3} parent=31 // pred_fallthru
        _
    $region32: #{hrnet_w18_up4_forward.3} parent=5 // pred_fallthru
      _
    %p546 = scmp.le.s32.totalorder 2, %s9
    // Predicated region
    $region37: #{hrnet_w18_up4_forward.3} parent=5 // pred_check
      %p547 = pneg %p546
    $region38: #{hrnet_w18_up4_forward.3} parent=5 // pred_check_branch
      %549 = sbr.rel (%p547) target = $region40
    $region39: #{hrnet_w18_up4_forward.3} parent=5 // pred_region
      %s550 = ssub.s32 %s9, 2
      // Predicated region
      $region41: #{hrnet_w18_up4_forward.3} parent=39 // pred_check
        %p551 = pneg %p106
      $region42: #{hrnet_w18_up4_forward.3} parent=39 // pred_check_branch
        %553 = sbr.rel (%p551) target = $region44
      $region43: #{hrnet_w18_up4_forward.3} parent=39 // pred_region
        %p554 = scmp.lt.s32.totalorder %s15, 1
        %s555 = scalar_select %p554, %s15, 1
        %s556 = smul.addr %s555, 32
        %s557 = smul.addr %s556, 4
        %s558 = scalar_lea.vmem %s3, %s557
      $region44: #{hrnet_w18_up4_forward.3} parent=39 // pred_fallthru
        _
    $region40: #{hrnet_w18_up4_forward.3} parent=5 // pred_fallthru
      _
  $region6: #{hrnet_w18_up4_forward.3} parent=0 // loop_footer
    %s13 = sadd.s32 1, %s9
  $region7: #{hrnet_w18_up4_forward.3} parent=0 // loop_footer_branch
    %8 = sbr.rel target = $region3
  $region8: #{hrnet_w18_up4_forward.3} parent=0 // loop_exit
    _

// kernel: hrnet_w18_up4_forward.5
$region0: #{hrnet_w18_up4_forward.5}
  #allocation0 [shape = 'u32[]', space=smem, size = 0x4, offset = 0x4, fixed_abs, tag = 'smem constant byte address 0x4 - core index']
  #allocation1 [shape = 'u32[72,128]{1,0:T(1,128)}', space=vmem, size = 0x9000, scoped, tag = 'internal scratch']
  #allocation2 [shape = 'bf16[11,16,128]{2,1,0:T(8,128)(2,1)}', space=vmem, size = 0xb000, scoped, tag = 'scratch operand']
  %s0 = inlined_call_operand.vmem [shape: bf16[2,64,128], index: 0, kind: input, shape index: {}]
  %s1 = inlined_call_operand.vmem [shape: bf16[128,128], index: 1, kind: input, shape index: {}]
  %s2 = inlined_call_operand.vmem [shape: f32[1,128], index: 2, kind: input, shape index: {}]
  %s3 = inlined_call_operand.vmem [shape: bf16[9,128,128], index: 3, kind: input, shape index: {}]
  %s4 = inlined_call_operand.vmem [shape: f32[1,128], index: 4, kind: input, shape index: {}]
  %s5 = inlined_call_operand.vmem [shape: f32[2,8,8,128], index: 5, kind: output, shape index: {}]
  %s6 = sld [smem:[#allocation0]]
  $region53: #{hrnet_w18_up4_forward.5} parent=0
    _
  %s8 = ssub.s32 1, %s6
  %s9 = scalar_select 0, %s8, %s6
  loop: start=0, step=1, limit=4
  $region2: #{hrnet_w18_up4_forward.5} parent=0 // loop_pre_header
    _
  $region3: #{hrnet_w18_up4_forward.5} parent=0 // loop_header
    %s11 = sphi 0, %s15
    %p12 = scmp.ge.s32.totalorder %s11, 4
    %s21 = sphi 0, %s23
    %s24 = sphi 0, %s21
    %s25 = sphi 0, %s24
    %s41 = sphi 0, %s25
    %s45 = sphi 0, %s45
    %s47 = sphi 0, %s45
    %s48 = sphi 0, %s47
    %s62 = sphi 0, %s48
    %s66 = sphi 0, %s66
    %s68 = sphi 0, %s66
    %s69 = sphi 0, %s68
    %s83 = sphi 0, %s69
    %s87 = sphi 0, %s87
    %s89 = sphi 0, %s87
    %s90 = sphi 0, %s89
    %s104 = sphi 0, %s90
    %s108 = sphi 0, %s108
    %s110 = sphi 0, %s108
    %s111 = sphi 0, %s110
    %s125 = sphi 0, %s111
    %s131 = sphi 0, %s133
    %s134 = sphi 0, %s131
    %s135 = sphi 0, %s134
    %s151 = sphi 0, %s135
  $region4: #{hrnet_w18_up4_forward.5} parent=0 // loop_header_branch
    %14 = sbr.rel (%p12) target = $region8
  $region5: #{hrnet_w18_up4_forward.5} parent=0 // loop_body
    %s16 = ssub.s32 %s11, 1
    %s17 = ssub.s32 %s11, 2
    %s18 = sadd.s32 %s11, 1
    %s19 = ssub.s32 %s11, %s18
    %p20 = scmp.eq.s32.totalorder %s19, 0
    %s22 = sadd.s32 %s21, 1
    %s23 = scalar_select %p20, %s21, %s22
    %p26 = pneg %p20
    %p27 = scmp.eq.s32.totalorder %s11, 1
    %p28 = por %p26, %p27
    %p29 = scmp.ne.s32.totalorder %s21, %s24
    %p30 = scmp.eq.s32.totalorder %s11, 0
    %p31 = por %p29, %p30
    %p32 = scmp.ne.s32.totalorder %s21, %s24
    %p33 = scmp.eq.s32.totalorder %s16, 1
    %p34 = por %p32, %p33
    %p35 = scmp.ne.s32.totalorder %s24, %s25
    %p36 = scmp.eq.s32.totalorder %s16, 0
    %p37 = por %p35, %p36
    %p38 = scmp.ne.s32.totalorder %s24, %s25
    %p39 = scmp.eq.s32.totalorder %s17, 1
    %p40 = por %p38, %p39
    %p42 = scmp.ne.s32.totalorder %s25, %s41
    %p43 = scmp.eq.s32.totalorder %s17, 0
    %p44 = por %p42, %p43
    %s46 = sadd.s32 %s45, 1
    %p49 = scmp.eq.s32.totalorder %s11, 1
    %p50 = scmp.ne.s32.totalorder %s45, %s47
    %p51 = scmp.eq.s32.totalorder %s11, 0
    %p52 = por %p50, %p51
    %p53 = scmp.ne.s32.totalorder %s45, %s47
    %p54 = scmp.eq.s32.totalorder %s16, 1
    %p55 = por %p53, %p54
    %p56 = scmp.ne.s32.totalorder %s47, %s48
    %p57 = scmp.eq.s32.totalorder %s16, 0
    %p58 = por %p56, %p57
    %p59 = scmp.ne.s32.totalorder %s47, %s48
    %p60 = scmp.eq.s32.totalorder %s17, 1
    %p61 = por %p59, %p60
    %p63 = scmp.ne.s32.totalorder %s48, %s62
    %p64 = scmp.eq.s32.totalorder %s17, 0
    %p65 = por %p63, %p64
    %s67 = sadd.s32 %s66, 1
    %p70 = scmp.eq.s32.totalorder %s11, 1
    %p71 = scmp.ne.s32.totalorder %s66, %s68
    %p72 = scmp.eq.s32.totalorder %s11, 0
    %p73 = por %p71, %p72
    %p74 = scmp.ne.s32.totalorder %s66, %s68
    %p75 = scmp.eq.s32.totalorder %s16, 1
    %p76 = por %p74, %p75
    %p77 = scmp.ne.s32.totalorder %s68, %s69
    %p78 = scmp.eq.s32.totalorder %s16, 0
    %p79 = por %p77, %p78
    %p80 = scmp.ne.s32.totalorder %s68, %s69
    %p81 = scmp.eq.s32.totalorder %s17, 1
    %p82 = por %p80, %p81
    %p84 = scmp.ne.s32.totalorder %s69, %s83
    %p85 = scmp.eq.s32.totalorder %s17, 0
    %p86 = por %p84, %p85
    %s88 = sadd.s32 %s87, 1
    %p91 = scmp.eq.s32.totalorder %s11, 1
    %p92 = scmp.ne.s32.totalorder %s87, %s89
    %p93 = scmp.eq.s32.totalorder %s11, 0
    %p94 = por %p92, %p93
    %p95 = scmp.ne.s32.totalorder %s87, %s89
    %p96 = scmp.eq.s32.totalorder %s16, 1
    %p97 = por %p95, %p96
    %p98 = scmp.ne.s32.totalorder %s89, %s90
    %p99 = scmp.eq.s32.totalorder %s16, 0
    %p100 = por %p98, %p99
    %p101 = scmp.ne.s32.totalorder %s89, %s90
    %p102 = scmp.eq.s32.totalorder %s17, 1
    %p103 = por %p101, %p102
    %p105 = scmp.ne.s32.totalorder %s90, %s104
    %p106 = scmp.eq.s32.totalorder %s17, 0
    %p107 = por %p105, %p106
    %s109 = sadd.s32 %s108, 1
    %p112 = scmp.eq.s32.totalorder %s11, 1
    %p113 = scmp.ne.s32.totalorder %s108, %s110
    %p114 = scmp.eq.s32.totalorder %s11, 0
    %p115 = por %p113, %p114
    %p116 = scmp.ne.s32.totalorder %s108, %s110
    %p117 = scmp.eq.s32.totalorder %s16, 1
    %p118 = por %p116, %p117
    %p119 = scmp.ne.s32.totalorder %s110, %s111
    %p120 = scmp.eq.s32.totalorder %s16, 0
    %p121 = por %p119, %p120
    %p122 = scmp.ne.s32.totalorder %s110, %s111
    %p123 = scmp.eq.s32.totalorder %s17, 1
    %p124 = por %p122, %p123
    %p126 = scmp.ne.s32.totalorder %s111, %s125
    %p127 = scmp.eq.s32.totalorder %s17, 0
    %p128 = por %p126, %p127
    %s129 = ssub.s32 %s11, %s18
    %p130 = scmp.eq.s32.totalorder %s129, 0
    %s132 = sadd.s32 %s131, 1
    %s133 = scalar_select %p130, %s131, %s132
    %p136 = pneg %p130
    %p137 = scmp.eq.s32.totalorder %s11, 1
    %p138 = por %p136, %p137
    %p139 = scmp.ne.s32.totalorder %s131, %s134
    %p140 = scmp.eq.s32.totalorder %s11, 0
    %p141 = por %p139, %p140
    %p142 = scmp.ne.s32.totalorder %s131, %s134
    %p143 = scmp.eq.s32.totalorder %s16, 1
    %p144 = por %p142, %p143
    %p145 = scmp.ne.s32.totalorder %s134, %s135
    %p146 = scmp.eq.s32.totalorder %s16, 0
    %p147 = por %p145, %p146
    %p148 = scmp.ne.s32.totalorder %s134, %s135
    %p149 = scmp.eq.s32.totalorder %s17, 1
    %p150 = por %p148, %p149
    %p152 = scmp.ne.s32.totalorder %s135, %s151
    %p153 = scmp.eq.s32.totalorder %s17, 0
    %p154 = por %p152, %p153
    %p155 = scmp.le.s32.totalorder 1, %s11
    %p156 = scmp.lt.s32.totalorder %s11, 3
    %p157 = pnand %p155, %p156
    %p158 = pneg %p157
    // Predicated region
    $region9: #{hrnet_w18_up4_forward.5} parent=5 // pred_check
      _
    $region10: #{hrnet_w18_up4_forward.5} parent=5 // pred_check_branch
      %160 = sbr.rel (%p157) target = $region12
    $region11: #{hrnet_w18_up4_forward.5} parent=5 // pred_region
      %s161 = ssub.s32 %s11, 1
      // Predicated region
      $region13: #{hrnet_w18_up4_forward.5} parent=11 // pred_check
        %p162 = pneg %p58
      $region14: #{hrnet_w18_up4_forward.5} parent=11 // pred_check_branch
        %164 = sbr.rel (%p162) target = $region16
      $region15: #{hrnet_w18_up4_forward.5} parent=11 // pred_region
        _
      $region16: #{hrnet_w18_up4_forward.5} parent=11 // pred_fallthru
        _
      // Predicated region
      $region17: #{hrnet_w18_up4_forward.5} parent=11 // pred_check
        %p165 = pneg %p79
      $region18: #{hrnet_w18_up4_forward.5} parent=11 // pred_check_branch
        %167 = sbr.rel (%p165) target = $region20
      $region19: #{hrnet_w18_up4_forward.5} parent=11 // pred_region
        _
      $region20: #{hrnet_w18_up4_forward.5} parent=11 // pred_fallthru
        _
      // Predicated region
      $region21: #{hrnet_w18_up4_forward.5} parent=11 // pred_check
        %p168 = pneg %p100
      $region22: #{hrnet_w18_up4_forward.5} parent=11 // pred_check_branch
        %170 = sbr.rel (%p168) target = $region24
      $region23: #{hrnet_w18_up4_forward.5} parent=11 // pred_region
        _
      $region24: #{hrnet_w18_up4_forward.5} parent=11 // pred_fallthru
        _
      // Predicated region
      $region25: #{hrnet_w18_up4_forward.5} parent=11 // pred_check
        %p171 = pneg %p121
      $region26: #{hrnet_w18_up4_forward.5} parent=11 // pred_check_branch
        %173 = sbr.rel (%p171) target = $region28
      $region27: #{hrnet_w18_up4_forward.5} parent=11 // pred_region
        _
      $region28: #{hrnet_w18_up4_forward.5} parent=11 // pred_fallthru
        _
    $region12: #{hrnet_w18_up4_forward.5} parent=5 // pred_fallthru
      _
    %p174 = scmp.lt.s32.totalorder %s11, 2
    // Predicated region
    $region29: #{hrnet_w18_up4_forward.5} parent=5 // pred_check
      %p175 = pneg %p174
    $region30: #{hrnet_w18_up4_forward.5} parent=5 // pred_check_branch
      %177 = sbr.rel (%p175) target = $region32
    $region31: #{hrnet_w18_up4_forward.5} parent=5 // pred_region
      // Predicated region
      $region33: #{hrnet_w18_up4_forward.5} parent=31 // pred_check
        %p178 = pneg %p31
      $region34: #{hrnet_w18_up4_forward.5} parent=31 // pred_check_branch
        %180 = sbr.rel (%p178) target = $region36
      $region35: #{hrnet_w18_up4_forward.5} parent=31 // pred_region
        %p181 = scmp.lt.s32.totalorder %s11, 1
        %s182 = scalar_select %p181, %s11, 1
        %s183 = smul.addr %s182, 8
        %s184 = smul.addr %s183, 4
        %s185 = scalar_lea.vmem %s0, %s184
      $region36: #{hrnet_w18_up4_forward.5} parent=31 // pred_fallthru
        _
    $region32: #{hrnet_w18_up4_forward.5} parent=5 // pred_fallthru
      _
    %p186 = scmp.le.s32.totalorder 1, %s11
    %p187 = scmp.lt.s32.totalorder %s11, 3
    %p188 = pnand %p186, %p187
    %p189 = pneg %p188
    // Predicated region
    $region37: #{hrnet_w18_up4_forward.5} parent=5 // pred_check
      _
    $region38: #{hrnet_w18_up4_forward.5} parent=5 // pred_check_branch
      %191 = sbr.rel (%p188) target = $region40
    $region39: #{hrnet_w18_up4_forward.5} parent=5 // pred_region
      %s192 = ssub.s32 %s11, 1
      %p193 = scmp.lt.s32.totalorder %s16, 1
      %s194 = scalar_select %p193, %s16, 1
      %s195 = smul.addr %s194, 8
      %s196 = smul.addr %s195, 4
      %s197 = scalar_lea.vmem %s0, %s196
      %p198 = pneg %p37
      %p199 = pneg %p34
      %p200 = pneg %p58
      %p201 = pneg %p55
      %p202 = pneg %p79
      %p203 = pneg %p76
      %p204 = pneg %p100
      %p205 = pneg %p97
      %p206 = pneg %p121
      %p207 = pneg %p118
      %p208 = pneg %p147
      %p209 = pneg %p144
      %p210 = scmp.lt.s32.totalorder %s16, 1
      %s211 = scalar_select %p210, %s16, 1
      %s212 = smul.addr %s211, 8
      %s213 = smul.addr %s212, 8
      %s214 = scalar_lea.vmem %s5, %s213
      %p215 = scmp.lt.s32.totalorder %s16, 1
      %s216 = scalar_select %p215, %s16, 1
      %s217 = smul.addr %s216, 8
      %s218 = smul.addr %s217, 4
      %s219 = scalar_lea.vmem %s0, %s218
      %p220 = scmp.lt.s32.totalorder %s16, 1
      %s221 = scalar_select %p220, %s16, 1
      %s222 = smul.addr %s221, 8
      %s223 = smul.addr %s222, 8
      %s224 = scalar_lea.vmem %s5, %s223
      %226 = vst [vmem:[#allocation2] sm:$0xf] 0
      %227 = vst [vmem:[#allocation2 + $0x4] sm:$0xf] 0
      %s228 = scalar_lea.vmem [#allocation2], 72
      %229 = vst [vmem:[%s228] sm:$0xf] 0
      %230 = vst [vmem:[%s228 + $0x4] sm:$0xf] 0
      %231 = vst [vmem:[%s228 + $0x8] sm:$0xf] 0
      %232 = vst [vmem:[%s228 + $0xc] sm:$0xf] 0
      %s233 = scalar_lea.vmem [#allocation2], 8
      %234 = vst [vmem:[%s233] sm:$0x1] 0
      %235 = vst [vmem:[%s233 + $0x8] sm:$0x1] 0
      %236 = vst [vmem:[%s233 + $0x10] sm:$0x1] 0
      %237 = vst [vmem:[%s233 + $0x18] sm:$0x1] 0
      %238 = vst [vmem:[%s233 + $0x20] sm:$0x1] 0
      %239 = vst [vmem:[%s233 + $0x28] sm:$0x1] 0
      %240 = vst [vmem:[%s233 + $0x30] sm:$0x1] 0
      %241 = vst [vmem:[%s233 + $0x38] sm:$0x1] 0
      %242 = vst [vmem:[%s233 + $0x4] sm:$0xe] 0
      %243 = vst [vmem:[%s233 + $0xc] sm:$0xe] 0
      %244 = vst [vmem:[%s233 + $0x14] sm:$0xe] 0
      %245 = vst [vmem:[%s233 + $0x1c] sm:$0xe] 0
      %246 = vst [vmem:[%s233 + $0x24] sm:$0xe] 0
      %247 = vst [vmem:[%s233 + $0x2c] sm:$0xe] 0
      %248 = vst [vmem:[%s233 + $0x34] sm:$0xe] 0
      %249 = vst [vmem:[%s233 + $0x3c] sm:$0xe] 0
      %v250 = vld [vmem:[%s219] sm:$0xf]
      %v251 = vld [vmem:[%s219 + $0x4] sm:$0xf]
      %v252 = vld [vmem:[%s219 + $0x8] sm:$0xf]
      %v253 = vld [vmem:[%s219 + $0xc] sm:$0xf]
      %v254 = vld [vmem:[%s219 + $0x10] sm:$0xf]
      %v255 = vld [vmem:[%s219 + $0x14] sm:$0xf]
      %v256 = vld [vmem:[%s219 + $0x18] sm:$0xf]
      %v257 = vld [vmem:[%s219 + $0x1c] sm:$0xf]
      %v258 = vld [vmem:[%s1] sm:$0xf]
      %v259 = vld [vmem:[%s1 + $0x4] sm:$0xf]
      %v260 = vld [vmem:[%s1 + $0x8] sm:$0xf]
      %v261 = vld [vmem:[%s1 + $0xc] sm:$0xf]
      %v262 = vld [vmem:[%s1 + $0x10] sm:$0xf]
      %v263 = vld [vmem:[%s1 + $0x14] sm:$0xf]
      %v264 = vld [vmem:[%s1 + $0x18] sm:$0xf]
      %v265 = vld [vmem:[%s1 + $0x1c] sm:$0xf]
      %v266 = vld [vmem:[%s1 + $0x20] sm:$0xf]
      %v267 = vld [vmem:[%s1 + $0x24] sm:$0xf]
      %v268 = vld [vmem:[%s1 + $0x28] sm:$0xf]
      %v269 = vld [vmem:[%s1 + $0x2c] sm:$0xf]
      %v270 = vld [vmem:[%s1 + $0x30] sm:$0xf]
      %v271 = vld [vmem:[%s1 + $0x34] sm:$0xf]
      %v272 = vld [vmem:[%s1 + $0x38] sm:$0xf]
      %v273 = vld [vmem:[%s1 + $0x3c] sm:$0xf]
      %v274 = vld [vmem:[%s2] sm:$0x1]
      %v276 = vperm.slane %v274, 0
      %v286 = vunpack.c.l.b16 %v250
      %v287 = vunpack.c.l.b16 %v251
      %v288 = vunpack.c.l.b16 %v252
      %v289 = vunpack.c.l.b16 %v253
      %v290 = vunpack.c.l.b16 %v254
      %v291 = vunpack.c.l.b16 %v255
      %v292 = vunpack.c.l.b16 %v256
      %v293 = vunpack.c.l.b16 %v257
      %v294 = vpack.c.b16 %v287, %v286
      %v295 = vpack.c.b16 %v289, %v288
      %v296 = vpack.c.b16 %v291, %v290
      %v297 = vpack.c.b16 %v293, %v292
      %v318 = vunpack.c.l.b16 %v258
      %v319 = vunpack.c.l.b16 %v259
      %v320 = vunpack.c.l.b16 %v260
      %v321 = vunpack.c.l.b16 %v261
      %v322 = vunpack.c.l.b16 %v262
      %v323 = vunpack.c.l.b16 %v263
      %v324 = vunpack.c.l.b16 %v264
      %v325 = vunpack.c.l.b16 %v265
      %v326 = vunpack.c.l.b16 %v266
      %v327 = vunpack.c.l.b16 %v267
      %v328 = vunpack.c.l.b16 %v268
      %v329 = vunpack.c.l.b16 %v269
      %v330 = vunpack.c.l.b16 %v270
      %v331 = vunpack.c.l.b16 %v271
      %v332 = vunpack.c.l.b16 %v272
      %v333 = vunpack.c.l.b16 %v273
      %v334 = vpack.c.b16 %v319, %v318
      %v335 = vpack.c.b16 %v321, %v320
      %v336 = vpack.c.b16 %v323, %v322
      %v337 = vpack.c.b16 %v325, %v324
      %v338 = vpack.c.b16 %v327, %v326
      %v339 = vpack.c.b16 %v329, %v328
      %v340 = vpack.c.b16 %v331, %v330
      %v341 = vpack.c.b16 %v333, %v332
      %350 = vmatpush.bf16.msra.mxu0 %v341
      %351 = vmatpush.bf16.msra.mxu0 %v340
      %352 = vmatpush.bf16.msra.mxu0 %v339
      %353 = vmatpush.bf16.msra.mxu0 %v338
      %354 = vmatpush.bf16.msra.mxu0 %v337
      %355 = vmatpush.bf16.msra.mxu0 %v336
      %356 = vmatpush.bf16.msra.mxu0 %v335
      %357 = vmatpush.bf16.msra.mxu0 %v334
      %358 = vmatmul.bf16.gmra.mxu0 %v294
      %v359 = vpop.f32.mrf.mxu0
      %v360 = vadd.f32 %v276, %v359
      %v361 = vpop.f32.mrf.mxu0
      %v362 = vadd.f32 %v276, %v361
      %363 = vmatmul.bf16.gmra.mxu0 %v295
      %v364 = vpop.f32.mrf.mxu0
      %v365 = vadd.f32 %v276, %v364
      %v366 = vpop.f32.mrf.mxu0
      %v367 = vadd.f32 %v276, %v366
      %368 = vmatmul.bf16.gmra.mxu0 %v296
      %v369 = vpop.f32.mrf.mxu0
      %v370 = vadd.f32 %v276, %v369
      %v371 = vpop.f32.mrf.mxu0
      %v372 = vadd.f32 %v276, %v371
      %373 = vmatmul.bf16.gmra.mxu0 %v297
      %v374 = vpop.f32.mrf.mxu0
      %v375 = vadd.f32 %v276, %v374
      %v376 = vpop.f32.mrf.mxu0
      %v377 = vadd.f32 %v276, %v376
      %378 = vdwg.mxu0
      %v379 = vmax.f32 %v360, 0.0
      %v380 = vmax.f32 %v362, 0.0
      %v381 = vmax.f32 %v365, 0.0
      %v382 = vmax.f32 %v367, 0.0
      %v383 = vmax.f32 %v370, 0.0
      %v384 = vmax.f32 %v372, 0.0
      %v385 = vmax.f32 %v375, 0.0
      %v386 = vmax.f32 %v377, 0.0
      %v387 = vpack.c.bf16 %v379, %v379
      %v388 = vpack.c.bf16 %v380, %v380
      %v389 = vpack.c.bf16 %v381, %v381
      %v390 = vpack.c.bf16 %v382, %v382
      %v391 = vpack.c.bf16 %v383, %v383
      %v392 = vpack.c.bf16 %v384, %v384
      %v393 = vpack.c.bf16 %v385, %v385
      %v394 = vpack.c.bf16 %v386, %v386
      %v403 = vrot.slane %v387, 7
      %v404 = vrot.slane %v403, 4
      %v405 = vrot.slane %v388, 7
      %v406 = vrot.slane %v405, 4
      %v407 = vrot.slane %v389, 7
      %v408 = vrot.slane %v407, 4
      %v409 = vrot.slane %v390, 7
      %v410 = vrot.slane %v409, 4
      %v411 = vrot.slane %v391, 7
      %v412 = vrot.slane %v411, 4
      %v413 = vrot.slane %v392, 7
      %v414 = vrot.slane %v413, 4
      %v415 = vrot.slane %v393, 7
      %v416 = vrot.slane %v415, 4
      %v417 = vrot.slane %v394, 7
      %v418 = vrot.slane %v417, 4
      %435 = vst [vmem:[%s233] sm:$0xe] %v403
      %436 = vst [vmem:[%s233 + $0x4] sm:$0x1] %v404
      %437 = vst [vmem:[%s233 + $0x8] sm:$0xe] %v405
      %438 = vst [vmem:[%s233 + $0xc] sm:$0x1] %v406
      %439 = vst [vmem:[%s233 + $0x10] sm:$0xe] %v407
      %440 = vst [vmem:[%s233 + $0x14] sm:$0x1] %v408
      %441 = vst [vmem:[%s233 + $0x18] sm:$0xe] %v409
      %442 = vst [vmem:[%s233 + $0x1c] sm:$0x1] %v410
      %443 = vst [vmem:[%s233 + $0x20] sm:$0xe] %v411
      %444 = vst [vmem:[%s233 + $0x24] sm:$0x1] %v412
      %445 = vst [vmem:[%s233 + $0x28] sm:$0xe] %v413
      %446 = vst [vmem:[%s233 + $0x2c] sm:$0x1] %v414
      %447 = vst [vmem:[%s233 + $0x30] sm:$0xe] %v415
      %448 = vst [vmem:[%s233 + $0x34] sm:$0x1] %v416
      %449 = vst [vmem:[%s233 + $0x38] sm:$0xe] %v417
      %450 = vst [vmem:[%s233 + $0x3c] sm:$0x1] %v418
      %v451 = vld [vmem:[#allocation2] sm:$0xf]
      %v452 = vld [vmem:[#allocation2 + $0x4] sm:$0xf]
      %v453 = vld [vmem:[#allocation2 + $0x8] sm:$0xf]
      %v454 = vld [vmem:[#allocation2 + $0xc] sm:$0xf]
      %v455 = vld [vmem:[#allocation2 + $0x10] sm:$0xf]
      %v456 = vld [vmem:[#allocation2 + $0x14] sm:$0xf]
      %v457 = vld [vmem:[#allocation2 + $0x18] sm:$0xf]
      %v458 = vld [vmem:[#allocation2 + $0x1c] sm:$0xf]
      %v459 = vld [vmem:[#allocation2 + $0x20] sm:$0xf]
      %v460 = vld [vmem:[#allocation2 + $0x24] sm:$0xf]
      %v461 = vld [vmem:[#allocation2 + $0x28] sm:$0xf]
      %v462 = vld [vmem:[#allocation2 + $0x2c] sm:$0xf]
      %v463 = vld [vmem:[#allocation2 + $0x30] sm:$0xf]
      %v464 = vld [vmem:[#allocation2 + $0x34] sm:$0xf]
      %v465 = vld [vmem:[#allocation2 + $0x38] sm:$0xf]
      %v466 = vld [vmem:[#allocation2 + $0x3c] sm:$0xf]
      %v467 = vld [vmem:[#allocation2 + $0x40] sm:$0xf]
      %v468 = vld [vmem:[#allocation2 + $0x44] sm:$0xf]
      %v469 = vld [vmem:[#allocation2 + $0x48] sm:$0xf]
      %v470 = vld [vmem:[#allocation2 + $0x4c] sm:$0xf]
      %v471 = vld [vmem:[#allocation2 + $0x50] sm:$0xf]
      %v472 = vld [vmem:[%s3] sm:$0xf]
      %v473 = vld [vmem:[%s3 + $0x4] sm:$0xf]
      %v474 = vld [vmem:[%s3 + $0x8] sm:$0xf]
      %v475 = vld [vmem:[%s3 + $0xc] sm:$0xf]
      %v476 = vld [vmem:[%s3 + $0x10] sm:$0xf]
      %v477 = vld [vmem:[%s3 + $0x14] sm:$0xf]
      %v478 = vld [vmem:[%s3 + $0x18] sm:$0xf]
      %v479 = vld [vmem:[%s3 + $0x1c] sm:$0xf]
      %v480 = vld [vmem:[%s3 + $0x20] sm:$0xf]
      %v481 = vld [vmem:[%s3 + $0x24] sm:$0xf]
      %v482 = vld [vmem:[%s3 + $0x28] sm:$0xf]
      %v483 = vld [vmem:[%s3 + $0x2c] sm:$0xf]
      %v484 = vld [vmem:[%s3 + $0x30] sm:$0xf]
      %v485 = vld [vmem:[%s3 + $0x34] sm:$0xf]
      %v486 = vld [vmem:[%s3 + $0x38] sm:$0xf]
      %v487 = vld [vmem:[%s3 + $0x3c] sm:$0xf]
      %s488 = scalar_lea.vmem %s3, 64
      %v489 = vld [vmem:[%s488] sm:$0xf]
      %v490 = vld [vmem:[%s488 + $0x4] sm:$0xf]
      %v491 = vld [vmem:[%s488 + $0x8] sm:$0xf]
      %v492 = vld [vmem:[%s488 + $0xc] sm:$0xf]
      %v493 = vld [vmem:[%s488 + $0x10] sm:$0xf]
      %v494 = vld [vmem:[%s488 + $0x14] sm:$0xf]
      %v495 = vld [vmem:[%s488 + $0x18] sm:$0xf]
      %v496 = vld [vmem:[%s488 + $0x1c] sm:$0xf]
      %v497 = vld [vmem:[%s488 + $0x20] sm:$0xf]
      %v498 = vld [vmem:[%s488 + $0x24] sm:$0xf]
      %v499 = vld [vmem:[%s488 + $0x28] sm:$0xf]
      %v500 = vld [vmem:[%s488 + $0x2c] sm:$0xf]
      %v501 = vld [vmem:[%s488 + $0x30] sm:$0xf]
      %v502 = vld [vmem:[%s488 + $0x34] sm:$0xf]
      %v503 = vld [vmem:[%s488 + $0x38] sm:$0xf]
      %v504 = vld [vmem:[%s488 + $0x3c] sm:$0xf]
      %v522 = vunpack.c.l.b16 %v451
      %v523 = vunpack.c.l.b16 %v452
      %v524 = vunpack.c.l.b16 %v453
      %v525 = vunpack.c.l.b16 %v454
      %v526 = vunpack.c.l.b16 %v455
      %v527 = vunpack.c.l.b16 %v456
      %v528 = vunpack.c.l.b16 %v457
      %v529 = vunpack.c.l.b16 %v458
      %v530 = vunpack.c.l.b16 %v459
      %v531 = vunpack.c.l.b16 %v460
      %v532 = vunpack.c.l.b16 %v461
      %v533 = vunpack.c.l.b16 %v462
      %v534 = vunpack.c.l.b16 %v463
      %v535 = vunpack.c.l.b16 %v464
      %v536 = vunpack.c.l.b16 %v465
      %v537 = vunpack.c.l.b16 %v466
      %v538 = vunpack.c.l.b16 %v467
      %v539 = vpack.c.b16 %v523, %v522
      %v540 = vpack.c.b16 %v525, %v524
      %v541 = vpack.c.b16 %v527, %v526
      %v542 = vpack.c.b16 %v529, %v528
      %v543 = vpack.c.b16 %v531, %v530
      %v544 = vpack.c.b16 %v533, %v532
      %v545 = vpack.c.b16 %v535, %v534
      %v546 = vpack.c.b16 %v537, %v536
      %v547 = vpack.c.b16 %v538, %v538
      %vm548 = vcmask 1046528
      %v549 = vrot.slane %v539, 1
      %v550 = vrot.slane %v540, 1
      %v551 = vsel %vm548, %v549, %v550
      %v552 = vrot.slane %v541, 1
      %v553 = vsel %vm548, %v550, %v552
      %v554 = vrot.slane %v542, 1
      %v555 = vsel %vm548, %v552, %v554
      %v556 = vrot.slane %v543, 1
      %v557 = vsel %vm548, %v554, %v556
      %v558 = vrot.slane %v544, 1
      %v559 = vsel %vm548, %v556, %v558
      %v560 = vrot.slane %v545, 1
      %v561 = vsel %vm548, %v558, %v560
      %v562 = vrot.slane %v546, 1
      %v563 = vsel %vm548, %v560, %v562
      %v564 = vrot.slane %v547, 1
      %v565 = vsel %vm548, %v562, %v564
      %v590 = vunpack.c.l.b16 %v489
      %v591 = vunpack.c.l.b16 %v490
      %v592 = vunpack.c.l.b16 %v491
      %v593 = vunpack.c.l.b16 %v492
      %v594 = vunpack.c.l.b16 %v493
      %v595 = vunpack.c.l.b16 %v494
      %v596 = vunpack.c.l.b16 %v495
      %v597 = vunpack.c.l.b16 %v496
      %v598 = vunpack.c.l.b16 %v497
      %v599 = vunpack.c.l.b16 %v498
      %v600 = vunpack.c.l.b16 %v499
      %v601 = vunpack.c.l.b16 %v500
      %v602 = vunpack.c.l.b16 %v501
      %v603 = vunpack.c.l.b16 %v502
      %v604 = vunpack.c.l.b16 %v503
      %v605 = vunpack.c.l.b16 %v504
      %v606 = vpack.c.b16 %v591, %v590
      %v607 = vpack.c.b16 %v593, %v592
      %v608 = vpack.c.b16 %v595, %v594
      %v609 = vpack.c.b16 %v597, %v596
      %v610 = vpack.c.b16 %v599, %v598
      %v611 = vpack.c.b16 %v601, %v600
      %v612 = vpack.c.b16 %v603, %v602
      %v613 = vpack.c.b16 %v605, %v604
      %622 = vmatpush.bf16.msra.mxu0 %v613
      %623 = vmatpush.bf16.msra.mxu0 %v612
      %624 = vmatpush.bf16.msra.mxu0 %v611
      %625 = vmatpush.bf16.msra.mxu0 %v610
      %626 = vmatpush.bf16.msra.mxu0 %v609
      %627 = vmatpush.bf16.msra.mxu0 %v608
      %628 = vmatpush.bf16.msra.mxu0 %v607
      %629 = vmatpush.bf16.msra.mxu0 %v606
      %630 = vmatmul.bf16.gmra.mxu0 %v551
      %v631 = vpop.f32.mrf.mxu0
      %v632 = vadd.f32 0.0, %v631
      %v633 = vpop.f32.mrf.mxu0
      %634 = vmatmul.bf16.gmra.mxu0 %v553
      %v635 = vpop.f32.mrf.mxu0
      %v636 = vadd.f32 0.0, %v635
      %v637 = vpop.f32.mrf.mxu0
      %638 = vmatmul.bf16.gmra.mxu0 %v555
      %v639 = vpop.f32.mrf.mxu0
      %v640 = vadd.f32 0.0, %v639
      %v641 = vpop.f32.mrf.mxu0
      %642 = vmatmul.bf16.gmra.mxu0 %v557
      %v643 = vpop.f32.mrf.mxu0
      %v644 = vadd.f32 0.0, %v643
      %v645 = vpop.f32.mrf.mxu0
      %646 = vmatmul.bf16.gmra.mxu0 %v559
      %v647 = vpop.f32.mrf.mxu0
      %v648 = vadd.f32 0.0, %v647
      %v649 = vpop.f32.mrf.mxu0
      %650 = vmatmul.bf16.gmra.mxu0 %v561
      %v651 = vpop.f32.mrf.mxu0
      %v652 = vadd.f32 0.0, %v651
      %v653 = vpop.f32.mrf.mxu0
      %654 = vmatmul.bf16.gmra.mxu0 %v563
      %v655 = vpop.f32.mrf.mxu0
      %v656 = vadd.f32 0.0, %v655
      %v657 = vpop.f32.mrf.mxu0
      %658 = vmatmul.bf16.gmra.mxu0 %v565
      %v659 = vpop.f32.mrf.mxu0
      %v660 = vadd.f32 0.0, %v659
      %v661 = vpop.f32.mrf.mxu0
      %662 = vdwg.mxu0
      %vm663 = vsmask.f32 7424
      %v665 = vshrl.u32 %v539, 16
      %v667 = vshll.u32 %v539, 16
      %v669 = vrot.slane %v667, 1
      %v670 = vor.u32 %v665, %v669
      %v672 = vshll.u32 %v540, 16
      %v674 = vrot.slane %v672, 1
      %v675 = vsel %vm663, %v670, %v674
      %v676 = vshrl.u32 %v540, 16
      %v678 = vor.u32 %v676, %v674
      %v680 = vshll.u32 %v541, 16
      %v682 = vrot.slane %v680, 1
      %v683 = vsel %vm663, %v678, %v682
      %v684 = vshrl.u32 %v541, 16
      %v686 = vor.u32 %v684, %v682
      %v688 = vshll.u32 %v542, 16
      %v690 = vrot.slane %v688, 1
      %v691 = vsel %vm663, %v686, %v690
      %v692 = vshrl.u32 %v542, 16
      %v694 = vor.u32 %v692, %v690
      %v696 = vshll.u32 %v543, 16
      %v698 = vrot.slane %v696, 1
      %v699 = vsel %vm663, %v694, %v698
      %v700 = vshrl.u32 %v543, 16
      %v702 = vor.u32 %v700, %v698
      %v704 = vshll.u32 %v544, 16
      %v706 = vrot.slane %v704, 1
      %v707 = vsel %vm663, %v702, %v706
      %v708 = vshrl.u32 %v544, 16
      %v710 = vor.u32 %v708, %v706
      %v712 = vshll.u32 %v545, 16
      %v714 = vrot.slane %v712, 1
      %v715 = vsel %vm663, %v710, %v714
      %v716 = vshrl.u32 %v545, 16
      %v718 = vor.u32 %v716, %v714
      %v720 = vshll.u32 %v546, 16
      %v722 = vrot.slane %v720, 1
      %v723 = vsel %vm663, %v718, %v722
      %v724 = vshrl.u32 %v546, 16
      %v726 = vor.u32 %v724, %v722
      %v728 = vshll.u32 %v547, 16
      %v730 = vrot.slane %v728, 1
      %v731 = vsel %vm663, %v726, %v730
      %v756 = vunpack.c.l.b16 %v472
      %v757 = vunpack.c.l.b16 %v473
      %v758 = vunpack.c.l.b16 %v474
      %v759 = vunpack.c.l.b16 %v475
      %v760 = vunpack.c.l.b16 %v476
      %v761 = vunpack.c.l.b16 %v477
      %v762 = vunpack.c.l.b16 %v478
      %v763 = vunpack.c.l.b16 %v479
      %v764 = vunpack.c.l.b16 %v480
      %v765 = vunpack.c.l.b16 %v481
      %v766 = vunpack.c.l.b16 %v482
      %v767 = vunpack.c.l.b16 %v483
      %v768 = vunpack.c.l.b16 %v484
      %v769 = vunpack.c.l.b16 %v485
      %v770 = vunpack.c.l.b16 %v486
      %v771 = vunpack.c.l.b16 %v487
      %v772 = vpack.c.b16 %v757, %v756
      %v773 = vpack.c.b16 %v759, %v758
      %v774 = vpack.c.b16 %v761, %v760
      %v775 = vpack.c.b16 %v763, %v762
      %v776 = vpack.c.b16 %v765, %v764
      %v777 = vpack.c.b16 %v767, %v766
      %v778 = vpack.c.b16 %v769, %v768
      %v779 = vpack.c.b16 %v771, %v770
      %788 = vmatpush.bf16.msra.mxu0 %v779
      %789 = vmatpush.bf16.msra.mxu0 %v778
      %790 = vmatpush.bf16.msra.mxu0 %v777
      %791 = vmatpush.bf16.msra.mxu0 %v776
      %792 = vmatpush.bf16.msra.mxu0 %v775
      %793 = vmatpush.bf16.msra.mxu0 %v774
      %794 = vmatpush.bf16.msra.mxu0 %v773
      %795 = vmatpush.bf16.msra.mxu0 %v772
      %796 = vmatmul.bf16.gmra.mxu0 %v675
      %v797 = vpop.f32.mrf.mxu0
      %v798 = vadd.f32 %v632, %v797
      %v799 = vpop.f32.mrf.mxu0
      %800 = vmatmul.bf16.gmra.mxu0 %v683
      %v801 = vpop.f32.mrf.mxu0
      %v802 = vadd.f32 %v636, %v801
      %v803 = vpop.f32.mrf.mxu0
      %804 = vmatmul.bf16.gmra.mxu0 %v691
      %v805 = vpop.f32.mrf.mxu0
      %v806 = vadd.f32 %v640, %v805
      %v807 = vpop.f32.mrf.mxu0
      %808 = vmatmul.bf16.gmra.mxu0 %v699
      %v809 = vpop.f32.mrf.mxu0
      %v810 = vadd.f32 %v644, %v809
      %v811 = vpop.f32.mrf.mxu0
      %812 = vmatmul.bf16.gmra.mxu0 %v707
      %v813 = vpop.f32.mrf.mxu0
      %v814 = vadd.f32 %v648, %v813
      %v815 = vpop.f32.mrf.mxu0
      %816 = vmatmul.bf16.gmra.mxu0 %v715
      %v817 = vpop.f32.mrf.mxu0
      %v818 = vadd.f32 %v652, %v817
      %v819 = vpop.f32.mrf.mxu0
      %820 = vmatmul.bf16.gmra.mxu0 %v723
      %v821 = vpop.f32.mrf.mxu0
      %v822 = vadd.f32 %v656, %v821
      %v823 = vpop.f32.mrf.mxu0
      %824 = vmatmul.bf16.gmra.mxu0 %v731
      %v825 = vpop.f32.mrf.mxu0
      %v826 = vadd.f32 %v660, %v825
      %v827 = vpop.f32.mrf.mxu0
      %828 = vdwg.mxu0
      %s829 = scalar_lea.vmem %s3, 128
      %v830 = vld [vmem:[%s829] sm:$0xf]
      %v831 = vld [vmem:[%s829 + $0x4] sm:$0xf]
      %v832 = vld [vmem:[%s829 + $0x8] sm:$0xf]
      %v833 = vld [vmem:[%s829 + $0xc] sm:$0xf]
      %v834 = vld [vmem:[%s829 + $0x10] sm:$0xf]
      %v835 = vld [vmem:[%s829 + $0x14] sm:$0xf]
      %v836 = vld [vmem:[%s829 + $0x18] sm:$0xf]
      %v837 = vld [vmem:[%s829 + $0x1c] sm:$0xf]
      %v838 = vld [vmem:[%s829 + $0x20] sm:$0xf]
      %v839 = vld [vmem:[%s829 + $0x24] sm:$0xf]
      %v840 = vld [vmem:[%s829 + $0x28] sm:$0xf]
      %v841 = vld [vmem:[%s829 + $0x2c] sm:$0xf]
      %v842 = vld [vmem:[%s829 + $0x30] sm:$0xf]
      %v843 = vld [vmem:[%s829 + $0x34] sm:$0xf]
      %v844 = vld [vmem:[%s829 + $0x38] sm:$0xf]
      %v845 = vld [vmem:[%s829 + $0x3c] sm:$0xf]
      %vm846 = vsmask.f32 6400
      %v847 = vrot.slane %v665, 1
      %v848 = vrot.slane %v667, 2
      %v849 = vor.u32 %v847, %v848
      %v850 = vrot.slane %v676, 1
      %v851 = vrot.slane %v672, 2
      %v852 = vor.u32 %v850, %v851
      %v853 = vsel %vm846, %v849, %v852
      %v854 = vrot.slane %v684, 1
      %v855 = vrot.slane %v680, 2
      %v856 = vor.u32 %v854, %v855
      %v857 = vsel %vm846, %v852, %v856
      %v858 = vrot.slane %v692, 1
      %v859 = vrot.slane %v688, 2
      %v860 = vor.u32 %v858, %v859
      %v861 = vsel %vm846, %v856, %v860
      %v862 = vrot.slane %v700, 1
      %v863 = vrot.slane %v696, 2
      %v864 = vor.u32 %v862, %v863
      %v865 = vsel %vm846, %v860, %v864
      %v866 = vrot.slane %v708, 1
      %v867 = vrot.slane %v704, 2
      %v868 = vor.u32 %v866, %v867
      %v869 = vsel %vm846, %v864, %v868
      %v870 = vrot.slane %v716, 1
      %v871 = vrot.slane %v712, 2
      %v872 = vor.u32 %v870, %v871
      %v873 = vsel %vm846, %v868, %v872
      %v874 = vrot.slane %v724, 1
      %v875 = vrot.slane %v720, 2
      %v876 = vor.u32 %v874, %v875
      %v877 = vsel %vm846, %v872, %v876
      %v878 = vshrl.u32 %v547, 16
      %v880 = vrot.slane %v878, 1
      %v881 = vrot.slane %v728, 2
      %v882 = vor.u32 %v880, %v881
      %v883 = vsel %vm846, %v876, %v882
      %v908 = vunpack.c.l.b16 %v830
      %v909 = vunpack.c.l.b16 %v831
      %v910 = vunpack.c.l.b16 %v832
      %v911 = vunpack.c.l.b16 %v833
      %v912 = vunpack.c.l.b16 %v834
      %v913 = vunpack.c.l.b16 %v835
      %v914 = vunpack.c.l.b16 %v836
      %v915 = vunpack.c.l.b16 %v837
      %v916 = vunpack.c.l.b16 %v838
      %v917 = vunpack.c.l.b16 %v839
      %v918 = vunpack.c.l.b16 %v840
      %v919 = vunpack.c.l.b16 %v841
      %v920 = vunpack.c.l.b16 %v842
      %v921 = vunpack.c.l.b16 %v843
      %v922 = vunpack.c.l.b16 %v844
      %v923 = vunpack.c.l.b16 %v845
      %v924 = vpack.c.b16 %v909, %v908
      %v925 = vpack.c.b16 %v911, %v910
      %v926 = vpack.c.b16 %v913, %v912
      %v927 = vpack.c.b16 %v915, %v914
      %v928 = vpack.c.b16 %v917, %v916
      %v929 = vpack.c.b16 %v919, %v918
      %v930 = vpack.c.b16 %v921, %v920
      %v931 = vpack.c.b16 %v923, %v922
      %940 = vmatpush.bf16.msra.mxu0 %v931
      %941 = vmatpush.bf16.msra.mxu0 %v930
      %942 = vmatpush.bf16.msra.mxu0 %v929
      %943 = vmatpush.bf16.msra.mxu0 %v928
      %944 = vmatpush.bf16.msra.mxu0 %v927
      %945 = vmatpush.bf16.msra.mxu0 %v926
      %946 = vmatpush.bf16.msra.mxu0 %v925
      %947 = vmatpush.bf16.msra.mxu0 %v924
      %948 = vmatmul.bf16.gmra.mxu0 %v853
      %v949 = vpop.f32.mrf.mxu0
      %v950 = vadd.f32 0.0, %v949
      %v951 = vpop.f32.mrf.mxu0
      %952 = vmatmul.bf16.gmra.mxu0 %v857
      %v953 = vpop.f32.mrf.mxu0
      %v954 = vadd.f32 0.0, %v953
      %v955 = vpop.f32.mrf.mxu0
      %956 = vmatmul.bf16.gmra.mxu0 %v861
      %v957 = vpop.f32.mrf.mxu0
      %v958 = vadd.f32 0.0, %v957
      %v959 = vpop.f32.mrf.mxu0
      %960 = vmatmul.bf16.gmra.mxu0 %v865
      %v961 = vpop.f32.mrf.mxu0
      %v962 = vadd.f32 0.0, %v961
      %v963 = vpop.f32.mrf.mxu0
      %964 = vmatmul.bf16.gmra.mxu0 %v869
      %v965 = vpop.f32.mrf.mxu0
      %v966 = vadd.f32 0.0, %v965
      %v967 = vpop.f32.mrf.mxu0
      %968 = vmatmul.bf16.gmra.mxu0 %v873
      %v969 = vpop.f32.mrf.mxu0
      %v970 = vadd.f32 0.0, %v969
      %v971 = vpop.f32.mrf.mxu0
      %972 = vmatmul.bf16.gmra.mxu0 %v877
      %v973 = vpop.f32.mrf.mxu0
      %v974 = vadd.f32 0.0, %v973
      %v975 = vpop.f32.mrf.mxu0
      %976 = vmatmul.bf16.gmra.mxu0 %v883
      %v977 = vpop.f32.mrf.mxu0
      %v978 = vadd.f32 0.0, %v977
      %v979 = vpop.f32.mrf.mxu0
      %980 = vdwg.mxu0
      %v981 = vadd.f32 %v798, %v950
      %v982 = vadd.f32 %v802, %v954
      %v983 = vadd.f32 %v806, %v958
      %v984 = vadd.f32 %v810, %v962
      %v985 = vadd.f32 %v814, %v966
      %v986 = vadd.f32 %v818, %v970
      %v987 = vadd.f32 %v822, %v974
      %v988 = vadd.f32 %v826, %v978
      %s989 = scalar_lea.vmem %s3, 192
      %v990 = vld [vmem:[%s989] sm:$0xf]
      %v991 = vld [vmem:[%s989 + $0x4] sm:$0xf]
      %v992 = vld [vmem:[%s989 + $0x8] sm:$0xf]
      %v993 = vld [vmem:[%s989 + $0xc] sm:$0xf]
      %v994 = vld [vmem:[%s989 + $0x10] sm:$0xf]
      %v995 = vld [vmem:[%s989 + $0x14] sm:$0xf]
      %v996 = vld [vmem:[%s989 + $0x18] sm:$0xf]
      %v997 = vld [vmem:[%s989 + $0x1c] sm:$0xf]
      %v998 = vld [vmem:[%s989 + $0x20] sm:$0xf]
      %v999 = vld [vmem:[%s989 + $0x24] sm:$0xf]
      %v1000 = vld [vmem:[%s989 + $0x28] sm:$0xf]
      %v1001 = vld [vmem:[%s989 + $0x2c] sm:$0xf]
      %v1002 = vld [vmem:[%s989 + $0x30] sm:$0xf]
      %v1003 = vld [vmem:[%s989 + $0x34] sm:$0xf]
      %v1004 = vld [vmem:[%s989 + $0x38] sm:$0xf]
      %v1005 = vld [vmem:[%s989 + $0x3c] sm:$0xf]
      %v1008 = vunpack.c.l.b16 %v468
      %v1009 = vunpack.c.l.b16 %v469
      %v1010 = vpack.c.b16 %v1008, %v538
      %v1011 = vpack.c.b16 %v1009, %v1009
      %v1013 = vshll.u32 %v1010, 16
      %v1015 = vrot.slane %v1013, 1
      %v1016 = vsel %vm663, %v726, %v1015
      %v1017 = vshrl.u32 %v1010, 16
      %v1019 = vor.u32 %v1017, %v1015
      %v1021 = vshll.u32 %v1011, 16
      %v1023 = vrot.slane %v1021, 1
      %v1024 = vsel %vm663, %v1019, %v1023
      %v1043 = vunpack.c.l.b16 %v990
      %v1044 = vunpack.c.l.b16 %v991
      %v1045 = vunpack.c.l.b16 %v992
      %v1046 = vunpack.c.l.b16 %v993
      %v1047 = vunpack.c.l.b16 %v994
      %v1048 = vunpack.c.l.b16 %v995
      %v1049 = vunpack.c.l.b16 %v996
      %v1050 = vunpack.c.l.b16 %v997
      %v1051 = vunpack.c.l.b16 %v998
      %v1052 = vunpack.c.l.b16 %v999
      %v1053 = vunpack.c.l.b16 %v1000
      %v1054 = vunpack.c.l.b16 %v1001
      %v1055 = vunpack.c.l.b16 %v1002
      %v1056 = vunpack.c.l.b16 %v1003
      %v1057 = vunpack.c.l.b16 %v1004
      %v1058 = vunpack.c.l.b16 %v1005
      %v1059 = vpack.c.b16 %v1044, %v1043
      %v1060 = vpack.c.b16 %v1046, %v1045
      %v1061 = vpack.c.b16 %v1048, %v1047
      %v1062 = vpack.c.b16 %v1050, %v1049
      %v1063 = vpack.c.b16 %v1052, %v1051
      %v1064 = vpack.c.b16 %v1054, %v1053
      %v1065 = vpack.c.b16 %v1056, %v1055
      %v1066 = vpack.c.b16 %v1058, %v1057
      %1075 = vmatpush.bf16.msra.mxu0 %v1066
      %1076 = vmatpush.bf16.msra.mxu0 %v1065
      %1077 = vmatpush.bf16.msra.mxu0 %v1064
      %1078 = vmatpush.bf16.msra.mxu0 %v1063
      %1079 = vmatpush.bf16.msra.mxu0 %v1062
      %1080 = vmatpush.bf16.msra.mxu0 %v1061
      %1081 = vmatpush.bf16.msra.mxu0 %v1060
      %1082 = vmatpush.bf16.msra.mxu0 %v1059
      %1083 = vmatmul.bf16.gmra.mxu0 %v683
      %v1084 = vpop.f32.mrf.mxu0
      %v1085 = vadd.f32 0.0, %v1084
      %v1086 = vpop.f32.mrf.mxu0
      %1087 = vmatmul.bf16.gmra.mxu0 %v691
      %v1088 = vpop.f32.mrf.mxu0
      %v1089 = vadd.f32 0.0, %v1088
      %v1090 = vpop.f32.mrf.mxu0
      %1091 = vmatmul.bf16.gmra.mxu0 %v699
      %v1092 = vpop.f32.mrf.mxu0
      %v1093 = vadd.f32 0.0, %v1092
      %v1094 = vpop.f32.mrf.mxu0
      %1095 = vmatmul.bf16.gmra.mxu0 %v707
      %v1096 = vpop.f32.mrf.mxu0
      %v1097 = vadd.f32 0.0, %v1096
      %v1098 = vpop.f32.mrf.mxu0
      %1099 = vmatmul.bf16.gmra.mxu0 %v715
      %v1100 = vpop.f32.mrf.mxu0
      %v1101 = vadd.f32 0.0, %v1100
      %v1102 = vpop.f32.mrf.mxu0
      %1103 = vmatmul.bf16.gmra.mxu0 %v723
      %v1104 = vpop.f32.mrf.mxu0
      %v1105 = vadd.f32 0.0, %v1104
      %v1106 = vpop.f32.mrf.mxu0
      %1107 = vmatmul.bf16.gmra.mxu0 %v1016
      %v1108 = vpop.f32.mrf.mxu0
      %v1109 = vadd.f32 0.0, %v1108
      %v1110 = vpop.f32.mrf.mxu0
      %1111 = vmatmul.bf16.gmra.mxu0 %v1024
      %v1112 = vpop.f32.mrf.mxu0
      %v1113 = vadd.f32 0.0, %v1112
      %v1114 = vpop.f32.mrf.mxu0
      %1115 = vdwg.mxu0
      %v1116 = vadd.f32 %v981, %v1085
      %v1117 = vadd.f32 %v982, %v1089
      %v1118 = vadd.f32 %v983, %v1093
      %v1119 = vadd.f32 %v984, %v1097
      %v1120 = vadd.f32 %v985, %v1101
      %v1121 = vadd.f32 %v986, %v1105
      %v1122 = vadd.f32 %v987, %v1109
      %v1123 = vadd.f32 %v988, %v1113
      %s1124 = scalar_lea.vmem %s3, 256
      %v1125 = vld [vmem:[%s1124] sm:$0xf]
      %v1126 = vld [vmem:[%s1124 + $0x4] sm:$0xf]
      %v1127 = vld [vmem:[%s1124 + $0x8] sm:$0xf]
      %v1128 = vld [vmem:[%s1124 + $0xc] sm:$0xf]
      %v1129 = vld [vmem:[%s1124 + $0x10] sm:$0xf]
      %v1130 = vld [vmem:[%s1124 + $0x14] sm:$0xf]
      %v1131 = vld [vmem:[%s1124 + $0x18] sm:$0xf]
      %v1132 = vld [vmem:[%s1124 + $0x1c] sm:$0xf]
      %v1133 = vld [vmem:[%s1124 + $0x20] sm:$0xf]
      %v1134 = vld [vmem:[%s1124 + $0x24] sm:$0xf]
      %v1135 = vld [vmem:[%s1124 + $0x28] sm:$0xf]
      %v1136 = vld [vmem:[%s1124 + $0x2c] sm:$0xf]
      %v1137 = vld [vmem:[%s1124 + $0x30] sm:$0xf]
      %v1138 = vld [vmem:[%s1124 + $0x34] sm:$0xf]
      %v1139 = vld [vmem:[%s1124 + $0x38] sm:$0xf]
      %v1140 = vld [vmem:[%s1124 + $0x3c] sm:$0xf]
      %v1141 = vrot.slane %v1010, 1
      %v1142 = vsel %vm548, %v562, %v1141
      %v1143 = vrot.slane %v1011, 1
      %v1144 = vsel %vm548, %v1141, %v1143
      %v1163 = vunpack.c.l.b16 %v1125
      %v1164 = vunpack.c.l.b16 %v1126
      %v1165 = vunpack.c.l.b16 %v1127
      %v1166 = vunpack.c.l.b16 %v1128
      %v1167 = vunpack.c.l.b16 %v1129
      %v1168 = vunpack.c.l.b16 %v1130
      %v1169 = vunpack.c.l.b16 %v1131
      %v1170 = vunpack.c.l.b16 %v1132
      %v1171 = vunpack.c.l.b16 %v1133
      %v1172 = vunpack.c.l.b16 %v1134
      %v1173 = vunpack.c.l.b16 %v1135
      %v1174 = vunpack.c.l.b16 %v1136
      %v1175 = vunpack.c.l.b16 %v1137
      %v1176 = vunpack.c.l.b16 %v1138
      %v1177 = vunpack.c.l.b16 %v1139
      %v1178 = vunpack.c.l.b16 %v1140
      %v1179 = vpack.c.b16 %v1164, %v1163
      %v1180 = vpack.c.b16 %v1166, %v1165
      %v1181 = vpack.c.b16 %v1168, %v1167
      %v1182 = vpack.c.b16 %v1170, %v1169
      %v1183 = vpack.c.b16 %v1172, %v1171
      %v1184 = vpack.c.b16 %v1174, %v1173
      %v1185 = vpack.c.b16 %v1176, %v1175
      %v1186 = vpack.c.b16 %v1178, %v1177
      %1195 = vmatpush.bf16.msra.mxu0 %v1186
      %1196 = vmatpush.bf16.msra.mxu0 %v1185
      %1197 = vmatpush.bf16.msra.mxu0 %v1184
      %1198 = vmatpush.bf16.msra.mxu0 %v1183
      %1199 = vmatpush.bf16.msra.mxu0 %v1182
      %1200 = vmatpush.bf16.msra.mxu0 %v1181
      %1201 = vmatpush.bf16.msra.mxu0 %v1180
      %1202 = vmatpush.bf16.msra.mxu0 %v1179
      %1203 = vmatmul.bf16.gmra.mxu0 %v553
      %v1204 = vpop.f32.mrf.mxu0
      %v1205 = vadd.f32 0.0, %v1204
      %v1206 = vpop.f32.mrf.mxu0
      %1207 = vmatmul.bf16.gmra.mxu0 %v555
      %v1208 = vpop.f32.mrf.mxu0
      %v1209 = vadd.f32 0.0, %v1208
      %v1210 = vpop.f32.mrf.mxu0
      %1211 = vmatmul.bf16.gmra.mxu0 %v557
      %v1212 = vpop.f32.mrf.mxu0
      %v1213 = vadd.f32 0.0, %v1212
      %v1214 = vpop.f32.mrf.mxu0
      %1215 = vmatmul.bf16.gmra.mxu0 %v559
      %v1216 = vpop.f32.mrf.mxu0
      %v1217 = vadd.f32 0.0, %v1216
      %v1218 = vpop.f32.mrf.mxu0
      %1219 = vmatmul.bf16.gmra.mxu0 %v561
      %v1220 = vpop.f32.mrf.mxu0
      %v1221 = vadd.f32 0.0, %v1220
      %v1222 = vpop.f32.mrf.mxu0
      %1223 = vmatmul.bf16.gmra.mxu0 %v563
      %v1224 = vpop.f32.mrf.mxu0
      %v1225 = vadd.f32 0.0, %v1224
      %v1226 = vpop.f32.mrf.mxu0
      %1227 = vmatmul.bf16.gmra.mxu0 %v1142
      %v1228 = vpop.f32.mrf.mxu0
      %v1229 = vadd.f32 0.0, %v1228
      %v1230 = vpop.f32.mrf.mxu0
      %1231 = vmatmul.bf16.gmra.mxu0 %v1144
      %v1232 = vpop.f32.mrf.mxu0
      %v1233 = vadd.f32 0.0, %v1232
      %v1234 = vpop.f32.mrf.mxu0
      %1235 = vdwg.mxu0
      %v1236 = vadd.f32 %v1116, %v1205
      %v1237 = vadd.f32 %v1117, %v1209
      %v1238 = vadd.f32 %v1118, %v1213
      %v1239 = vadd.f32 %v1119, %v1217
      %v1240 = vadd.f32 %v1120, %v1221
      %v1241 = vadd.f32 %v1121, %v1225
      %v1242 = vadd.f32 %v1122, %v1229
      %v1243 = vadd.f32 %v1123, %v1233
      %s1244 = scalar_lea.vmem %s3, 320
      %v1245 = vld [vmem:[%s1244] sm:$0xf]
      %v1246 = vld [vmem:[%s1244 + $0x4] sm:$0xf]
      %v1247 = vld [vmem:[%s1244 + $0x8] sm:$0xf]
      %v1248 = vld [vmem:[%s1244 + $0xc] sm:$0xf]
      %v1249 = vld [vmem:[%s1244 + $0x10] sm:$0xf]
      %v1250 = vld [vmem:[%s1244 + $0x14] sm:$0xf]
      %v1251 = vld [vmem:[%s1244 + $0x18] sm:$0xf]
      %v1252 = vld [vmem:[%s1244 + $0x1c] sm:$0xf]
      %v1253 = vld [vmem:[%s1244 + $0x20] sm:$0xf]
      %v1254 = vld [vmem:[%s1244 + $0x24] sm:$0xf]
      %v1255 = vld [vmem:[%s1244 + $0x28] sm:$0xf]
      %v1256 = vld [vmem:[%s1244 + $0x2c] sm:$0xf]
      %v1257 = vld [vmem:[%s1244 + $0x30] sm:$0xf]
      %v1258 = vld [vmem:[%s1244 + $0x34] sm:$0xf]
      %v1259 = vld [vmem:[%s1244 + $0x38] sm:$0xf]
      %v1260 = vld [vmem:[%s1244 + $0x3c] sm:$0xf]
      %v1261 = vrot.slane %v1017, 1
      %v1262 = vrot.slane %v1013, 2
      %v1263 = vor.u32 %v1261, %v1262
      %v1264 = vsel %vm846, %v876, %v1263
      %v1265 = vshrl.u32 %v1011, 16
      %v1267 = vrot.slane %v1265, 1
      %v1268 = vrot.slane %v1021, 2
      %v1269 = vor.u32 %v1267, %v1268
      %v1270 = vsel %vm846, %v1263, %v1269
      %v1289 = vunpack.c.l.b16 %v1245
      %v1290 = vunpack.c.l.b16 %v1246
      %v1291 = vunpack.c.l.b16 %v1247
      %v1292 = vunpack.c.l.b16 %v1248
      %v1293 = vunpack.c.l.b16 %v1249
      %v1294 = vunpack.c.l.b16 %v1250
      %v1295 = vunpack.c.l.b16 %v1251
      %v1296 = vunpack.c.l.b16 %v1252
      %v1297 = vunpack.c.l.b16 %v1253
      %v1298 = vunpack.c.l.b16 %v1254
      %v1299 = vunpack.c.l.b16 %v1255
      %v1300 = vunpack.c.l.b16 %v1256
      %v1301 = vunpack.c.l.b16 %v1257
      %v1302 = vunpack.c.l.b16 %v1258
      %v1303 = vunpack.c.l.b16 %v1259
      %v1304 = vunpack.c.l.b16 %v1260
      %v1305 = vpack.c.b16 %v1290, %v1289
      %v1306 = vpack.c.b16 %v1292, %v1291
      %v1307 = vpack.c.b16 %v1294, %v1293
      %v1308 = vpack.c.b16 %v1296, %v1295
      %v1309 = vpack.c.b16 %v1298, %v1297
      %v1310 = vpack.c.b16 %v1300, %v1299
      %v1311 = vpack.c.b16 %v1302, %v1301
      %v1312 = vpack.c.b16 %v1304, %v1303
      %1321 = vmatpush.bf16.msra.mxu0 %v1312
      %1322 = vmatpush.bf16.msra.mxu0 %v1311
      %1323 = vmatpush.bf16.msra.mxu0 %v1310
      %1324 = vmatpush.bf16.msra.mxu0 %v1309
      %1325 = vmatpush.bf16.msra.mxu0 %v1308
      %1326 = vmatpush.bf16.msra.mxu0 %v1307
      %1327 = vmatpush.bf16.msra.mxu0 %v1306
      %1328 = vmatpush.bf16.msra.mxu0 %v1305
      %1329 = vmatmul.bf16.gmra.mxu0 %v857
      %v1330 = vpop.f32.mrf.mxu0
      %v1331 = vadd.f32 0.0, %v1330
      %v1332 = vpop.f32.mrf.mxu0
      %1333 = vmatmul.bf16.gmra.mxu0 %v861
      %v1334 = vpop.f32.mrf.mxu0
      %v1335 = vadd.f32 0.0, %v1334
      %v1336 = vpop.f32.mrf.mxu0
      %1337 = vmatmul.bf16.gmra.mxu0 %v865
      %v1338 = vpop.f32.mrf.mxu0
      %v1339 = vadd.f32 0.0, %v1338
      %v1340 = vpop.f32.mrf.mxu0
      %1341 = vmatmul.bf16.gmra.mxu0 %v869
      %v1342 = vpop.f32.mrf.mxu0
      %v1343 = vadd.f32 0.0, %v1342
      %v1344 = vpop.f32.mrf.mxu0
      %1345 = vmatmul.bf16.gmra.mxu0 %v873
      %v1346 = vpop.f32.mrf.mxu0
      %v1347 = vadd.f32 0.0, %v1346
      %v1348 = vpop.f32.mrf.mxu0
      %1349 = vmatmul.bf16.gmra.mxu0 %v877
      %v1350 = vpop.f32.mrf.mxu0
      %v1351 = vadd.f32 0.0, %v1350
      %v1352 = vpop.f32.mrf.mxu0
      %1353 = vmatmul.bf16.gmra.mxu0 %v1264
      %v1354 = vpop.f32.mrf.mxu0
      %v1355 = vadd.f32 0.0, %v1354
      %v1356 = vpop.f32.mrf.mxu0
      %1357 = vmatmul.bf16.gmra.mxu0 %v1270
      %v1358 = vpop.f32.mrf.mxu0
      %v1359 = vadd.f32 0.0, %v1358
      %v1360 = vpop.f32.mrf.mxu0
      %1361 = vdwg.mxu0
      %v1362 = vadd.f32 %v1236, %v1331
      %v1363 = vadd.f32 %v1237, %v1335
      %v1364 = vadd.f32 %v1238, %v1339
      %v1365 = vadd.f32 %v1239, %v1343
      %v1366 = vadd.f32 %v1240, %v1347
      %v1367 = vadd.f32 %v1241, %v1351
      %v1368 = vadd.f32 %v1242, %v1355
      %v1369 = vadd.f32 %v1243, %v1359
      %s1370 = scalar_lea.vmem %s3, 384
      %v1371 = vld [vmem:[%s1370] sm:$0xf]
      %v1372 = vld [vmem:[%s1370 + $0x4] sm:$0xf]
      %v1373 = vld [vmem:[%s1370 + $0x8] sm:$0xf]
      %v1374 = vld [vmem:[%s1370 + $0xc] sm:$0xf]
      %v1375 = vld [vmem:[%s1370 + $0x10] sm:$0xf]
      %v1376 = vld [vmem:[%s1370 + $0x14] sm:$0xf]
      %v1377 = vld [vmem:[%s1370 + $0x18] sm:$0xf]
      %v1378 = vld [vmem:[%s1370 + $0x1c] sm:$0xf]
      %v1379 = vld [vmem:[%s1370 + $0x20] sm:$0xf]
      %v1380 = vld [vmem:[%s1370 + $0x24] sm:$0xf]
      %v1381 = vld [vmem:[%s1370 + $0x28] sm:$0xf]
      %v1382 = vld [vmem:[%s1370 + $0x2c] sm:$0xf]
      %v1383 = vld [vmem:[%s1370 + $0x30] sm:$0xf]
      %v1384 = vld [vmem:[%s1370 + $0x34] sm:$0xf]
      %v1385 = vld [vmem:[%s1370 + $0x38] sm:$0xf]
      %v1386 = vld [vmem:[%s1370 + $0x3c] sm:$0xf]
      %v1389 = vunpack.c.l.b16 %v470
      %v1390 = vunpack.c.l.b16 %v471
      %v1391 = vpack.c.b16 %v1389, %v1009
      %v1392 = vpack.c.b16 %v1390, %v1390
      %v1394 = vshll.u32 %v1391, 16
      %v1396 = vrot.slane %v1394, 1
      %v1397 = vsel %vm663, %v1019, %v1396
      %v1398 = vshrl.u32 %v1391, 16
      %v1400 = vor.u32 %v1398, %v1396
      %v1402 = vshll.u32 %v1392, 16
      %v1404 = vrot.slane %v1402, 1
      %v1405 = vsel %vm663, %v1400, %v1404
      %v1424 = vunpack.c.l.b16 %v1371
      %v1425 = vunpack.c.l.b16 %v1372
      %v1426 = vunpack.c.l.b16 %v1373
      %v1427 = vunpack.c.l.b16 %v1374
      %v1428 = vunpack.c.l.b16 %v1375
      %v1429 = vunpack.c.l.b16 %v1376
      %v1430 = vunpack.c.l.b16 %v1377
      %v1431 = vunpack.c.l.b16 %v1378
      %v1432 = vunpack.c.l.b16 %v1379
      %v1433 = vunpack.c.l.b16 %v1380
      %v1434 = vunpack.c.l.b16 %v1381
      %v1435 = vunpack.c.l.b16 %v1382
      %v1436 = vunpack.c.l.b16 %v1383
      %v1437 = vunpack.c.l.b16 %v1384
      %v1438 = vunpack.c.l.b16 %v1385
      %v1439 = vunpack.c.l.b16 %v1386
      %v1440 = vpack.c.b16 %v1425, %v1424
      %v1441 = vpack.c.b16 %v1427, %v1426
      %v1442 = vpack.c.b16 %v1429, %v1428
      %v1443 = vpack.c.b16 %v1431, %v1430
      %v1444 = vpack.c.b16 %v1433, %v1432
      %v1445 = vpack.c.b16 %v1435, %v1434
      %v1446 = vpack.c.b16 %v1437, %v1436
      %v1447 = vpack.c.b16 %v1439, %v1438
      %1456 = vmatpush.bf16.msra.mxu0 %v1447
      %1457 = vmatpush.bf16.msra.mxu0 %v1446
      %1458 = vmatpush.bf16.msra.mxu0 %v1445
      %1459 = vmatpush.bf16.msra.mxu0 %v1444
      %1460 = vmatpush.bf16.msra.mxu0 %v1443
      %1461 = vmatpush.bf16.msra.mxu0 %v1442
      %1462 = vmatpush.bf16.msra.mxu0 %v1441
      %1463 = vmatpush.bf16.msra.mxu0 %v1440
      %1464 = vmatmul.bf16.gmra.mxu0 %v691
      %v1465 = vpop.f32.mrf.mxu0
      %v1466 = vadd.f32 0.0, %v1465
      %v1467 = vpop.f32.mrf.mxu0
      %1468 = vmatmul.bf16.gmra.mxu0 %v699
      %v1469 = vpop.f32.mrf.mxu0
      %v1470 = vadd.f32 0.0, %v1469
      %v1471 = vpop.f32.mrf.mxu0
      %1472 = vmatmul.bf16.gmra.mxu0 %v707
      %v1473 = vpop.f32.mrf.mxu0
      %v1474 = vadd.f32 0.0, %v1473
      %v1475 = vpop.f32.mrf.mxu0
      %1476 = vmatmul.bf16.gmra.mxu0 %v715
      %v1477 = vpop.f32.mrf.mxu0
      %v1478 = vadd.f32 0.0, %v1477
      %v1479 = vpop.f32.mrf.mxu0
      %1480 = vmatmul.bf16.gmra.mxu0 %v723
      %v1481 = vpop.f32.mrf.mxu0
      %v1482 = vadd.f32 0.0, %v1481
      %v1483 = vpop.f32.mrf.mxu0
      %1484 = vmatmul.bf16.gmra.mxu0 %v1016
      %v1485 = vpop.f32.mrf.mxu0
      %v1486 = vadd.f32 0.0, %v1485
      %v1487 = vpop.f32.mrf.mxu0
      %1488 = vmatmul.bf16.gmra.mxu0 %v1397
      %v1489 = vpop.f32.mrf.mxu0
      %v1490 = vadd.f32 0.0, %v1489
      %v1491 = vpop.f32.mrf.mxu0
      %1492 = vmatmul.bf16.gmra.mxu0 %v1405
      %v1493 = vpop.f32.mrf.mxu0
      %v1494 = vadd.f32 0.0, %v1493
      %v1495 = vpop.f32.mrf.mxu0
      %1496 = vdwg.mxu0
      %v1497 = vadd.f32 %v1362, %v1466
      %v1498 = vadd.f32 %v1363, %v1470
      %v1499 = vadd.f32 %v1364, %v1474
      %v1500 = vadd.f32 %v1365, %v1478
      %v1501 = vadd.f32 %v1366, %v1482
      %v1502 = vadd.f32 %v1367, %v1486
      %v1503 = vadd.f32 %v1368, %v1490
      %v1504 = vadd.f32 %v1369, %v1494
      %s1505 = scalar_lea.vmem %s3, 448
      %v1506 = vld [vmem:[%s1505] sm:$0xf]
      %v1507 = vld [vmem:[%s1505 + $0x4] sm:$0xf]
      %v1508 = vld [vmem:[%s1505 + $0x8] sm:$0xf]
      %v1509 = vld [vmem:[%s1505 + $0xc] sm:$0xf]
      %v1510 = vld [vmem:[%s1505 + $0x10] sm:$0xf]
      %v1511 = vld [vmem:[%s1505 + $0x14] sm:$0xf]
      %v1512 = vld [vmem:[%s1505 + $0x18] sm:$0xf]
      %v1513 = vld [vmem:[%s1505 + $0x1c] sm:$0xf]
      %v1514 = vld [vmem:[%s1505 + $0x20] sm:$0xf]
      %v1515 = vld [vmem:[%s1505 + $0x24] sm:$0xf]
      %v1516 = vld [vmem:[%s1505 + $0x28] sm:$0xf]
      %v1517 = vld [vmem:[%s1505 + $0x2c] sm:$0xf]
      %v1518 = vld [vmem:[%s1505 + $0x30] sm:$0xf]
      %v1519 = vld [vmem:[%s1505 + $0x34] sm:$0xf]
      %v1520 = vld [vmem:[%s1505 + $0x38] sm:$0xf]
      %v1521 = vld [vmem:[%s1505 + $0x3c] sm:$0xf]
      %v1522 = vrot.slane %v1391, 1
      %v1523 = vsel %vm548, %v1141, %v1522
      %v1524 = vrot.slane %v1392, 1
      %v1525 = vsel %vm548, %v1522, %v1524
      %v1544 = vunpack.c.l.b16 %v1506
      %v1545 = vunpack.c.l.b16 %v1507
      %v1546 = vunpack.c.l.b16 %v1508
      %v1547 = vunpack.c.l.b16 %v1509
      %v1548 = vunpack.c.l.b16 %v1510
      %v1549 = vunpack.c.l.b16 %v1511
      %v1550 = vunpack.c.l.b16 %v1512
      %v1551 = vunpack.c.l.b16 %v1513
      %v1552 = vunpack.c.l.b16 %v1514
      %v1553 = vunpack.c.l.b16 %v1515
      %v1554 = vunpack.c.l.b16 %v1516
      %v1555 = vunpack.c.l.b16 %v1517
      %v1556 = vunpack.c.l.b16 %v1518
      %v1557 = vunpack.c.l.b16 %v1519
      %v1558 = vunpack.c.l.b16 %v1520
      %v1559 = vunpack.c.l.b16 %v1521
      %v1560 = vpack.c.b16 %v1545, %v1544
      %v1561 = vpack.c.b16 %v1547, %v1546
      %v1562 = vpack.c.b16 %v1549, %v1548
      %v1563 = vpack.c.b16 %v1551, %v1550
      %v1564 = vpack.c.b16 %v1553, %v1552
      %v1565 = vpack.c.b16 %v1555, %v1554
      %v1566 = vpack.c.b16 %v1557, %v1556
      %v1567 = vpack.c.b16 %v1559, %v1558
      %1576 = vmatpush.bf16.msra.mxu0 %v1567
      %1577 = vmatpush.bf16.msra.mxu0 %v1566
      %1578 = vmatpush.bf16.msra.mxu0 %v1565
      %1579 = vmatpush.bf16.msra.mxu0 %v1564
      %1580 = vmatpush.bf16.msra.mxu0 %v1563
      %1581 = vmatpush.bf16.msra.mxu0 %v1562
      %1582 = vmatpush.bf16.msra.mxu0 %v1561
      %1583 = vmatpush.bf16.msra.mxu0 %v1560
      %1584 = vmatmul.bf16.gmra.mxu0 %v555
      %v1585 = vpop.f32.mrf.mxu0
      %v1586 = vadd.f32 0.0, %v1585
      %v1587 = vpop.f32.mrf.mxu0
      %1588 = vmatmul.bf16.gmra.mxu0 %v557
      %v1589 = vpop.f32.mrf.mxu0
      %v1590 = vadd.f32 0.0, %v1589
      %v1591 = vpop.f32.mrf.mxu0
      %1592 = vmatmul.bf16.gmra.mxu0 %v559
      %v1593 = vpop.f32.mrf.mxu0
      %v1594 = vadd.f32 0.0, %v1593
      %v1595 = vpop.f32.mrf.mxu0
      %1596 = vmatmul.bf16.gmra.mxu0 %v561
      %v1597 = vpop.f32.mrf.mxu0
      %v1598 = vadd.f32 0.0, %v1597
      %v1599 = vpop.f32.mrf.mxu0
      %1600 = vmatmul.bf16.gmra.mxu0 %v563
      %v1601 = vpop.f32.mrf.mxu0
      %v1602 = vadd.f32 0.0, %v1601
      %v1603 = vpop.f32.mrf.mxu0
      %1604 = vmatmul.bf16.gmra.mxu0 %v1142
      %v1605 = vpop.f32.mrf.mxu0
      %v1606 = vadd.f32 0.0, %v1605
      %v1607 = vpop.f32.mrf.mxu0
      %1608 = vmatmul.bf16.gmra.mxu0 %v1523
      %v1609 = vpop.f32.mrf.mxu0
      %v1610 = vadd.f32 0.0, %v1609
      %v1611 = vpop.f32.mrf.mxu0
      %1612 = vmatmul.bf16.gmra.mxu0 %v1525
      %v1613 = vpop.f32.mrf.mxu0
      %v1614 = vadd.f32 0.0, %v1613
      %v1615 = vpop.f32.mrf.mxu0
      %1616 = vdwg.mxu0
      %v1617 = vadd.f32 %v1497, %v1586
      %v1618 = vadd.f32 %v1498, %v1590
      %v1619 = vadd.f32 %v1499, %v1594
      %v1620 = vadd.f32 %v1500, %v1598
      %v1621 = vadd.f32 %v1501, %v1602
      %v1622 = vadd.f32 %v1502, %v1606
      %v1623 = vadd.f32 %v1503, %v1610
      %v1624 = vadd.f32 %v1504, %v1614
      %s1625 = scalar_lea.vmem %s3, 512
      %v1626 = vld [vmem:[%s1625] sm:$0xf]
      %v1627 = vld [vmem:[%s1625 + $0x4] sm:$0xf]
      %v1628 = vld [vmem:[%s1625 + $0x8] sm:$0xf]
      %v1629 = vld [vmem:[%s1625 + $0xc] sm:$0xf]
      %v1630 = vld [vmem:[%s1625 + $0x10] sm:$0xf]
      %v1631 = vld [vmem:[%s1625 + $0x14] sm:$0xf]
      %v1632 = vld [vmem:[%s1625 + $0x18] sm:$0xf]
      %v1633 = vld [vmem:[%s1625 + $0x1c] sm:$0xf]
      %v1634 = vld [vmem:[%s1625 + $0x20] sm:$0xf]
      %v1635 = vld [vmem:[%s1625 + $0x24] sm:$0xf]
      %v1636 = vld [vmem:[%s1625 + $0x28] sm:$0xf]
      %v1637 = vld [vmem:[%s1625 + $0x2c] sm:$0xf]
      %v1638 = vld [vmem:[%s1625 + $0x30] sm:$0xf]
      %v1639 = vld [vmem:[%s1625 + $0x34] sm:$0xf]
      %v1640 = vld [vmem:[%s1625 + $0x38] sm:$0xf]
      %v1641 = vld [vmem:[%s1625 + $0x3c] sm:$0xf]
      %v1642 = vrot.slane %v1398, 1
      %v1643 = vrot.slane %v1394, 2
      %v1644 = vor.u32 %v1642, %v1643
      %v1645 = vsel %vm846, %v1263, %v1644
      %v1646 = vshrl.u32 %v1392, 16
      %v1648 = vrot.slane %v1646, 1
      %v1649 = vrot.slane %v1402, 2
      %v1650 = vor.u32 %v1648, %v1649
      %v1651 = vsel %vm846, %v1644, %v1650
      %v1670 = vunpack.c.l.b16 %v1626
      %v1671 = vunpack.c.l.b16 %v1627
      %v1672 = vunpack.c.l.b16 %v1628
      %v1673 = vunpack.c.l.b16 %v1629
      %v1674 = vunpack.c.l.b16 %v1630
      %v1675 = vunpack.c.l.b16 %v1631
      %v1676 = vunpack.c.l.b16 %v1632
      %v1677 = vunpack.c.l.b16 %v1633
      %v1678 = vunpack.c.l.b16 %v1634
      %v1679 = vunpack.c.l.b16 %v1635
      %v1680 = vunpack.c.l.b16 %v1636
      %v1681 = vunpack.c.l.b16 %v1637
      %v1682 = vunpack.c.l.b16 %v1638
      %v1683 = vunpack.c.l.b16 %v1639
      %v1684 = vunpack.c.l.b16 %v1640
      %v1685 = vunpack.c.l.b16 %v1641
      %v1686 = vpack.c.b16 %v1671, %v1670
      %v1687 = vpack.c.b16 %v1673, %v1672
      %v1688 = vpack.c.b16 %v1675, %v1674
      %v1689 = vpack.c.b16 %v1677, %v1676
      %v1690 = vpack.c.b16 %v1679, %v1678
      %v1691 = vpack.c.b16 %v1681, %v1680
      %v1692 = vpack.c.b16 %v1683, %v1682
      %v1693 = vpack.c.b16 %v1685, %v1684
      %1702 = vmatpush.bf16.msra.mxu0 %v1693
      %1703 = vmatpush.bf16.msra.mxu0 %v1692
      %1704 = vmatpush.bf16.msra.mxu0 %v1691
      %1705 = vmatpush.bf16.msra.mxu0 %v1690
      %1706 = vmatpush.bf16.msra.mxu0 %v1689
      %1707 = vmatpush.bf16.msra.mxu0 %v1688
      %1708 = vmatpush.bf16.msra.mxu0 %v1687
      %1709 = vmatpush.bf16.msra.mxu0 %v1686
      %1710 = vmatmul.bf16.gmra.mxu0 %v861
      %v1711 = vpop.f32.mrf.mxu0
      %v1712 = vadd.f32 0.0, %v1711
      %v1713 = vpop.f32.mrf.mxu0
      %1714 = vmatmul.bf16.gmra.mxu0 %v865
      %v1715 = vpop.f32.mrf.mxu0
      %v1716 = vadd.f32 0.0, %v1715
      %v1717 = vpop.f32.mrf.mxu0
      %1718 = vmatmul.bf16.gmra.mxu0 %v869
      %v1719 = vpop.f32.mrf.mxu0
      %v1720 = vadd.f32 0.0, %v1719
      %v1721 = vpop.f32.mrf.mxu0
      %1722 = vmatmul.bf16.gmra.mxu0 %v873
      %v1723 = vpop.f32.mrf.mxu0
      %v1724 = vadd.f32 0.0, %v1723
      %v1725 = vpop.f32.mrf.mxu0
      %1726 = vmatmul.bf16.gmra.mxu0 %v877
      %v1727 = vpop.f32.mrf.mxu0
      %v1728 = vadd.f32 0.0, %v1727
      %v1729 = vpop.f32.mrf.mxu0
      %1730 = vmatmul.bf16.gmra.mxu0 %v1264
      %v1731 = vpop.f32.mrf.mxu0
      %v1732 = vadd.f32 0.0, %v1731
      %v1733 = vpop.f32.mrf.mxu0
      %1734 = vmatmul.bf16.gmra.mxu0 %v1645
      %v1735 = vpop.f32.mrf.mxu0
      %v1736 = vadd.f32 0.0, %v1735
      %v1737 = vpop.f32.mrf.mxu0
      %1738 = vmatmul.bf16.gmra.mxu0 %v1651
      %v1739 = vpop.f32.mrf.mxu0
      %v1740 = vadd.f32 0.0, %v1739
      %v1741 = vpop.f32.mrf.mxu0
      %1742 = vdwg.mxu0
      %v1743 = vadd.f32 %v1617, %v1712
      %v1744 = vadd.f32 %v1618, %v1716
      %v1745 = vadd.f32 %v1619, %v1720
      %v1746 = vadd.f32 %v1620, %v1724
      %v1747 = vadd.f32 %v1621, %v1728
      %v1748 = vadd.f32 %v1622, %v1732
      %v1749 = vadd.f32 %v1623, %v1736
      %v1750 = vadd.f32 %v1624, %v1740
      %v1751 = vld [vmem:[%s4] sm:$0x1]
      %v1753 = vperm.slane %v1751, 0
      %v1755 = vadd.f32 %v1743, %v1753
      %v1756 = vadd.f32 %v1744, %v1753
      %v1757 = vadd.f32 %v1745, %v1753
      %v1758 = vadd.f32 %v1746, %v1753
      %v1759 = vadd.f32 %v1747, %v1753
      %v1760 = vadd.f32 %v1748, %v1753
      %v1761 = vadd.f32 %v1749, %v1753
      %v1762 = vadd.f32 %v1750, %v1753
      %1763 = vst [vmem:[%s224] sm:$0xff] %v1755
      %1764 = vst [vmem:[%s224 + $0x8] sm:$0xff] %v1756
      %1765 = vst [vmem:[%s224 + $0x10] sm:$0xff] %v1757
      %1766 = vst [vmem:[%s224 + $0x18] sm:$0xff] %v1758
      %1767 = vst [vmem:[%s224 + $0x20] sm:$0xff] %v1759
      %1768 = vst [vmem:[%s224 + $0x28] sm:$0xff] %v1760
      %1769 = vst [vmem:[%s224 + $0x30] sm:$0xff] %v1761
      %1770 = vst [vmem:[%s224 + $0x38] sm:$0xff] %v1762
      %p1771 = scmp.lt.s32.totalorder %s16, 1
      %s1772 = scalar_select %p1771, %s16, 1
      %s1773 = smul.addr %s1772, 8
      %s1774 = smul.addr %s1773, 8
      %s1775 = scalar_lea.vmem %s5, %s1774
      // Predicated region
      $region41: #{hrnet_w18_up4_forward.5} parent=39 // pred_check
        %p1776 = pneg %p144
      $region42: #{hrnet_w18_up4_forward.5} parent=39 // pred_check_branch
        %1778 = sbr.rel (%p1776) target = $region44
      $region43: #{hrnet_w18_up4_forward.5} parent=39 // pred_region
        _
      $region44: #{hrnet_w18_up4_forward.5} parent=39 // pred_fallthru
        _
    $region40: #{hrnet_w18_up4_forward.5} parent=5 // pred_fallthru
      _
    %p1779 = scmp.le.s32.totalorder 2, %s11
    // Predicated region
    $region45: #{hrnet_w18_up4_forward.5} parent=5 // pred_check
      %p1780 = pneg %p1779
    $region46: #{hrnet_w18_up4_forward.5} parent=5 // pred_check_branch
      %1782 = sbr.rel (%p1780) target = $region48
    $region47: #{hrnet_w18_up4_forward.5} parent=5 // pred_region
      %s1783 = ssub.s32 %s11, 2
      // Predicated region
      $region49: #{hrnet_w18_up4_forward.5} parent=47 // pred_check
        %p1784 = pneg %p150
      $region50: #{hrnet_w18_up4_forward.5} parent=47 // pred_check_branch
        %1786 = sbr.rel (%p1784) target = $region52
      $region51: #{hrnet_w18_up4_forward.5} parent=47 // pred_region
        %p1787 = scmp.lt.s32.totalorder %s17, 1
        %s1788 = scalar_select %p1787, %s17, 1
        %s1789 = smul.addr %s1788, 8
        %s1790 = smul.addr %s1789, 8
        %s1791 = scalar_lea.vmem %s5, %s1790
      $region52: #{hrnet_w18_up4_forward.5} parent=47 // pred_fallthru
        _
    $region48: #{hrnet_w18_up4_forward.5} parent=5 // pred_fallthru
      _
  $region6: #{hrnet_w18_up4_forward.5} parent=0 // loop_footer
    %s15 = sadd.s32 1, %s11
  $region7: #{hrnet_w18_up4_forward.5} parent=0 // loop_footer_branch
    %10 = sbr.rel target = $region3
  $region8: #{hrnet_w18_up4_forward.5} parent=0 // loop_exit
    _

// kernel: hrnet_w18_up4_forward.4
$region0: #{hrnet_w18_up4_forward.4}
  #allocation0 [shape = 'u32[]', space=smem, size = 0x4, offset = 0x4, fixed_abs, tag = 'smem constant byte address 0x4 - core index']
  #allocation1 [shape = 'u32[72,128]{1,0:T(1,128)}', space=vmem, size = 0x9000, scoped, tag = 'internal scratch']
  %s0 = inlined_call_operand.vmem [shape: bf16[2,4,160,128], index: 0, kind: input, shape index: {}]
  %s1 = inlined_call_operand.vmem [shape: bf16[3,3,128,128], index: 1, kind: input, shape index: {}]
  %s2 = inlined_call_operand.vmem [shape: f32[1,128], index: 2, kind: input, shape index: {}]
  %s3 = inlined_call_operand.vmem [shape: bf16[2,8,8,128], index: 3, kind: output, shape index: {}]
  %s4 = sld [smem:[#allocation0]]
  $region45: #{hrnet_w18_up4_forward.4} parent=0
    _
  %s6 = ssub.s32 1, %s4
  %s7 = scalar_select 0, %s6, %s4
  loop: start=0, step=1, limit=4
  $region2: #{hrnet_w18_up4_forward.4} parent=0 // loop_pre_header
    _
  $region3: #{hrnet_w18_up4_forward.4} parent=0 // loop_header
    %s9 = sphi 0, %s13
    %p10 = scmp.ge.s32.totalorder %s9, 4
    %s19 = sphi 0, %s21
    %s22 = sphi 0, %s19
    %s23 = sphi 0, %s22
    %s39 = sphi 0, %s23
    %s43 = sphi 0, %s43
    %s45 = sphi 0, %s43
    %s46 = sphi 0, %s45
    %s60 = sphi 0, %s46
    %s64 = sphi 0, %s64
    %s66 = sphi 0, %s64
    %s67 = sphi 0, %s66
    %s81 = sphi 0, %s67
    %s87 = sphi 0, %s89
    %s90 = sphi 0, %s87
    %s91 = sphi 0, %s90
    %s107 = sphi 0, %s91
  $region4: #{hrnet_w18_up4_forward.4} parent=0 // loop_header_branch
    %12 = sbr.rel (%p10) target = $region8
  $region5: #{hrnet_w18_up4_forward.4} parent=0 // loop_body
    %s14 = ssub.s32 %s9, 1
    %s15 = ssub.s32 %s9, 2
    %s16 = sadd.s32 %s9, 1
    %s17 = ssub.s32 %s9, %s16
    %p18 = scmp.eq.s32.totalorder %s17, 0
    %s20 = sadd.s32 %s19, 1
    %s21 = scalar_select %p18, %s19, %s20
    %p24 = pneg %p18
    %p25 = scmp.eq.s32.totalorder %s9, 1
    %p26 = por %p24, %p25
    %p27 = scmp.ne.s32.totalorder %s19, %s22
    %p28 = scmp.eq.s32.totalorder %s9, 0
    %p29 = por %p27, %p28
    %p30 = scmp.ne.s32.totalorder %s19, %s22
    %p31 = scmp.eq.s32.totalorder %s14, 1
    %p32 = por %p30, %p31
    %p33 = scmp.ne.s32.totalorder %s22, %s23
    %p34 = scmp.eq.s32.totalorder %s14, 0
    %p35 = por %p33, %p34
    %p36 = scmp.ne.s32.totalorder %s22, %s23
    %p37 = scmp.eq.s32.totalorder %s15, 1
    %p38 = por %p36, %p37
    %p40 = scmp.ne.s32.totalorder %s23, %s39
    %p41 = scmp.eq.s32.totalorder %s15, 0
    %p42 = por %p40, %p41
    %s44 = sadd.s32 %s43, 1
    %p47 = scmp.eq.s32.totalorder %s9, 1
    %p48 = scmp.ne.s32.totalorder %s43, %s45
    %p49 = scmp.eq.s32.totalorder %s9, 0
    %p50 = por %p48, %p49
    %p51 = scmp.ne.s32.totalorder %s43, %s45
    %p52 = scmp.eq.s32.totalorder %s14, 1
    %p53 = por %p51, %p52
    %p54 = scmp.ne.s32.totalorder %s45, %s46
    %p55 = scmp.eq.s32.totalorder %s14, 0
    %p56 = por %p54, %p55
    %p57 = scmp.ne.s32.totalorder %s45, %s46
    %p58 = scmp.eq.s32.totalorder %s15, 1
    %p59 = por %p57, %p58
    %p61 = scmp.ne.s32.totalorder %s46, %s60
    %p62 = scmp.eq.s32.totalorder %s15, 0
    %p63 = por %p61, %p62
    %s65 = sadd.s32 %s64, 1
    %p68 = scmp.eq.s32.totalorder %s9, 1
    %p69 = scmp.ne.s32.totalorder %s64, %s66
    %p70 = scmp.eq.s32.totalorder %s9, 0
    %p71 = por %p69, %p70
    %p72 = scmp.ne.s32.totalorder %s64, %s66
    %p73 = scmp.eq.s32.totalorder %s14, 1
    %p74 = por %p72, %p73
    %p75 = scmp.ne.s32.totalorder %s66, %s67
    %p76 = scmp.eq.s32.totalorder %s14, 0
    %p77 = por %p75, %p76
    %p78 = scmp.ne.s32.totalorder %s66, %s67
    %p79 = scmp.eq.s32.totalorder %s15, 1
    %p80 = por %p78, %p79
    %p82 = scmp.ne.s32.totalorder %s67, %s81
    %p83 = scmp.eq.s32.totalorder %s15, 0
    %p84 = por %p82, %p83
    %s85 = ssub.s32 %s9, %s16
    %p86 = scmp.eq.s32.totalorder %s85, 0
    %s88 = sadd.s32 %s87, 1
    %s89 = scalar_select %p86, %s87, %s88
    %p92 = pneg %p86
    %p93 = scmp.eq.s32.totalorder %s9, 1
    %p94 = por %p92, %p93
    %p95 = scmp.ne.s32.totalorder %s87, %s90
    %p96 = scmp.eq.s32.totalorder %s9, 0
    %p97 = por %p95, %p96
    %p98 = scmp.ne.s32.totalorder %s87, %s90
    %p99 = scmp.eq.s32.totalorder %s14, 1
    %p100 = por %p98, %p99
    %p101 = scmp.ne.s32.totalorder %s90, %s91
    %p102 = scmp.eq.s32.totalorder %s14, 0
    %p103 = por %p101, %p102
    %p104 = scmp.ne.s32.totalorder %s90, %s91
    %p105 = scmp.eq.s32.totalorder %s15, 1
    %p106 = por %p104, %p105
    %p108 = scmp.ne.s32.totalorder %s91, %s107
    %p109 = scmp.eq.s32.totalorder %s15, 0
    %p110 = por %p108, %p109
    %p111 = scmp.le.s32.totalorder 1, %s9
    %p112 = scmp.lt.s32.totalorder %s9, 3
    %p113 = pnand %p111, %p112
    %p114 = pneg %p113
    // Predicated region
    $region9: #{hrnet_w18_up4_forward.4} parent=5 // pred_check
      _
    $region10: #{hrnet_w18_up4_forward.4} parent=5 // pred_check_branch
      %116 = sbr.rel (%p113) target = $region12
    $region11: #{hrnet_w18_up4_forward.4} parent=5 // pred_region
      %s117 = ssub.s32 %s9, 1
      // Predicated region
      $region13: #{hrnet_w18_up4_forward.4} parent=11 // pred_check
        %p118 = pneg %p56
      $region14: #{hrnet_w18_up4_forward.4} parent=11 // pred_check_branch
        %120 = sbr.rel (%p118) target = $region16
      $region15: #{hrnet_w18_up4_forward.4} parent=11 // pred_region
        _
      $region16: #{hrnet_w18_up4_forward.4} parent=11 // pred_fallthru
        _
      // Predicated region
      $region17: #{hrnet_w18_up4_forward.4} parent=11 // pred_check
        %p121 = pneg %p77
      $region18: #{hrnet_w18_up4_forward.4} parent=11 // pred_check_branch
        %123 = sbr.rel (%p121) target = $region20
      $region19: #{hrnet_w18_up4_forward.4} parent=11 // pred_region
        _
      $region20: #{hrnet_w18_up4_forward.4} parent=11 // pred_fallthru
        _
    $region12: #{hrnet_w18_up4_forward.4} parent=5 // pred_fallthru
      _
    %p124 = scmp.lt.s32.totalorder %s9, 2
    // Predicated region
    $region21: #{hrnet_w18_up4_forward.4} parent=5 // pred_check
      %p125 = pneg %p124
    $region22: #{hrnet_w18_up4_forward.4} parent=5 // pred_check_branch
      %127 = sbr.rel (%p125) target = $region24
    $region23: #{hrnet_w18_up4_forward.4} parent=5 // pred_region
      // Predicated region
      $region25: #{hrnet_w18_up4_forward.4} parent=23 // pred_check
        %p128 = pneg %p29
      $region26: #{hrnet_w18_up4_forward.4} parent=23 // pred_check_branch
        %130 = sbr.rel (%p128) target = $region28
      $region27: #{hrnet_w18_up4_forward.4} parent=23 // pred_region
        %p131 = scmp.lt.s32.totalorder %s9, 1
        %s132 = scalar_select %p131, %s9, 1
        %s133 = smul.addr %s132, 80
        %s134 = smul.addr %s133, 4
        %s135 = scalar_lea.vmem %s0, %s134
      $region28: #{hrnet_w18_up4_forward.4} parent=23 // pred_fallthru
        _
    $region24: #{hrnet_w18_up4_forward.4} parent=5 // pred_fallthru
      _
    %p136 = scmp.le.s32.totalorder 1, %s9
    %p137 = scmp.lt.s32.totalorder %s9, 3
    %p138 = pnand %p136, %p137
    %p139 = pneg %p138
    // Predicated region
    $region29: #{hrnet_w18_up4_forward.4} parent=5 // pred_check
      _
    $region30: #{hrnet_w18_up4_forward.4} parent=5 // pred_check_branch
      %141 = sbr.rel (%p138) target = $region32
    $region31: #{hrnet_w18_up4_forward.4} parent=5 // pred_region
      %s142 = ssub.s32 %s9, 1
      %p143 = scmp.lt.s32.totalorder %s14, 1
      %s144 = scalar_select %p143, %s14, 1
      %s145 = smul.addr %s144, 80
      %s146 = smul.addr %s145, 4
      %s147 = scalar_lea.vmem %s0, %s146
      %p148 = pneg %p35
      %p149 = pneg %p32
      %p150 = pneg %p56
      %p151 = pneg %p53
      %p152 = pneg %p77
      %p153 = pneg %p74
      %p154 = pneg %p103
      %p155 = pneg %p100
      %p156 = scmp.lt.s32.totalorder %s14, 1
      %s157 = scalar_select %p156, %s14, 1
      %s158 = smul.addr %s157, 8
      %s159 = smul.addr %s158, 4
      %s160 = scalar_lea.vmem %s3, %s159
      %p161 = scmp.lt.s32.totalorder %s14, 1
      %s162 = scalar_select %p161, %s14, 1
      %s163 = smul.addr %s162, 80
      %s164 = smul.addr %s163, 4
      %s165 = scalar_lea.vmem %s0, %s164
      %p166 = scmp.lt.s32.totalorder %s14, 1
      %s167 = scalar_select %p166, %s14, 1
      %s168 = smul.addr %s167, 8
      %s169 = smul.addr %s168, 4
      %s170 = scalar_lea.vmem %s3, %s169
      %v171 = vld [vmem:[%s165] sm:$0xf]
      %v172 = vld [vmem:[%s165 + $0x4] sm:$0xf]
      %v173 = vld [vmem:[%s165 + $0x8] sm:$0xf]
      %v174 = vld [vmem:[%s165 + $0xc] sm:$0xf]
      %v175 = vld [vmem:[%s165 + $0x10] sm:$0xf]
      %v176 = vld [vmem:[%s165 + $0x14] sm:$0xf]
      %v177 = vld [vmem:[%s165 + $0x18] sm:$0xf]
      %v178 = vld [vmem:[%s165 + $0x1c] sm:$0xf]
      %v179 = vld [vmem:[%s165 + $0x20] sm:$0xf]
      %v180 = vld [vmem:[%s165 + $0x24] sm:$0xf]
      %v181 = vld [vmem:[%s165 + $0x28] sm:$0xf]
      %v182 = vld [vmem:[%s165 + $0x2c] sm:$0xf]
      %v183 = vld [vmem:[%s165 + $0x30] sm:$0xf]
      %v184 = vld [vmem:[%s165 + $0x34] sm:$0xf]
      %v185 = vld [vmem:[%s165 + $0x38] sm:$0xf]
      %v186 = vld [vmem:[%s165 + $0x3c] sm:$0xf]
      %v187 = vld [vmem:[%s1] sm:$0xf]
      %v188 = vld [vmem:[%s1 + $0x4] sm:$0xf]
      %v189 = vld [vmem:[%s1 + $0x8] sm:$0xf]
      %v190 = vld [vmem:[%s1 + $0xc] sm:$0xf]
      %v191 = vld [vmem:[%s1 + $0x10] sm:$0xf]
      %v192 = vld [vmem:[%s1 + $0x14] sm:$0xf]
      %v193 = vld [vmem:[%s1 + $0x18] sm:$0xf]
      %v194 = vld [vmem:[%s1 + $0x1c] sm:$0xf]
      %v195 = vld [vmem:[%s1 + $0x20] sm:$0xf]
      %v196 = vld [vmem:[%s1 + $0x24] sm:$0xf]
      %v197 = vld [vmem:[%s1 + $0x28] sm:$0xf]
      %v198 = vld [vmem:[%s1 + $0x2c] sm:$0xf]
      %v199 = vld [vmem:[%s1 + $0x30] sm:$0xf]
      %v200 = vld [vmem:[%s1 + $0x34] sm:$0xf]
      %v201 = vld [vmem:[%s1 + $0x38] sm:$0xf]
      %v202 = vld [vmem:[%s1 + $0x3c] sm:$0xf]
      %s203 = scalar_lea.vmem %s165, 80
      %v204 = vld [vmem:[%s203] sm:$0xf]
      %v205 = vld [vmem:[%s203 + $0x4] sm:$0xf]
      %v206 = vld [vmem:[%s203 + $0x8] sm:$0xf]
      %v207 = vld [vmem:[%s203 + $0xc] sm:$0xf]
      %v208 = vld [vmem:[%s203 + $0x10] sm:$0xf]
      %v209 = vld [vmem:[%s203 + $0x14] sm:$0xf]
      %v210 = vld [vmem:[%s203 + $0x18] sm:$0xf]
      %v211 = vld [vmem:[%s203 + $0x1c] sm:$0xf]
      %v212 = vld [vmem:[%s203 + $0x20] sm:$0xf]
      %v213 = vld [vmem:[%s203 + $0x24] sm:$0xf]
      %v214 = vld [vmem:[%s203 + $0x28] sm:$0xf]
      %v215 = vld [vmem:[%s203 + $0x2c] sm:$0xf]
      %v216 = vld [vmem:[%s203 + $0x30] sm:$0xf]
      %v217 = vld [vmem:[%s203 + $0x34] sm:$0xf]
      %v218 = vld [vmem:[%s203 + $0x38] sm:$0xf]
      %v219 = vld [vmem:[%s203 + $0x3c] sm:$0xf]
      %s220 = scalar_lea.vmem %s1, 64
      %v221 = vld [vmem:[%s220] sm:$0xf]
      %v222 = vld [vmem:[%s220 + $0x4] sm:$0xf]
      %v223 = vld [vmem:[%s220 + $0x8] sm:$0xf]
      %v224 = vld [vmem:[%s220 + $0xc] sm:$0xf]
      %v225 = vld [vmem:[%s220 + $0x10] sm:$0xf]
      %v226 = vld [vmem:[%s220 + $0x14] sm:$0xf]
      %v227 = vld [vmem:[%s220 + $0x18] sm:$0xf]
      %v228 = vld [vmem:[%s220 + $0x1c] sm:$0xf]
      %v229 = vld [vmem:[%s220 + $0x20] sm:$0xf]
      %v230 = vld [vmem:[%s220 + $0x24] sm:$0xf]
      %v231 = vld [vmem:[%s220 + $0x28] sm:$0xf]
      %v232 = vld [vmem:[%s220 + $0x2c] sm:$0xf]
      %v233 = vld [vmem:[%s220 + $0x30] sm:$0xf]
      %v234 = vld [vmem:[%s220 + $0x34] sm:$0xf]
      %v235 = vld [vmem:[%s220 + $0x38] sm:$0xf]
      %v236 = vld [vmem:[%s220 + $0x3c] sm:$0xf]
      %v253 = vunpack.c.l.b16 %v204
      %v254 = vunpack.c.l.b16 %v205
      %v255 = vunpack.c.l.b16 %v206
      %v256 = vunpack.c.l.b16 %v207
      %v257 = vunpack.c.l.b16 %v208
      %v258 = vunpack.c.l.b16 %v209
      %v259 = vunpack.c.l.b16 %v210
      %v260 = vunpack.c.l.b16 %v211
      %v261 = vunpack.c.l.b16 %v212
      %v262 = vunpack.c.l.b16 %v213
      %v263 = vunpack.c.l.b16 %v214
      %v264 = vunpack.c.l.b16 %v215
      %v265 = vunpack.c.l.b16 %v216
      %v266 = vunpack.c.l.b16 %v217
      %v267 = vunpack.c.l.b16 %v218
      %v268 = vunpack.c.l.b16 %v219
      %v269 = vpack.c.b16 %v254, %v253
      %v270 = vpack.c.b16 %v256, %v255
      %v271 = vpack.c.b16 %v258, %v257
      %v272 = vpack.c.b16 %v260, %v259
      %v273 = vpack.c.b16 %v262, %v261
      %v274 = vpack.c.b16 %v264, %v263
      %v275 = vpack.c.b16 %v266, %v265
      %v276 = vpack.c.b16 %v268, %v267
      %v301 = vunpack.c.l.b16 %v221
      %v302 = vunpack.c.l.b16 %v222
      %v303 = vunpack.c.l.b16 %v223
      %v304 = vunpack.c.l.b16 %v224
      %v305 = vunpack.c.l.b16 %v225
      %v306 = vunpack.c.l.b16 %v226
      %v307 = vunpack.c.l.b16 %v227
      %v308 = vunpack.c.l.b16 %v228
      %v309 = vunpack.c.l.b16 %v229
      %v310 = vunpack.c.l.b16 %v230
      %v311 = vunpack.c.l.b16 %v231
      %v312 = vunpack.c.l.b16 %v232
      %v313 = vunpack.c.l.b16 %v233
      %v314 = vunpack.c.l.b16 %v234
      %v315 = vunpack.c.l.b16 %v235
      %v316 = vunpack.c.l.b16 %v236
      %v317 = vpack.c.b16 %v302, %v301
      %v318 = vpack.c.b16 %v304, %v303
      %v319 = vpack.c.b16 %v306, %v305
      %v320 = vpack.c.b16 %v308, %v307
      %v321 = vpack.c.b16 %v310, %v309
      %v322 = vpack.c.b16 %v312, %v311
      %v323 = vpack.c.b16 %v314, %v313
      %v324 = vpack.c.b16 %v316, %v315
      %333 = vmatpush.bf16.msra.mxu0 %v324
      %334 = vmatpush.bf16.msra.mxu0 %v323
      %335 = vmatpush.bf16.msra.mxu0 %v322
      %336 = vmatpush.bf16.msra.mxu0 %v321
      %337 = vmatpush.bf16.msra.mxu0 %v320
      %338 = vmatpush.bf16.msra.mxu0 %v319
      %339 = vmatpush.bf16.msra.mxu0 %v318
      %340 = vmatpush.bf16.msra.mxu0 %v317
      %341 = vmatmul.bf16.gmra.mxu0 %v269
      %v342 = vpop.f32.mrf.mxu0
      %v343 = vadd.f32 0.0, %v342
      %v344 = vpop.f32.mrf.mxu0
      %345 = vmatmul.bf16.gmra.mxu0 %v270
      %v346 = vpop.f32.mrf.mxu0
      %v347 = vadd.f32 0.0, %v346
      %v348 = vpop.f32.mrf.mxu0
      %349 = vmatmul.bf16.gmra.mxu0 %v271
      %v350 = vpop.f32.mrf.mxu0
      %v351 = vadd.f32 0.0, %v350
      %v352 = vpop.f32.mrf.mxu0
      %353 = vmatmul.bf16.gmra.mxu0 %v272
      %v354 = vpop.f32.mrf.mxu0
      %v355 = vadd.f32 0.0, %v354
      %v356 = vpop.f32.mrf.mxu0
      %357 = vmatmul.bf16.gmra.mxu0 %v273
      %v358 = vpop.f32.mrf.mxu0
      %v359 = vadd.f32 0.0, %v358
      %v360 = vpop.f32.mrf.mxu0
      %361 = vmatmul.bf16.gmra.mxu0 %v274
      %v362 = vpop.f32.mrf.mxu0
      %v363 = vadd.f32 0.0, %v362
      %v364 = vpop.f32.mrf.mxu0
      %365 = vmatmul.bf16.gmra.mxu0 %v275
      %v366 = vpop.f32.mrf.mxu0
      %v367 = vadd.f32 0.0, %v366
      %v368 = vpop.f32.mrf.mxu0
      %369 = vmatmul.bf16.gmra.mxu0 %v276
      %v370 = vpop.f32.mrf.mxu0
      %v371 = vadd.f32 0.0, %v370
      %v372 = vpop.f32.mrf.mxu0
      %373 = vdwg.mxu0
      %v390 = vunpack.c.l.b16 %v171
      %v391 = vunpack.c.l.b16 %v172
      %v392 = vunpack.c.l.b16 %v173
      %v393 = vunpack.c.l.b16 %v174
      %v394 = vunpack.c.l.b16 %v175
      %v395 = vunpack.c.l.b16 %v176
      %v396 = vunpack.c.l.b16 %v177
      %v397 = vunpack.c.l.b16 %v178
      %v398 = vunpack.c.l.b16 %v179
      %v399 = vunpack.c.l.b16 %v180
      %v400 = vunpack.c.l.b16 %v181
      %v401 = vunpack.c.l.b16 %v182
      %v402 = vunpack.c.l.b16 %v183
      %v403 = vunpack.c.l.b16 %v184
      %v404 = vunpack.c.l.b16 %v185
      %v405 = vunpack.c.l.b16 %v186
      %v406 = vpack.c.b16 %v391, %v390
      %v407 = vpack.c.b16 %v393, %v392
      %v408 = vpack.c.b16 %v395, %v394
      %v409 = vpack.c.b16 %v397, %v396
      %v410 = vpack.c.b16 %v399, %v398
      %v411 = vpack.c.b16 %v401, %v400
      %v412 = vpack.c.b16 %v403, %v402
      %v413 = vpack.c.b16 %v405, %v404
      %v438 = vunpack.c.l.b16 %v187
      %v439 = vunpack.c.l.b16 %v188
      %v440 = vunpack.c.l.b16 %v189
      %v441 = vunpack.c.l.b16 %v190
      %v442 = vunpack.c.l.b16 %v191
      %v443 = vunpack.c.l.b16 %v192
      %v444 = vunpack.c.l.b16 %v193
      %v445 = vunpack.c.l.b16 %v194
      %v446 = vunpack.c.l.b16 %v195
      %v447 = vunpack.c.l.b16 %v196
      %v448 = vunpack.c.l.b16 %v197
      %v449 = vunpack.c.l.b16 %v198
      %v450 = vunpack.c.l.b16 %v199
      %v451 = vunpack.c.l.b16 %v200
      %v452 = vunpack.c.l.b16 %v201
      %v453 = vunpack.c.l.b16 %v202
      %v454 = vpack.c.b16 %v439, %v438
      %v455 = vpack.c.b16 %v441, %v440
      %v456 = vpack.c.b16 %v443, %v442
      %v457 = vpack.c.b16 %v445, %v444
      %v458 = vpack.c.b16 %v447, %v446
      %v459 = vpack.c.b16 %v449, %v448
      %v460 = vpack.c.b16 %v451, %v450
      %v461 = vpack.c.b16 %v453, %v452
      %470 = vmatpush.bf16.msra.mxu0 %v461
      %471 = vmatpush.bf16.msra.mxu0 %v460
      %472 = vmatpush.bf16.msra.mxu0 %v459
      %473 = vmatpush.bf16.msra.mxu0 %v458
      %474 = vmatpush.bf16.msra.mxu0 %v457
      %475 = vmatpush.bf16.msra.mxu0 %v456
      %476 = vmatpush.bf16.msra.mxu0 %v455
      %477 = vmatpush.bf16.msra.mxu0 %v454
      %478 = vmatmul.bf16.gmra.mxu0 %v406
      %v479 = vpop.f32.mrf.mxu0
      %v480 = vadd.f32 %v343, %v479
      %v481 = vpop.f32.mrf.mxu0
      %482 = vmatmul.bf16.gmra.mxu0 %v407
      %v483 = vpop.f32.mrf.mxu0
      %v484 = vadd.f32 %v347, %v483
      %v485 = vpop.f32.mrf.mxu0
      %486 = vmatmul.bf16.gmra.mxu0 %v408
      %v487 = vpop.f32.mrf.mxu0
      %v488 = vadd.f32 %v351, %v487
      %v489 = vpop.f32.mrf.mxu0
      %490 = vmatmul.bf16.gmra.mxu0 %v409
      %v491 = vpop.f32.mrf.mxu0
      %v492 = vadd.f32 %v355, %v491
      %v493 = vpop.f32.mrf.mxu0
      %494 = vmatmul.bf16.gmra.mxu0 %v410
      %v495 = vpop.f32.mrf.mxu0
      %v496 = vadd.f32 %v359, %v495
      %v497 = vpop.f32.mrf.mxu0
      %498 = vmatmul.bf16.gmra.mxu0 %v411
      %v499 = vpop.f32.mrf.mxu0
      %v500 = vadd.f32 %v363, %v499
      %v501 = vpop.f32.mrf.mxu0
      %502 = vmatmul.bf16.gmra.mxu0 %v412
      %v503 = vpop.f32.mrf.mxu0
      %v504 = vadd.f32 %v367, %v503
      %v505 = vpop.f32.mrf.mxu0
      %506 = vmatmul.bf16.gmra.mxu0 %v413
      %v507 = vpop.f32.mrf.mxu0
      %v508 = vadd.f32 %v371, %v507
      %v509 = vpop.f32.mrf.mxu0
      %510 = vdwg.mxu0
      %v511 = vld [vmem:[%s165] sm:$0xf]
      %v512 = vld [vmem:[%s165 + $0x4] sm:$0xf]
      %v513 = vld [vmem:[%s165 + $0x8] sm:$0xf]
      %v514 = vld [vmem:[%s165 + $0xc] sm:$0xf]
      %v515 = vld [vmem:[%s165 + $0x10] sm:$0xf]
      %v516 = vld [vmem:[%s165 + $0x14] sm:$0xf]
      %v517 = vld [vmem:[%s165 + $0x18] sm:$0xf]
      %v518 = vld [vmem:[%s165 + $0x1c] sm:$0xf]
      %v519 = vld [vmem:[%s165 + $0x20] sm:$0xf]
      %v520 = vld [vmem:[%s165 + $0x24] sm:$0xf]
      %v521 = vld [vmem:[%s165 + $0x28] sm:$0xf]
      %v522 = vld [vmem:[%s165 + $0x2c] sm:$0xf]
      %v523 = vld [vmem:[%s165 + $0x30] sm:$0xf]
      %v524 = vld [vmem:[%s165 + $0x34] sm:$0xf]
      %v525 = vld [vmem:[%s165 + $0x38] sm:$0xf]
      %v526 = vld [vmem:[%s165 + $0x3c] sm:$0xf]
      %v527 = vld [vmem:[%s165 + $0x40] sm:$0x1]
      %s528 = scalar_lea.vmem %s1, 128
      %v529 = vld [vmem:[%s528] sm:$0xf]
      %v530 = vld [vmem:[%s528 + $0x4] sm:$0xf]
      %v531 = vld [vmem:[%s528 + $0x8] sm:$0xf]
      %v532 = vld [vmem:[%s528 + $0xc] sm:$0xf]
      %v533 = vld [vmem:[%s528 + $0x10] sm:$0xf]
      %v534 = vld [vmem:[%s528 + $0x14] sm:$0xf]
      %v535 = vld [vmem:[%s528 + $0x18] sm:$0xf]
      %v536 = vld [vmem:[%s528 + $0x1c] sm:$0xf]
      %v537 = vld [vmem:[%s528 + $0x20] sm:$0xf]
      %v538 = vld [vmem:[%s528 + $0x24] sm:$0xf]
      %v539 = vld [vmem:[%s528 + $0x28] sm:$0xf]
      %v540 = vld [vmem:[%s528 + $0x2c] sm:$0xf]
      %v541 = vld [vmem:[%s528 + $0x30] sm:$0xf]
      %v542 = vld [vmem:[%s528 + $0x34] sm:$0xf]
      %v543 = vld [vmem:[%s528 + $0x38] sm:$0xf]
      %v544 = vld [vmem:[%s528 + $0x3c] sm:$0xf]
      %v562 = vunpack.c.l.b16 %v511
      %v563 = vunpack.c.l.b16 %v512
      %v564 = vunpack.c.l.b16 %v513
      %v565 = vunpack.c.l.b16 %v514
      %v566 = vunpack.c.l.b16 %v515
      %v567 = vunpack.c.l.b16 %v516
      %v568 = vunpack.c.l.b16 %v517
      %v569 = vunpack.c.l.b16 %v518
      %v570 = vunpack.c.l.b16 %v519
      %v571 = vunpack.c.l.b16 %v520
      %v572 = vunpack.c.l.b16 %v521
      %v573 = vunpack.c.l.b16 %v522
      %v574 = vunpack.c.l.b16 %v523
      %v575 = vunpack.c.l.b16 %v524
      %v576 = vunpack.c.l.b16 %v525
      %v577 = vunpack.c.l.b16 %v526
      %v578 = vunpack.c.l.b16 %v527
      %v579 = vpack.c.b16 %v563, %v562
      %v580 = vpack.c.b16 %v565, %v564
      %v581 = vpack.c.b16 %v567, %v566
      %v582 = vpack.c.b16 %v569, %v568
      %v583 = vpack.c.b16 %v571, %v570
      %v584 = vpack.c.b16 %v573, %v572
      %v585 = vpack.c.b16 %v575, %v574
      %v586 = vpack.c.b16 %v577, %v576
      %v587 = vpack.c.b16 %v578, %v578
      %vm588 = vsmask.f32 7424
      %v590 = vshrl.u32 %v579, 16
      %v592 = vshll.u32 %v579, 16
      %v594 = vrot.slane %v592, 1
      %v595 = vor.u32 %v590, %v594
      %v597 = vshll.u32 %v580, 16
      %v599 = vrot.slane %v597, 1
      %v600 = vsel %vm588, %v595, %v599
      %v601 = vshrl.u32 %v580, 16
      %v603 = vor.u32 %v601, %v599
      %v605 = vshll.u32 %v581, 16
      %v607 = vrot.slane %v605, 1
      %v608 = vsel %vm588, %v603, %v607
      %v609 = vshrl.u32 %v581, 16
      %v611 = vor.u32 %v609, %v607
      %v613 = vshll.u32 %v582, 16
      %v615 = vrot.slane %v613, 1
      %v616 = vsel %vm588, %v611, %v615
      %v617 = vshrl.u32 %v582, 16
      %v619 = vor.u32 %v617, %v615
      %v621 = vshll.u32 %v583, 16
      %v623 = vrot.slane %v621, 1
      %v624 = vsel %vm588, %v619, %v623
      %v625 = vshrl.u32 %v583, 16
      %v627 = vor.u32 %v625, %v623
      %v629 = vshll.u32 %v584, 16
      %v631 = vrot.slane %v629, 1
      %v632 = vsel %vm588, %v627, %v631
      %v633 = vshrl.u32 %v584, 16
      %v635 = vor.u32 %v633, %v631
      %v637 = vshll.u32 %v585, 16
      %v639 = vrot.slane %v637, 1
      %v640 = vsel %vm588, %v635, %v639
      %v641 = vshrl.u32 %v585, 16
      %v643 = vor.u32 %v641, %v639
      %v645 = vshll.u32 %v586, 16
      %v647 = vrot.slane %v645, 1
      %v648 = vsel %vm588, %v643, %v647
      %v649 = vshrl.u32 %v586, 16
      %v651 = vor.u32 %v649, %v647
      %v653 = vshll.u32 %v587, 16
      %v655 = vrot.slane %v653, 1
      %v656 = vsel %vm588, %v651, %v655
      %v681 = vunpack.c.l.b16 %v529
      %v682 = vunpack.c.l.b16 %v530
      %v683 = vunpack.c.l.b16 %v531
      %v684 = vunpack.c.l.b16 %v532
      %v685 = vunpack.c.l.b16 %v533
      %v686 = vunpack.c.l.b16 %v534
      %v687 = vunpack.c.l.b16 %v535
      %v688 = vunpack.c.l.b16 %v536
      %v689 = vunpack.c.l.b16 %v537
      %v690 = vunpack.c.l.b16 %v538
      %v691 = vunpack.c.l.b16 %v539
      %v692 = vunpack.c.l.b16 %v540
      %v693 = vunpack.c.l.b16 %v541
      %v694 = vunpack.c.l.b16 %v542
      %v695 = vunpack.c.l.b16 %v543
      %v696 = vunpack.c.l.b16 %v544
      %v697 = vpack.c.b16 %v682, %v681
      %v698 = vpack.c.b16 %v684, %v683
      %v699 = vpack.c.b16 %v686, %v685
      %v700 = vpack.c.b16 %v688, %v687
      %v701 = vpack.c.b16 %v690, %v689
      %v702 = vpack.c.b16 %v692, %v691
      %v703 = vpack.c.b16 %v694, %v693
      %v704 = vpack.c.b16 %v696, %v695
      %713 = vmatpush.bf16.msra.mxu0 %v704
      %714 = vmatpush.bf16.msra.mxu0 %v703
      %715 = vmatpush.bf16.msra.mxu0 %v702
      %716 = vmatpush.bf16.msra.mxu0 %v701
      %717 = vmatpush.bf16.msra.mxu0 %v700
      %718 = vmatpush.bf16.msra.mxu0 %v699
      %719 = vmatpush.bf16.msra.mxu0 %v698
      %720 = vmatpush.bf16.msra.mxu0 %v697
      %721 = vmatmul.bf16.gmra.mxu0 %v600
      %v722 = vpop.f32.mrf.mxu0
      %v723 = vadd.f32 0.0, %v722
      %v724 = vpop.f32.mrf.mxu0
      %725 = vmatmul.bf16.gmra.mxu0 %v608
      %v726 = vpop.f32.mrf.mxu0
      %v727 = vadd.f32 0.0, %v726
      %v728 = vpop.f32.mrf.mxu0
      %729 = vmatmul.bf16.gmra.mxu0 %v616
      %v730 = vpop.f32.mrf.mxu0
      %v731 = vadd.f32 0.0, %v730
      %v732 = vpop.f32.mrf.mxu0
      %733 = vmatmul.bf16.gmra.mxu0 %v624
      %v734 = vpop.f32.mrf.mxu0
      %v735 = vadd.f32 0.0, %v734
      %v736 = vpop.f32.mrf.mxu0
      %737 = vmatmul.bf16.gmra.mxu0 %v632
      %v738 = vpop.f32.mrf.mxu0
      %v739 = vadd.f32 0.0, %v738
      %v740 = vpop.f32.mrf.mxu0
      %741 = vmatmul.bf16.gmra.mxu0 %v640
      %v742 = vpop.f32.mrf.mxu0
      %v743 = vadd.f32 0.0, %v742
      %v744 = vpop.f32.mrf.mxu0
      %745 = vmatmul.bf16.gmra.mxu0 %v648
      %v746 = vpop.f32.mrf.mxu0
      %v747 = vadd.f32 0.0, %v746
      %v748 = vpop.f32.mrf.mxu0
      %749 = vmatmul.bf16.gmra.mxu0 %v656
      %v750 = vpop.f32.mrf.mxu0
      %v751 = vadd.f32 0.0, %v750
      %v752 = vpop.f32.mrf.mxu0
      %753 = vdwg.mxu0
      %v754 = vadd.f32 %v480, %v723
      %v755 = vadd.f32 %v484, %v727
      %v756 = vadd.f32 %v488, %v731
      %v757 = vadd.f32 %v492, %v735
      %v758 = vadd.f32 %v496, %v739
      %v759 = vadd.f32 %v500, %v743
      %v760 = vadd.f32 %v504, %v747
      %v761 = vadd.f32 %v508, %v751
      %s762 = scalar_lea.vmem %s165, 160
      %v763 = vld [vmem:[%s762] sm:$0xf]
      %v764 = vld [vmem:[%s762 + $0x4] sm:$0xf]
      %v765 = vld [vmem:[%s762 + $0x8] sm:$0xf]
      %v766 = vld [vmem:[%s762 + $0xc] sm:$0xf]
      %v767 = vld [vmem:[%s762 + $0x10] sm:$0xf]
      %v768 = vld [vmem:[%s762 + $0x14] sm:$0xf]
      %v769 = vld [vmem:[%s762 + $0x18] sm:$0xf]
      %v770 = vld [vmem:[%s762 + $0x1c] sm:$0xf]
      %v771 = vld [vmem:[%s762 + $0x20] sm:$0xf]
      %v772 = vld [vmem:[%s762 + $0x24] sm:$0xf]
      %v773 = vld [vmem:[%s762 + $0x28] sm:$0xf]
      %v774 = vld [vmem:[%s762 + $0x2c] sm:$0xf]
      %v775 = vld [vmem:[%s762 + $0x30] sm:$0xf]
      %v776 = vld [vmem:[%s762 + $0x34] sm:$0xf]
      %v777 = vld [vmem:[%s762 + $0x38] sm:$0xf]
      %v778 = vld [vmem:[%s762 + $0x3c] sm:$0xf]
      %s779 = scalar_lea.vmem %s1, 192
      %v780 = vld [vmem:[%s779] sm:$0xf]
      %v781 = vld [vmem:[%s779 + $0x4] sm:$0xf]
      %v782 = vld [vmem:[%s779 + $0x8] sm:$0xf]
      %v783 = vld [vmem:[%s779 + $0xc] sm:$0xf]
      %v784 = vld [vmem:[%s779 + $0x10] sm:$0xf]
      %v785 = vld [vmem:[%s779 + $0x14] sm:$0xf]
      %v786 = vld [vmem:[%s779 + $0x18] sm:$0xf]
      %v787 = vld [vmem:[%s779 + $0x1c] sm:$0xf]
      %v788 = vld [vmem:[%s779 + $0x20] sm:$0xf]
      %v789 = vld [vmem:[%s779 + $0x24] sm:$0xf]
      %v790 = vld [vmem:[%s779 + $0x28] sm:$0xf]
      %v791 = vld [vmem:[%s779 + $0x2c] sm:$0xf]
      %v792 = vld [vmem:[%s779 + $0x30] sm:$0xf]
      %v793 = vld [vmem:[%s779 + $0x34] sm:$0xf]
      %v794 = vld [vmem:[%s779 + $0x38] sm:$0xf]
      %v795 = vld [vmem:[%s779 + $0x3c] sm:$0xf]
      %v812 = vunpack.c.l.b16 %v763
      %v813 = vunpack.c.l.b16 %v764
      %v814 = vunpack.c.l.b16 %v765
      %v815 = vunpack.c.l.b16 %v766
      %v816 = vunpack.c.l.b16 %v767
      %v817 = vunpack.c.l.b16 %v768
      %v818 = vunpack.c.l.b16 %v769
      %v819 = vunpack.c.l.b16 %v770
      %v820 = vunpack.c.l.b16 %v771
      %v821 = vunpack.c.l.b16 %v772
      %v822 = vunpack.c.l.b16 %v773
      %v823 = vunpack.c.l.b16 %v774
      %v824 = vunpack.c.l.b16 %v775
      %v825 = vunpack.c.l.b16 %v776
      %v826 = vunpack.c.l.b16 %v777
      %v827 = vunpack.c.l.b16 %v778
      %v828 = vpack.c.b16 %v813, %v812
      %v829 = vpack.c.b16 %v815, %v814
      %v830 = vpack.c.b16 %v817, %v816
      %v831 = vpack.c.b16 %v819, %v818
      %v832 = vpack.c.b16 %v821, %v820
      %v833 = vpack.c.b16 %v823, %v822
      %v834 = vpack.c.b16 %v825, %v824
      %v835 = vpack.c.b16 %v827, %v826
      %v860 = vunpack.c.l.b16 %v780
      %v861 = vunpack.c.l.b16 %v781
      %v862 = vunpack.c.l.b16 %v782
      %v863 = vunpack.c.l.b16 %v783
      %v864 = vunpack.c.l.b16 %v784
      %v865 = vunpack.c.l.b16 %v785
      %v866 = vunpack.c.l.b16 %v786
      %v867 = vunpack.c.l.b16 %v787
      %v868 = vunpack.c.l.b16 %v788
      %v869 = vunpack.c.l.b16 %v789
      %v870 = vunpack.c.l.b16 %v790
      %v871 = vunpack.c.l.b16 %v791
      %v872 = vunpack.c.l.b16 %v792
      %v873 = vunpack.c.l.b16 %v793
      %v874 = vunpack.c.l.b16 %v794
      %v875 = vunpack.c.l.b16 %v795
      %v876 = vpack.c.b16 %v861, %v860
      %v877 = vpack.c.b16 %v863, %v862
      %v878 = vpack.c.b16 %v865, %v864
      %v879 = vpack.c.b16 %v867, %v866
      %v880 = vpack.c.b16 %v869, %v868
      %v881 = vpack.c.b16 %v871, %v870
      %v882 = vpack.c.b16 %v873, %v872
      %v883 = vpack.c.b16 %v875, %v874
      %892 = vmatpush.bf16.msra.mxu0 %v883
      %893 = vmatpush.bf16.msra.mxu0 %v882
      %894 = vmatpush.bf16.msra.mxu0 %v881
      %895 = vmatpush.bf16.msra.mxu0 %v880
      %896 = vmatpush.bf16.msra.mxu0 %v879
      %897 = vmatpush.bf16.msra.mxu0 %v878
      %898 = vmatpush.bf16.msra.mxu0 %v877
      %899 = vmatpush.bf16.msra.mxu0 %v876
      %900 = vmatmul.bf16.gmra.mxu0 %v828
      %v901 = vpop.f32.mrf.mxu0
      %v902 = vadd.f32 0.0, %v901
      %v903 = vpop.f32.mrf.mxu0
      %904 = vmatmul.bf16.gmra.mxu0 %v829
      %v905 = vpop.f32.mrf.mxu0
      %v906 = vadd.f32 0.0, %v905
      %v907 = vpop.f32.mrf.mxu0
      %908 = vmatmul.bf16.gmra.mxu0 %v830
      %v909 = vpop.f32.mrf.mxu0
      %v910 = vadd.f32 0.0, %v909
      %v911 = vpop.f32.mrf.mxu0
      %912 = vmatmul.bf16.gmra.mxu0 %v831
      %v913 = vpop.f32.mrf.mxu0
      %v914 = vadd.f32 0.0, %v913
      %v915 = vpop.f32.mrf.mxu0
      %916 = vmatmul.bf16.gmra.mxu0 %v832
      %v917 = vpop.f32.mrf.mxu0
      %v918 = vadd.f32 0.0, %v917
      %v919 = vpop.f32.mrf.mxu0
      %920 = vmatmul.bf16.gmra.mxu0 %v833
      %v921 = vpop.f32.mrf.mxu0
      %v922 = vadd.f32 0.0, %v921
      %v923 = vpop.f32.mrf.mxu0
      %924 = vmatmul.bf16.gmra.mxu0 %v834
      %v925 = vpop.f32.mrf.mxu0
      %v926 = vadd.f32 0.0, %v925
      %v927 = vpop.f32.mrf.mxu0
      %928 = vmatmul.bf16.gmra.mxu0 %v835
      %v929 = vpop.f32.mrf.mxu0
      %v930 = vadd.f32 0.0, %v929
      %v931 = vpop.f32.mrf.mxu0
      %932 = vdwg.mxu0
      %v933 = vadd.f32 %v754, %v902
      %v934 = vadd.f32 %v755, %v906
      %v935 = vadd.f32 %v756, %v910
      %v936 = vadd.f32 %v757, %v914
      %v937 = vadd.f32 %v758, %v918
      %v938 = vadd.f32 %v759, %v922
      %v939 = vadd.f32 %v760, %v926
      %v940 = vadd.f32 %v761, %v930
      %s941 = scalar_lea.vmem %s165, 240
      %v942 = vld [vmem:[%s941] sm:$0xf]
      %v943 = vld [vmem:[%s941 + $0x4] sm:$0xf]
      %v944 = vld [vmem:[%s941 + $0x8] sm:$0xf]
      %v945 = vld [vmem:[%s941 + $0xc] sm:$0xf]
      %v946 = vld [vmem:[%s941 + $0x10] sm:$0xf]
      %v947 = vld [vmem:[%s941 + $0x14] sm:$0xf]
      %v948 = vld [vmem:[%s941 + $0x18] sm:$0xf]
      %v949 = vld [vmem:[%s941 + $0x1c] sm:$0xf]
      %v950 = vld [vmem:[%s941 + $0x20] sm:$0xf]
      %v951 = vld [vmem:[%s941 + $0x24] sm:$0xf]
      %v952 = vld [vmem:[%s941 + $0x28] sm:$0xf]
      %v953 = vld [vmem:[%s941 + $0x2c] sm:$0xf]
      %v954 = vld [vmem:[%s941 + $0x30] sm:$0xf]
      %v955 = vld [vmem:[%s941 + $0x34] sm:$0xf]
      %v956 = vld [vmem:[%s941 + $0x38] sm:$0xf]
      %v957 = vld [vmem:[%s941 + $0x3c] sm:$0xf]
      %s958 = scalar_lea.vmem %s1, 256
      %v959 = vld [vmem:[%s958] sm:$0xf]
      %v960 = vld [vmem:[%s958 + $0x4] sm:$0xf]
      %v961 = vld [vmem:[%s958 + $0x8] sm:$0xf]
      %v962 = vld [vmem:[%s958 + $0xc] sm:$0xf]
      %v963 = vld [vmem:[%s958 + $0x10] sm:$0xf]
      %v964 = vld [vmem:[%s958 + $0x14] sm:$0xf]
      %v965 = vld [vmem:[%s958 + $0x18] sm:$0xf]
      %v966 = vld [vmem:[%s958 + $0x1c] sm:$0xf]
      %v967 = vld [vmem:[%s958 + $0x20] sm:$0xf]
      %v968 = vld [vmem:[%s958 + $0x24] sm:$0xf]
      %v969 = vld [vmem:[%s958 + $0x28] sm:$0xf]
      %v970 = vld [vmem:[%s958 + $0x2c] sm:$0xf]
      %v971 = vld [vmem:[%s958 + $0x30] sm:$0xf]
      %v972 = vld [vmem:[%s958 + $0x34] sm:$0xf]
      %v973 = vld [vmem:[%s958 + $0x38] sm:$0xf]
      %v974 = vld [vmem:[%s958 + $0x3c] sm:$0xf]
      %v991 = vunpack.c.l.b16 %v942
      %v992 = vunpack.c.l.b16 %v943
      %v993 = vunpack.c.l.b16 %v944
      %v994 = vunpack.c.l.b16 %v945
      %v995 = vunpack.c.l.b16 %v946
      %v996 = vunpack.c.l.b16 %v947
      %v997 = vunpack.c.l.b16 %v948
      %v998 = vunpack.c.l.b16 %v949
      %v999 = vunpack.c.l.b16 %v950
      %v1000 = vunpack.c.l.b16 %v951
      %v1001 = vunpack.c.l.b16 %v952
      %v1002 = vunpack.c.l.b16 %v953
      %v1003 = vunpack.c.l.b16 %v954
      %v1004 = vunpack.c.l.b16 %v955
      %v1005 = vunpack.c.l.b16 %v956
      %v1006 = vunpack.c.l.b16 %v957
      %v1007 = vpack.c.b16 %v992, %v991
      %v1008 = vpack.c.b16 %v994, %v993
      %v1009 = vpack.c.b16 %v996, %v995
      %v1010 = vpack.c.b16 %v998, %v997
      %v1011 = vpack.c.b16 %v1000, %v999
      %v1012 = vpack.c.b16 %v1002, %v1001
      %v1013 = vpack.c.b16 %v1004, %v1003
      %v1014 = vpack.c.b16 %v1006, %v1005
      %v1039 = vunpack.c.l.b16 %v959
      %v1040 = vunpack.c.l.b16 %v960
      %v1041 = vunpack.c.l.b16 %v961
      %v1042 = vunpack.c.l.b16 %v962
      %v1043 = vunpack.c.l.b16 %v963
      %v1044 = vunpack.c.l.b16 %v964
      %v1045 = vunpack.c.l.b16 %v965
      %v1046 = vunpack.c.l.b16 %v966
      %v1047 = vunpack.c.l.b16 %v967
      %v1048 = vunpack.c.l.b16 %v968
      %v1049 = vunpack.c.l.b16 %v969
      %v1050 = vunpack.c.l.b16 %v970
      %v1051 = vunpack.c.l.b16 %v971
      %v1052 = vunpack.c.l.b16 %v972
      %v1053 = vunpack.c.l.b16 %v973
      %v1054 = vunpack.c.l.b16 %v974
      %v1055 = vpack.c.b16 %v1040, %v1039
      %v1056 = vpack.c.b16 %v1042, %v1041
      %v1057 = vpack.c.b16 %v1044, %v1043
      %v1058 = vpack.c.b16 %v1046, %v1045
      %v1059 = vpack.c.b16 %v1048, %v1047
      %v1060 = vpack.c.b16 %v1050, %v1049
      %v1061 = vpack.c.b16 %v1052, %v1051
      %v1062 = vpack.c.b16 %v1054, %v1053
      %1071 = vmatpush.bf16.msra.mxu0 %v1062
      %1072 = vmatpush.bf16.msra.mxu0 %v1061
      %1073 = vmatpush.bf16.msra.mxu0 %v1060
      %1074 = vmatpush.bf16.msra.mxu0 %v1059
      %1075 = vmatpush.bf16.msra.mxu0 %v1058
      %1076 = vmatpush.bf16.msra.mxu0 %v1057
      %1077 = vmatpush.bf16.msra.mxu0 %v1056
      %1078 = vmatpush.bf16.msra.mxu0 %v1055
      %1079 = vmatmul.bf16.gmra.mxu0 %v1007
      %v1080 = vpop.f32.mrf.mxu0
      %v1081 = vadd.f32 0.0, %v1080
      %v1082 = vpop.f32.mrf.mxu0
      %1083 = vmatmul.bf16.gmra.mxu0 %v1008
      %v1084 = vpop.f32.mrf.mxu0
      %v1085 = vadd.f32 0.0, %v1084
      %v1086 = vpop.f32.mrf.mxu0
      %1087 = vmatmul.bf16.gmra.mxu0 %v1009
      %v1088 = vpop.f32.mrf.mxu0
      %v1089 = vadd.f32 0.0, %v1088
      %v1090 = vpop.f32.mrf.mxu0
      %1091 = vmatmul.bf16.gmra.mxu0 %v1010
      %v1092 = vpop.f32.mrf.mxu0
      %v1093 = vadd.f32 0.0, %v1092
      %v1094 = vpop.f32.mrf.mxu0
      %1095 = vmatmul.bf16.gmra.mxu0 %v1011
      %v1096 = vpop.f32.mrf.mxu0
      %v1097 = vadd.f32 0.0, %v1096
      %v1098 = vpop.f32.mrf.mxu0
      %1099 = vmatmul.bf16.gmra.mxu0 %v1012
      %v1100 = vpop.f32.mrf.mxu0
      %v1101 = vadd.f32 0.0, %v1100
      %v1102 = vpop.f32.mrf.mxu0
      %1103 = vmatmul.bf16.gmra.mxu0 %v1013
      %v1104 = vpop.f32.mrf.mxu0
      %v1105 = vadd.f32 0.0, %v1104
      %v1106 = vpop.f32.mrf.mxu0
      %1107 = vmatmul.bf16.gmra.mxu0 %v1014
      %v1108 = vpop.f32.mrf.mxu0
      %v1109 = vadd.f32 0.0, %v1108
      %v1110 = vpop.f32.mrf.mxu0
      %1111 = vdwg.mxu0
      %v1112 = vadd.f32 %v933, %v1081
      %v1113 = vadd.f32 %v934, %v1085
      %v1114 = vadd.f32 %v935, %v1089
      %v1115 = vadd.f32 %v936, %v1093
      %v1116 = vadd.f32 %v937, %v1097
      %v1117 = vadd.f32 %v938, %v1101
      %v1118 = vadd.f32 %v939, %v1105
      %v1119 = vadd.f32 %v940, %v1109
      %v1120 = vld [vmem:[%s762] sm:$0xf]
      %v1121 = vld [vmem:[%s762 + $0x4] sm:$0xf]
      %v1122 = vld [vmem:[%s762 + $0x8] sm:$0xf]
      %v1123 = vld [vmem:[%s762 + $0xc] sm:$0xf]
      %v1124 = vld [vmem:[%s762 + $0x10] sm:$0xf]
      %v1125 = vld [vmem:[%s762 + $0x14] sm:$0xf]
      %v1126 = vld [vmem:[%s762 + $0x18] sm:$0xf]
      %v1127 = vld [vmem:[%s762 + $0x1c] sm:$0xf]
      %v1128 = vld [vmem:[%s762 + $0x20] sm:$0xf]
      %v1129 = vld [vmem:[%s762 + $0x24] sm:$0xf]
      %v1130 = vld [vmem:[%s762 + $0x28] sm:$0xf]
      %v1131 = vld [vmem:[%s762 + $0x2c] sm:$0xf]
      %v1132 = vld [vmem:[%s762 + $0x30] sm:$0xf]
      %v1133 = vld [vmem:[%s762 + $0x34] sm:$0xf]
      %v1134 = vld [vmem:[%s762 + $0x38] sm:$0xf]
      %v1135 = vld [vmem:[%s762 + $0x3c] sm:$0xf]
      %v1136 = vld [vmem:[%s762 + $0x40] sm:$0x1]
      %s1137 = scalar_lea.vmem %s1, 320
      %v1138 = vld [vmem:[%s1137] sm:$0xf]
      %v1139 = vld [vmem:[%s1137 + $0x4] sm:$0xf]
      %v1140 = vld [vmem:[%s1137 + $0x8] sm:$0xf]
      %v1141 = vld [vmem:[%s1137 + $0xc] sm:$0xf]
      %v1142 = vld [vmem:[%s1137 + $0x10] sm:$0xf]
      %v1143 = vld [vmem:[%s1137 + $0x14] sm:$0xf]
      %v1144 = vld [vmem:[%s1137 + $0x18] sm:$0xf]
      %v1145 = vld [vmem:[%s1137 + $0x1c] sm:$0xf]
      %v1146 = vld [vmem:[%s1137 + $0x20] sm:$0xf]
      %v1147 = vld [vmem:[%s1137 + $0x24] sm:$0xf]
      %v1148 = vld [vmem:[%s1137 + $0x28] sm:$0xf]
      %v1149 = vld [vmem:[%s1137 + $0x2c] sm:$0xf]
      %v1150 = vld [vmem:[%s1137 + $0x30] sm:$0xf]
      %v1151 = vld [vmem:[%s1137 + $0x34] sm:$0xf]
      %v1152 = vld [vmem:[%s1137 + $0x38] sm:$0xf]
      %v1153 = vld [vmem:[%s1137 + $0x3c] sm:$0xf]
      %v1171 = vunpack.c.l.b16 %v1120
      %v1172 = vunpack.c.l.b16 %v1121
      %v1173 = vunpack.c.l.b16 %v1122
      %v1174 = vunpack.c.l.b16 %v1123
      %v1175 = vunpack.c.l.b16 %v1124
      %v1176 = vunpack.c.l.b16 %v1125
      %v1177 = vunpack.c.l.b16 %v1126
      %v1178 = vunpack.c.l.b16 %v1127
      %v1179 = vunpack.c.l.b16 %v1128
      %v1180 = vunpack.c.l.b16 %v1129
      %v1181 = vunpack.c.l.b16 %v1130
      %v1182 = vunpack.c.l.b16 %v1131
      %v1183 = vunpack.c.l.b16 %v1132
      %v1184 = vunpack.c.l.b16 %v1133
      %v1185 = vunpack.c.l.b16 %v1134
      %v1186 = vunpack.c.l.b16 %v1135
      %v1187 = vunpack.c.l.b16 %v1136
      %v1188 = vpack.c.b16 %v1172, %v1171
      %v1189 = vpack.c.b16 %v1174, %v1173
      %v1190 = vpack.c.b16 %v1176, %v1175
      %v1191 = vpack.c.b16 %v1178, %v1177
      %v1192 = vpack.c.b16 %v1180, %v1179
      %v1193 = vpack.c.b16 %v1182, %v1181
      %v1194 = vpack.c.b16 %v1184, %v1183
      %v1195 = vpack.c.b16 %v1186, %v1185
      %v1196 = vpack.c.b16 %v1187, %v1187
      %v1198 = vshrl.u32 %v1188, 16
      %v1200 = vshll.u32 %v1188, 16
      %v1202 = vrot.slane %v1200, 1
      %v1203 = vor.u32 %v1198, %v1202
      %v1205 = vshll.u32 %v1189, 16
      %v1207 = vrot.slane %v1205, 1
      %v1208 = vsel %vm588, %v1203, %v1207
      %v1209 = vshrl.u32 %v1189, 16
      %v1211 = vor.u32 %v1209, %v1207
      %v1213 = vshll.u32 %v1190, 16
      %v1215 = vrot.slane %v1213, 1
      %v1216 = vsel %vm588, %v1211, %v1215
      %v1217 = vshrl.u32 %v1190, 16
      %v1219 = vor.u32 %v1217, %v1215
      %v1221 = vshll.u32 %v1191, 16
      %v1223 = vrot.slane %v1221, 1
      %v1224 = vsel %vm588, %v1219, %v1223
      %v1225 = vshrl.u32 %v1191, 16
      %v1227 = vor.u32 %v1225, %v1223
      %v1229 = vshll.u32 %v1192, 16
      %v1231 = vrot.slane %v1229, 1
      %v1232 = vsel %vm588, %v1227, %v1231
      %v1233 = vshrl.u32 %v1192, 16
      %v1235 = vor.u32 %v1233, %v1231
      %v1237 = vshll.u32 %v1193, 16
      %v1239 = vrot.slane %v1237, 1
      %v1240 = vsel %vm588, %v1235, %v1239
      %v1241 = vshrl.u32 %v1193, 16
      %v1243 = vor.u32 %v1241, %v1239
      %v1245 = vshll.u32 %v1194, 16
      %v1247 = vrot.slane %v1245, 1
      %v1248 = vsel %vm588, %v1243, %v1247
      %v1249 = vshrl.u32 %v1194, 16
      %v1251 = vor.u32 %v1249, %v1247
      %v1253 = vshll.u32 %v1195, 16
      %v1255 = vrot.slane %v1253, 1
      %v1256 = vsel %vm588, %v1251, %v1255
      %v1257 = vshrl.u32 %v1195, 16
      %v1259 = vor.u32 %v1257, %v1255
      %v1261 = vshll.u32 %v1196, 16
      %v1263 = vrot.slane %v1261, 1
      %v1264 = vsel %vm588, %v1259, %v1263
      %v1289 = vunpack.c.l.b16 %v1138
      %v1290 = vunpack.c.l.b16 %v1139
      %v1291 = vunpack.c.l.b16 %v1140
      %v1292 = vunpack.c.l.b16 %v1141
      %v1293 = vunpack.c.l.b16 %v1142
      %v1294 = vunpack.c.l.b16 %v1143
      %v1295 = vunpack.c.l.b16 %v1144
      %v1296 = vunpack.c.l.b16 %v1145
      %v1297 = vunpack.c.l.b16 %v1146
      %v1298 = vunpack.c.l.b16 %v1147
      %v1299 = vunpack.c.l.b16 %v1148
      %v1300 = vunpack.c.l.b16 %v1149
      %v1301 = vunpack.c.l.b16 %v1150
      %v1302 = vunpack.c.l.b16 %v1151
      %v1303 = vunpack.c.l.b16 %v1152
      %v1304 = vunpack.c.l.b16 %v1153
      %v1305 = vpack.c.b16 %v1290, %v1289
      %v1306 = vpack.c.b16 %v1292, %v1291
      %v1307 = vpack.c.b16 %v1294, %v1293
      %v1308 = vpack.c.b16 %v1296, %v1295
      %v1309 = vpack.c.b16 %v1298, %v1297
      %v1310 = vpack.c.b16 %v1300, %v1299
      %v1311 = vpack.c.b16 %v1302, %v1301
      %v1312 = vpack.c.b16 %v1304, %v1303
      %1321 = vmatpush.bf16.msra.mxu0 %v1312
      %1322 = vmatpush.bf16.msra.mxu0 %v1311
      %1323 = vmatpush.bf16.msra.mxu0 %v1310
      %1324 = vmatpush.bf16.msra.mxu0 %v1309
      %1325 = vmatpush.bf16.msra.mxu0 %v1308
      %1326 = vmatpush.bf16.msra.mxu0 %v1307
      %1327 = vmatpush.bf16.msra.mxu0 %v1306
      %1328 = vmatpush.bf16.msra.mxu0 %v1305
      %1329 = vmatmul.bf16.gmra.mxu0 %v1208
      %v1330 = vpop.f32.mrf.mxu0
      %v1331 = vadd.f32 0.0, %v1330
      %v1332 = vpop.f32.mrf.mxu0
      %1333 = vmatmul.bf16.gmra.mxu0 %v1216
      %v1334 = vpop.f32.mrf.mxu0
      %v1335 = vadd.f32 0.0, %v1334
      %v1336 = vpop.f32.mrf.mxu0
      %1337 = vmatmul.bf16.gmra.mxu0 %v1224
      %v1338 = vpop.f32.mrf.mxu0
      %v1339 = vadd.f32 0.0, %v1338
      %v1340 = vpop.f32.mrf.mxu0
      %1341 = vmatmul.bf16.gmra.mxu0 %v1232
      %v1342 = vpop.f32.mrf.mxu0
      %v1343 = vadd.f32 0.0, %v1342
      %v1344 = vpop.f32.mrf.mxu0
      %1345 = vmatmul.bf16.gmra.mxu0 %v1240
      %v1346 = vpop.f32.mrf.mxu0
      %v1347 = vadd.f32 0.0, %v1346
      %v1348 = vpop.f32.mrf.mxu0
      %1349 = vmatmul.bf16.gmra.mxu0 %v1248
      %v1350 = vpop.f32.mrf.mxu0
      %v1351 = vadd.f32 0.0, %v1350
      %v1352 = vpop.f32.mrf.mxu0
      %1353 = vmatmul.bf16.gmra.mxu0 %v1256
      %v1354 = vpop.f32.mrf.mxu0
      %v1355 = vadd.f32 0.0, %v1354
      %v1356 = vpop.f32.mrf.mxu0
      %1357 = vmatmul.bf16.gmra.mxu0 %v1264
      %v1358 = vpop.f32.mrf.mxu0
      %v1359 = vadd.f32 0.0, %v1358
      %v1360 = vpop.f32.mrf.mxu0
      %1361 = vdwg.mxu0
      %v1362 = vadd.f32 %v1112, %v1331
      %v1363 = vadd.f32 %v1113, %v1335
      %v1364 = vadd.f32 %v1114, %v1339
      %v1365 = vadd.f32 %v1115, %v1343
      %v1366 = vadd.f32 %v1116, %v1347
      %v1367 = vadd.f32 %v1117, %v1351
      %v1368 = vadd.f32 %v1118, %v1355
      %v1369 = vadd.f32 %v1119, %v1359
      %v1370 = vld [vmem:[%s165 + $0x8] sm:$0xf]
      %v1371 = vld [vmem:[%s165 + $0xc] sm:$0xf]
      %v1372 = vld [vmem:[%s165 + $0x10] sm:$0xf]
      %v1373 = vld [vmem:[%s165 + $0x14] sm:$0xf]
      %v1374 = vld [vmem:[%s165 + $0x18] sm:$0xf]
      %v1375 = vld [vmem:[%s165 + $0x1c] sm:$0xf]
      %v1376 = vld [vmem:[%s165 + $0x20] sm:$0xf]
      %v1377 = vld [vmem:[%s165 + $0x24] sm:$0xf]
      %v1378 = vld [vmem:[%s165 + $0x28] sm:$0xf]
      %v1379 = vld [vmem:[%s165 + $0x2c] sm:$0xf]
      %v1380 = vld [vmem:[%s165 + $0x30] sm:$0xf]
      %v1381 = vld [vmem:[%s165 + $0x34] sm:$0xf]
      %v1382 = vld [vmem:[%s165 + $0x38] sm:$0xf]
      %v1383 = vld [vmem:[%s165 + $0x3c] sm:$0xf]
      %v1384 = vld [vmem:[%s165 + $0x40] sm:$0xf]
      %v1385 = vld [vmem:[%s165 + $0x44] sm:$0xf]
      %s1386 = scalar_lea.vmem %s1, 384
      %v1387 = vld [vmem:[%s1386] sm:$0xf]
      %v1388 = vld [vmem:[%s1386 + $0x4] sm:$0xf]
      %v1389 = vld [vmem:[%s1386 + $0x8] sm:$0xf]
      %v1390 = vld [vmem:[%s1386 + $0xc] sm:$0xf]
      %v1391 = vld [vmem:[%s1386 + $0x10] sm:$0xf]
      %v1392 = vld [vmem:[%s1386 + $0x14] sm:$0xf]
      %v1393 = vld [vmem:[%s1386 + $0x18] sm:$0xf]
      %v1394 = vld [vmem:[%s1386 + $0x1c] sm:$0xf]
      %v1395 = vld [vmem:[%s1386 + $0x20] sm:$0xf]
      %v1396 = vld [vmem:[%s1386 + $0x24] sm:$0xf]
      %v1397 = vld [vmem:[%s1386 + $0x28] sm:$0xf]
      %v1398 = vld [vmem:[%s1386 + $0x2c] sm:$0xf]
      %v1399 = vld [vmem:[%s1386 + $0x30] sm:$0xf]
      %v1400 = vld [vmem:[%s1386 + $0x34] sm:$0xf]
      %v1401 = vld [vmem:[%s1386 + $0x38] sm:$0xf]
      %v1402 = vld [vmem:[%s1386 + $0x3c] sm:$0xf]
      %v1419 = vunpack.c.l.b16 %v1370
      %v1420 = vunpack.c.l.b16 %v1371
      %v1421 = vunpack.c.l.b16 %v1372
      %v1422 = vunpack.c.l.b16 %v1373
      %v1423 = vunpack.c.l.b16 %v1374
      %v1424 = vunpack.c.l.b16 %v1375
      %v1425 = vunpack.c.l.b16 %v1376
      %v1426 = vunpack.c.l.b16 %v1377
      %v1427 = vunpack.c.l.b16 %v1378
      %v1428 = vunpack.c.l.b16 %v1379
      %v1429 = vunpack.c.l.b16 %v1380
      %v1430 = vunpack.c.l.b16 %v1381
      %v1431 = vunpack.c.l.b16 %v1382
      %v1432 = vunpack.c.l.b16 %v1383
      %v1433 = vunpack.c.l.b16 %v1384
      %v1434 = vunpack.c.l.b16 %v1385
      %v1435 = vpack.c.b16 %v1420, %v1419
      %v1436 = vpack.c.b16 %v1422, %v1421
      %v1437 = vpack.c.b16 %v1424, %v1423
      %v1438 = vpack.c.b16 %v1426, %v1425
      %v1439 = vpack.c.b16 %v1428, %v1427
      %v1440 = vpack.c.b16 %v1430, %v1429
      %v1441 = vpack.c.b16 %v1432, %v1431
      %v1442 = vpack.c.b16 %v1434, %v1433
      %v1467 = vunpack.c.l.b16 %v1387
      %v1468 = vunpack.c.l.b16 %v1388
      %v1469 = vunpack.c.l.b16 %v1389
      %v1470 = vunpack.c.l.b16 %v1390
      %v1471 = vunpack.c.l.b16 %v1391
      %v1472 = vunpack.c.l.b16 %v1392
      %v1473 = vunpack.c.l.b16 %v1393
      %v1474 = vunpack.c.l.b16 %v1394
      %v1475 = vunpack.c.l.b16 %v1395
      %v1476 = vunpack.c.l.b16 %v1396
      %v1477 = vunpack.c.l.b16 %v1397
      %v1478 = vunpack.c.l.b16 %v1398
      %v1479 = vunpack.c.l.b16 %v1399
      %v1480 = vunpack.c.l.b16 %v1400
      %v1481 = vunpack.c.l.b16 %v1401
      %v1482 = vunpack.c.l.b16 %v1402
      %v1483 = vpack.c.b16 %v1468, %v1467
      %v1484 = vpack.c.b16 %v1470, %v1469
      %v1485 = vpack.c.b16 %v1472, %v1471
      %v1486 = vpack.c.b16 %v1474, %v1473
      %v1487 = vpack.c.b16 %v1476, %v1475
      %v1488 = vpack.c.b16 %v1478, %v1477
      %v1489 = vpack.c.b16 %v1480, %v1479
      %v1490 = vpack.c.b16 %v1482, %v1481
      %1499 = vmatpush.bf16.msra.mxu0 %v1490
      %1500 = vmatpush.bf16.msra.mxu0 %v1489
      %1501 = vmatpush.bf16.msra.mxu0 %v1488
      %1502 = vmatpush.bf16.msra.mxu0 %v1487
      %1503 = vmatpush.bf16.msra.mxu0 %v1486
      %1504 = vmatpush.bf16.msra.mxu0 %v1485
      %1505 = vmatpush.bf16.msra.mxu0 %v1484
      %1506 = vmatpush.bf16.msra.mxu0 %v1483
      %1507 = vmatmul.bf16.gmra.mxu0 %v1435
      %v1508 = vpop.f32.mrf.mxu0
      %v1509 = vadd.f32 0.0, %v1508
      %v1510 = vpop.f32.mrf.mxu0
      %1511 = vmatmul.bf16.gmra.mxu0 %v1436
      %v1512 = vpop.f32.mrf.mxu0
      %v1513 = vadd.f32 0.0, %v1512
      %v1514 = vpop.f32.mrf.mxu0
      %1515 = vmatmul.bf16.gmra.mxu0 %v1437
      %v1516 = vpop.f32.mrf.mxu0
      %v1517 = vadd.f32 0.0, %v1516
      %v1518 = vpop.f32.mrf.mxu0
      %1519 = vmatmul.bf16.gmra.mxu0 %v1438
      %v1520 = vpop.f32.mrf.mxu0
      %v1521 = vadd.f32 0.0, %v1520
      %v1522 = vpop.f32.mrf.mxu0
      %1523 = vmatmul.bf16.gmra.mxu0 %v1439
      %v1524 = vpop.f32.mrf.mxu0
      %v1525 = vadd.f32 0.0, %v1524
      %v1526 = vpop.f32.mrf.mxu0
      %1527 = vmatmul.bf16.gmra.mxu0 %v1440
      %v1528 = vpop.f32.mrf.mxu0
      %v1529 = vadd.f32 0.0, %v1528
      %v1530 = vpop.f32.mrf.mxu0
      %1531 = vmatmul.bf16.gmra.mxu0 %v1441
      %v1532 = vpop.f32.mrf.mxu0
      %v1533 = vadd.f32 0.0, %v1532
      %v1534 = vpop.f32.mrf.mxu0
      %1535 = vmatmul.bf16.gmra.mxu0 %v1442
      %v1536 = vpop.f32.mrf.mxu0
      %v1537 = vadd.f32 0.0, %v1536
      %v1538 = vpop.f32.mrf.mxu0
      %1539 = vdwg.mxu0
      %v1540 = vadd.f32 %v1362, %v1509
      %v1541 = vadd.f32 %v1363, %v1513
      %v1542 = vadd.f32 %v1364, %v1517
      %v1543 = vadd.f32 %v1365, %v1521
      %v1544 = vadd.f32 %v1366, %v1525
      %v1545 = vadd.f32 %v1367, %v1529
      %v1546 = vadd.f32 %v1368, %v1533
      %v1547 = vadd.f32 %v1369, %v1537
      %v1548 = vld [vmem:[%s203 + $0x8] sm:$0xf]
      %v1549 = vld [vmem:[%s203 + $0xc] sm:$0xf]
      %v1550 = vld [vmem:[%s203 + $0x10] sm:$0xf]
      %v1551 = vld [vmem:[%s203 + $0x14] sm:$0xf]
      %v1552 = vld [vmem:[%s203 + $0x18] sm:$0xf]
      %v1553 = vld [vmem:[%s203 + $0x1c] sm:$0xf]
      %v1554 = vld [vmem:[%s203 + $0x20] sm:$0xf]
      %v1555 = vld [vmem:[%s203 + $0x24] sm:$0xf]
      %v1556 = vld [vmem:[%s203 + $0x28] sm:$0xf]
      %v1557 = vld [vmem:[%s203 + $0x2c] sm:$0xf]
      %v1558 = vld [vmem:[%s203 + $0x30] sm:$0xf]
      %v1559 = vld [vmem:[%s203 + $0x34] sm:$0xf]
      %v1560 = vld [vmem:[%s203 + $0x38] sm:$0xf]
      %v1561 = vld [vmem:[%s203 + $0x3c] sm:$0xf]
      %v1562 = vld [vmem:[%s203 + $0x40] sm:$0xf]
      %v1563 = vld [vmem:[%s203 + $0x44] sm:$0xf]
      %s1564 = scalar_lea.vmem %s1, 448
      %v1565 = vld [vmem:[%s1564] sm:$0xf]
      %v1566 = vld [vmem:[%s1564 + $0x4] sm:$0xf]
      %v1567 = vld [vmem:[%s1564 + $0x8] sm:$0xf]
      %v1568 = vld [vmem:[%s1564 + $0xc] sm:$0xf]
      %v1569 = vld [vmem:[%s1564 + $0x10] sm:$0xf]
      %v1570 = vld [vmem:[%s1564 + $0x14] sm:$0xf]
      %v1571 = vld [vmem:[%s1564 + $0x18] sm:$0xf]
      %v1572 = vld [vmem:[%s1564 + $0x1c] sm:$0xf]
      %v1573 = vld [vmem:[%s1564 + $0x20] sm:$0xf]
      %v1574 = vld [vmem:[%s1564 + $0x24] sm:$0xf]
      %v1575 = vld [vmem:[%s1564 + $0x28] sm:$0xf]
      %v1576 = vld [vmem:[%s1564 + $0x2c] sm:$0xf]
      %v1577 = vld [vmem:[%s1564 + $0x30] sm:$0xf]
      %v1578 = vld [vmem:[%s1564 + $0x34] sm:$0xf]
      %v1579 = vld [vmem:[%s1564 + $0x38] sm:$0xf]
      %v1580 = vld [vmem:[%s1564 + $0x3c] sm:$0xf]
      %v1597 = vunpack.c.l.b16 %v1548
      %v1598 = vunpack.c.l.b16 %v1549
      %v1599 = vunpack.c.l.b16 %v1550
      %v1600 = vunpack.c.l.b16 %v1551
      %v1601 = vunpack.c.l.b16 %v1552
      %v1602 = vunpack.c.l.b16 %v1553
      %v1603 = vunpack.c.l.b16 %v1554
      %v1604 = vunpack.c.l.b16 %v1555
      %v1605 = vunpack.c.l.b16 %v1556
      %v1606 = vunpack.c.l.b16 %v1557
      %v1607 = vunpack.c.l.b16 %v1558
      %v1608 = vunpack.c.l.b16 %v1559
      %v1609 = vunpack.c.l.b16 %v1560
      %v1610 = vunpack.c.l.b16 %v1561
      %v1611 = vunpack.c.l.b16 %v1562
      %v1612 = vunpack.c.l.b16 %v1563
      %v1613 = vpack.c.b16 %v1598, %v1597
      %v1614 = vpack.c.b16 %v1600, %v1599
      %v1615 = vpack.c.b16 %v1602, %v1601
      %v1616 = vpack.c.b16 %v1604, %v1603
      %v1617 = vpack.c.b16 %v1606, %v1605
      %v1618 = vpack.c.b16 %v1608, %v1607
      %v1619 = vpack.c.b16 %v1610, %v1609
      %v1620 = vpack.c.b16 %v1612, %v1611
      %v1645 = vunpack.c.l.b16 %v1565
      %v1646 = vunpack.c.l.b16 %v1566
      %v1647 = vunpack.c.l.b16 %v1567
      %v1648 = vunpack.c.l.b16 %v1568
      %v1649 = vunpack.c.l.b16 %v1569
      %v1650 = vunpack.c.l.b16 %v1570
      %v1651 = vunpack.c.l.b16 %v1571
      %v1652 = vunpack.c.l.b16 %v1572
      %v1653 = vunpack.c.l.b16 %v1573
      %v1654 = vunpack.c.l.b16 %v1574
      %v1655 = vunpack.c.l.b16 %v1575
      %v1656 = vunpack.c.l.b16 %v1576
      %v1657 = vunpack.c.l.b16 %v1577
      %v1658 = vunpack.c.l.b16 %v1578
      %v1659 = vunpack.c.l.b16 %v1579
      %v1660 = vunpack.c.l.b16 %v1580
      %v1661 = vpack.c.b16 %v1646, %v1645
      %v1662 = vpack.c.b16 %v1648, %v1647
      %v1663 = vpack.c.b16 %v1650, %v1649
      %v1664 = vpack.c.b16 %v1652, %v1651
      %v1665 = vpack.c.b16 %v1654, %v1653
      %v1666 = vpack.c.b16 %v1656, %v1655
      %v1667 = vpack.c.b16 %v1658, %v1657
      %v1668 = vpack.c.b16 %v1660, %v1659
      %1677 = vmatpush.bf16.msra.mxu0 %v1668
      %1678 = vmatpush.bf16.msra.mxu0 %v1667
      %1679 = vmatpush.bf16.msra.mxu0 %v1666
      %1680 = vmatpush.bf16.msra.mxu0 %v1665
      %1681 = vmatpush.bf16.msra.mxu0 %v1664
      %1682 = vmatpush.bf16.msra.mxu0 %v1663
      %1683 = vmatpush.bf16.msra.mxu0 %v1662
      %1684 = vmatpush.bf16.msra.mxu0 %v1661
      %1685 = vmatmul.bf16.gmra.mxu0 %v1613
      %v1686 = vpop.f32.mrf.mxu0
      %v1687 = vadd.f32 0.0, %v1686
      %v1688 = vpop.f32.mrf.mxu0
      %1689 = vmatmul.bf16.gmra.mxu0 %v1614
      %v1690 = vpop.f32.mrf.mxu0
      %v1691 = vadd.f32 0.0, %v1690
      %v1692 = vpop.f32.mrf.mxu0
      %1693 = vmatmul.bf16.gmra.mxu0 %v1615
      %v1694 = vpop.f32.mrf.mxu0
      %v1695 = vadd.f32 0.0, %v1694
      %v1696 = vpop.f32.mrf.mxu0
      %1697 = vmatmul.bf16.gmra.mxu0 %v1616
      %v1698 = vpop.f32.mrf.mxu0
      %v1699 = vadd.f32 0.0, %v1698
      %v1700 = vpop.f32.mrf.mxu0
      %1701 = vmatmul.bf16.gmra.mxu0 %v1617
      %v1702 = vpop.f32.mrf.mxu0
      %v1703 = vadd.f32 0.0, %v1702
      %v1704 = vpop.f32.mrf.mxu0
      %1705 = vmatmul.bf16.gmra.mxu0 %v1618
      %v1706 = vpop.f32.mrf.mxu0
      %v1707 = vadd.f32 0.0, %v1706
      %v1708 = vpop.f32.mrf.mxu0
      %1709 = vmatmul.bf16.gmra.mxu0 %v1619
      %v1710 = vpop.f32.mrf.mxu0
      %v1711 = vadd.f32 0.0, %v1710
      %v1712 = vpop.f32.mrf.mxu0
      %1713 = vmatmul.bf16.gmra.mxu0 %v1620
      %v1714 = vpop.f32.mrf.mxu0
      %v1715 = vadd.f32 0.0, %v1714
      %v1716 = vpop.f32.mrf.mxu0
      %1717 = vdwg.mxu0
      %v1718 = vadd.f32 %v1540, %v1687
      %v1719 = vadd.f32 %v1541, %v1691
      %v1720 = vadd.f32 %v1542, %v1695
      %v1721 = vadd.f32 %v1543, %v1699
      %v1722 = vadd.f32 %v1544, %v1703
      %v1723 = vadd.f32 %v1545, %v1707
      %v1724 = vadd.f32 %v1546, %v1711
      %v1725 = vadd.f32 %v1547, %v1715
      %v1726 = vld [vmem:[%s165 + $0x8] sm:$0xf]
      %v1727 = vld [vmem:[%s165 + $0xc] sm:$0xf]
      %v1728 = vld [vmem:[%s165 + $0x10] sm:$0xf]
      %v1729 = vld [vmem:[%s165 + $0x14] sm:$0xf]
      %v1730 = vld [vmem:[%s165 + $0x18] sm:$0xf]
      %v1731 = vld [vmem:[%s165 + $0x1c] sm:$0xf]
      %v1732 = vld [vmem:[%s165 + $0x20] sm:$0xf]
      %v1733 = vld [vmem:[%s165 + $0x24] sm:$0xf]
      %v1734 = vld [vmem:[%s165 + $0x28] sm:$0xf]
      %v1735 = vld [vmem:[%s165 + $0x2c] sm:$0xf]
      %v1736 = vld [vmem:[%s165 + $0x30] sm:$0xf]
      %v1737 = vld [vmem:[%s165 + $0x34] sm:$0xf]
      %v1738 = vld [vmem:[%s165 + $0x38] sm:$0xf]
      %v1739 = vld [vmem:[%s165 + $0x3c] sm:$0xf]
      %v1740 = vld [vmem:[%s165 + $0x40] sm:$0xf]
      %v1741 = vld [vmem:[%s165 + $0x44] sm:$0xf]
      %v1742 = vld [vmem:[%s165 + $0x48] sm:$0x1]
      %s1743 = scalar_lea.vmem %s1, 512
      %v1744 = vld [vmem:[%s1743] sm:$0xf]
      %v1745 = vld [vmem:[%s1743 + $0x4] sm:$0xf]
      %v1746 = vld [vmem:[%s1743 + $0x8] sm:$0xf]
      %v1747 = vld [vmem:[%s1743 + $0xc] sm:$0xf]
      %v1748 = vld [vmem:[%s1743 + $0x10] sm:$0xf]
      %v1749 = vld [vmem:[%s1743 + $0x14] sm:$0xf]
      %v1750 = vld [vmem:[%s1743 + $0x18] sm:$0xf]
      %v1751 = vld [vmem:[%s1743 + $0x1c] sm:$0xf]
      %v1752 = vld [vmem:[%s1743 + $0x20] sm:$0xf]
      %v1753 = vld [vmem:[%s1743 + $0x24] sm:$0xf]
      %v1754 = vld [vmem:[%s1743 + $0x28] sm:$0xf]
      %v1755 = vld [vmem:[%s1743 + $0x2c] sm:$0xf]
      %v1756 = vld [vmem:[%s1743 + $0x30] sm:$0xf]
      %v1757 = vld [vmem:[%s1743 + $0x34] sm:$0xf]
      %v1758 = vld [vmem:[%s1743 + $0x38] sm:$0xf]
      %v1759 = vld [vmem:[%s1743 + $0x3c] sm:$0xf]
      %v1777 = vunpack.c.l.b16 %v1726
      %v1778 = vunpack.c.l.b16 %v1727
      %v1779 = vunpack.c.l.b16 %v1728
      %v1780 = vunpack.c.l.b16 %v1729
      %v1781 = vunpack.c.l.b16 %v1730
      %v1782 = vunpack.c.l.b16 %v1731
      %v1783 = vunpack.c.l.b16 %v1732
      %v1784 = vunpack.c.l.b16 %v1733
      %v1785 = vunpack.c.l.b16 %v1734
      %v1786 = vunpack.c.l.b16 %v1735
      %v1787 = vunpack.c.l.b16 %v1736
      %v1788 = vunpack.c.l.b16 %v1737
      %v1789 = vunpack.c.l.b16 %v1738
      %v1790 = vunpack.c.l.b16 %v1739
      %v1791 = vunpack.c.l.b16 %v1740
      %v1792 = vunpack.c.l.b16 %v1741
      %v1793 = vunpack.c.l.b16 %v1742
      %v1794 = vpack.c.b16 %v1778, %v1777
      %v1795 = vpack.c.b16 %v1780, %v1779
      %v1796 = vpack.c.b16 %v1782, %v1781
      %v1797 = vpack.c.b16 %v1784, %v1783
      %v1798 = vpack.c.b16 %v1786, %v1785
      %v1799 = vpack.c.b16 %v1788, %v1787
      %v1800 = vpack.c.b16 %v1790, %v1789
      %v1801 = vpack.c.b16 %v1792, %v1791
      %v1802 = vpack.c.b16 %v1793, %v1793
      %v1804 = vshrl.u32 %v1794, 16
      %v1806 = vshll.u32 %v1794, 16
      %v1808 = vrot.slane %v1806, 1
      %v1809 = vor.u32 %v1804, %v1808
      %v1811 = vshll.u32 %v1795, 16
      %v1813 = vrot.slane %v1811, 1
      %v1814 = vsel %vm588, %v1809, %v1813
      %v1815 = vshrl.u32 %v1795, 16
      %v1817 = vor.u32 %v1815, %v1813
      %v1819 = vshll.u32 %v1796, 16
      %v1821 = vrot.slane %v1819, 1
      %v1822 = vsel %vm588, %v1817, %v1821
      %v1823 = vshrl.u32 %v1796, 16
      %v1825 = vor.u32 %v1823, %v1821
      %v1827 = vshll.u32 %v1797, 16
      %v1829 = vrot.slane %v1827, 1
      %v1830 = vsel %vm588, %v1825, %v1829
      %v1831 = vshrl.u32 %v1797, 16
      %v1833 = vor.u32 %v1831, %v1829
      %v1835 = vshll.u32 %v1798, 16
      %v1837 = vrot.slane %v1835, 1
      %v1838 = vsel %vm588, %v1833, %v1837
      %v1839 = vshrl.u32 %v1798, 16
      %v1841 = vor.u32 %v1839, %v1837
      %v1843 = vshll.u32 %v1799, 16
      %v1845 = vrot.slane %v1843, 1
      %v1846 = vsel %vm588, %v1841, %v1845
      %v1847 = vshrl.u32 %v1799, 16
      %v1849 = vor.u32 %v1847, %v1845
      %v1851 = vshll.u32 %v1800, 16
      %v1853 = vrot.slane %v1851, 1
      %v1854 = vsel %vm588, %v1849, %v1853
      %v1855 = vshrl.u32 %v1800, 16
      %v1857 = vor.u32 %v1855, %v1853
      %v1859 = vshll.u32 %v1801, 16
      %v1861 = vrot.slane %v1859, 1
      %v1862 = vsel %vm588, %v1857, %v1861
      %v1863 = vshrl.u32 %v1801, 16
      %v1865 = vor.u32 %v1863, %v1861
      %v1867 = vshll.u32 %v1802, 16
      %v1869 = vrot.slane %v1867, 1
      %v1870 = vsel %vm588, %v1865, %v1869
      %v1895 = vunpack.c.l.b16 %v1744
      %v1896 = vunpack.c.l.b16 %v1745
      %v1897 = vunpack.c.l.b16 %v1746
      %v1898 = vunpack.c.l.b16 %v1747
      %v1899 = vunpack.c.l.b16 %v1748
      %v1900 = vunpack.c.l.b16 %v1749
      %v1901 = vunpack.c.l.b16 %v1750
      %v1902 = vunpack.c.l.b16 %v1751
      %v1903 = vunpack.c.l.b16 %v1752
      %v1904 = vunpack.c.l.b16 %v1753
      %v1905 = vunpack.c.l.b16 %v1754
      %v1906 = vunpack.c.l.b16 %v1755
      %v1907 = vunpack.c.l.b16 %v1756
      %v1908 = vunpack.c.l.b16 %v1757
      %v1909 = vunpack.c.l.b16 %v1758
      %v1910 = vunpack.c.l.b16 %v1759
      %v1911 = vpack.c.b16 %v1896, %v1895
      %v1912 = vpack.c.b16 %v1898, %v1897
      %v1913 = vpack.c.b16 %v1900, %v1899
      %v1914 = vpack.c.b16 %v1902, %v1901
      %v1915 = vpack.c.b16 %v1904, %v1903
      %v1916 = vpack.c.b16 %v1906, %v1905
      %v1917 = vpack.c.b16 %v1908, %v1907
      %v1918 = vpack.c.b16 %v1910, %v1909
      %1927 = vmatpush.bf16.msra.mxu0 %v1918
      %1928 = vmatpush.bf16.msra.mxu0 %v1917
      %1929 = vmatpush.bf16.msra.mxu0 %v1916
      %1930 = vmatpush.bf16.msra.mxu0 %v1915
      %1931 = vmatpush.bf16.msra.mxu0 %v1914
      %1932 = vmatpush.bf16.msra.mxu0 %v1913
      %1933 = vmatpush.bf16.msra.mxu0 %v1912
      %1934 = vmatpush.bf16.msra.mxu0 %v1911
      %1935 = vmatmul.bf16.gmra.mxu0 %v1814
      %v1936 = vpop.f32.mrf.mxu0
      %v1937 = vadd.f32 0.0, %v1936
      %v1938 = vpop.f32.mrf.mxu0
      %1939 = vmatmul.bf16.gmra.mxu0 %v1822
      %v1940 = vpop.f32.mrf.mxu0
      %v1941 = vadd.f32 0.0, %v1940
      %v1942 = vpop.f32.mrf.mxu0
      %1943 = vmatmul.bf16.gmra.mxu0 %v1830
      %v1944 = vpop.f32.mrf.mxu0
      %v1945 = vadd.f32 0.0, %v1944
      %v1946 = vpop.f32.mrf.mxu0
      %1947 = vmatmul.bf16.gmra.mxu0 %v1838
      %v1948 = vpop.f32.mrf.mxu0
      %v1949 = vadd.f32 0.0, %v1948
      %v1950 = vpop.f32.mrf.mxu0
      %1951 = vmatmul.bf16.gmra.mxu0 %v1846
      %v1952 = vpop.f32.mrf.mxu0
      %v1953 = vadd.f32 0.0, %v1952
      %v1954 = vpop.f32.mrf.mxu0
      %1955 = vmatmul.bf16.gmra.mxu0 %v1854
      %v1956 = vpop.f32.mrf.mxu0
      %v1957 = vadd.f32 0.0, %v1956
      %v1958 = vpop.f32.mrf.mxu0
      %1959 = vmatmul.bf16.gmra.mxu0 %v1862
      %v1960 = vpop.f32.mrf.mxu0
      %v1961 = vadd.f32 0.0, %v1960
      %v1962 = vpop.f32.mrf.mxu0
      %1963 = vmatmul.bf16.gmra.mxu0 %v1870
      %v1964 = vpop.f32.mrf.mxu0
      %v1965 = vadd.f32 0.0, %v1964
      %v1966 = vpop.f32.mrf.mxu0
      %1967 = vdwg.mxu0
      %v1968 = vadd.f32 %v1718, %v1937
      %v1969 = vadd.f32 %v1719, %v1941
      %v1970 = vadd.f32 %v1720, %v1945
      %v1971 = vadd.f32 %v1721, %v1949
      %v1972 = vadd.f32 %v1722, %v1953
      %v1973 = vadd.f32 %v1723, %v1957
      %v1974 = vadd.f32 %v1724, %v1961
      %v1975 = vadd.f32 %v1725, %v1965
      %v1976 = vld [vmem:[%s2] sm:$0x1]
      %v1978 = vperm.slane %v1976, 0
      %v1980 = vadd.f32 %v1968, %v1978
      %v1981 = vadd.f32 %v1969, %v1978
      %v1982 = vadd.f32 %v1970, %v1978
      %v1983 = vadd.f32 %v1971, %v1978
      %v1984 = vadd.f32 %v1972, %v1978
      %v1985 = vadd.f32 %v1973, %v1978
      %v1986 = vadd.f32 %v1974, %v1978
      %v1987 = vadd.f32 %v1975, %v1978
      %v1988 = vmax.f32 %v1980, 0.0
      %v1989 = vmax.f32 %v1981, 0.0
      %v1990 = vmax.f32 %v1982, 0.0
      %v1991 = vmax.f32 %v1983, 0.0
      %v1992 = vmax.f32 %v1984, 0.0
      %v1993 = vmax.f32 %v1985, 0.0
      %v1994 = vmax.f32 %v1986, 0.0
      %v1995 = vmax.f32 %v1987, 0.0
      %v1996 = vpack.c.bf16 %v1988, %v1988
      %v1997 = vpack.c.bf16 %v1989, %v1989
      %v1998 = vpack.c.bf16 %v1990, %v1990
      %v1999 = vpack.c.bf16 %v1991, %v1991
      %v2000 = vpack.c.bf16 %v1992, %v1992
      %v2001 = vpack.c.bf16 %v1993, %v1993
      %v2002 = vpack.c.bf16 %v1994, %v1994
      %v2003 = vpack.c.bf16 %v1995, %v1995
      %2004 = vst [vmem:[%s170] sm:$0xf] %v1996
      %2005 = vst [vmem:[%s170 + $0x4] sm:$0xf] %v1997
      %2006 = vst [vmem:[%s170 + $0x8] sm:$0xf] %v1998
      %2007 = vst [vmem:[%s170 + $0xc] sm:$0xf] %v1999
      %2008 = vst [vmem:[%s170 + $0x10] sm:$0xf] %v2000
      %2009 = vst [vmem:[%s170 + $0x14] sm:$0xf] %v2001
      %2010 = vst [vmem:[%s170 + $0x18] sm:$0xf] %v2002
      %2011 = vst [vmem:[%s170 + $0x1c] sm:$0xf] %v2003
      %p2012 = scmp.lt.s32.totalorder %s14, 1
      %s2013 = scalar_select %p2012, %s14, 1
      %s2014 = smul.addr %s2013, 8
      %s2015 = smul.addr %s2014, 4
      %s2016 = scalar_lea.vmem %s3, %s2015
      // Predicated region
      $region33: #{hrnet_w18_up4_forward.4} parent=31 // pred_check
        %p2017 = pneg %p100
      $region34: #{hrnet_w18_up4_forward.4} parent=31 // pred_check_branch
        %2019 = sbr.rel (%p2017) target = $region36
      $region35: #{hrnet_w18_up4_forward.4} parent=31 // pred_region
        _
      $region36: #{hrnet_w18_up4_forward.4} parent=31 // pred_fallthru
        _
    $region32: #{hrnet_w18_up4_forward.4} parent=5 // pred_fallthru
      _
    %p2020 = scmp.le.s32.totalorder 2, %s9
    // Predicated region
    $region37: #{hrnet_w18_up4_forward.4} parent=5 // pred_check
      %p2021 = pneg %p2020
    $region38: #{hrnet_w18_up4_forward.4} parent=5 // pred_check_branch
      %2023 = sbr.rel (%p2021) target = $region40
    $region39: #{hrnet_w18_up4_forward.4} parent=5 // pred_region
      %s2024 = ssub.s32 %s9, 2
      // Predicated region
      $region41: #{hrnet_w18_up4_forward.4} parent=39 // pred_check
        %p2025 = pneg %p106
      $region42: #{hrnet_w18_up4_forward.4} parent=39 // pred_check_branch
        %2027 = sbr.rel (%p2025) target = $region44
      $region43: #{hrnet_w18_up4_forward.4} parent=39 // pred_region
        %p2028 = scmp.lt.s32.totalorder %s15, 1
        %s2029 = scalar_select %p2028, %s15, 1
        %s2030 = smul.addr %s2029, 8
        %s2031 = smul.addr %s2030, 4
        %s2032 = scalar_lea.vmem %s3, %s2031
      $region44: #{hrnet_w18_up4_forward.4} parent=39 // pred_fallthru
        _
    $region40: #{hrnet_w18_up4_forward.4} parent=5 // pred_fallthru
      _
  $region6: #{hrnet_w18_up4_forward.4} parent=0 // loop_footer
    %s13 = sadd.s32 1, %s9
  $region7: #{hrnet_w18_up4_forward.4} parent=0 // loop_footer_branch
    %8 = sbr.rel target = $region3
  $region8: #{hrnet_w18_up4_forward.4} parent=0 // loop_exit
    _

</llo_original>
